<compile_context>
chip_gen: v6e
topology: v6e:2x2x1
jax: 0.10.0
libtpu: 0.0.40
codegen_flags: <defaults>
</compile_context>

<pallas_src>
import functools

import jax
import jax.numpy as jnp
from jax.experimental import pallas as pl
from jax.experimental.pallas import tpu as pltpu


# ----------------------------------------------------------------------------
# Helpers
# ----------------------------------------------------------------------------
def _tap_masks(H, W, batch_tile):
    """(9, batch_tile*H*W) f32 validity masks: tap k=(dy*3+dx) reads (h+dy-1, w+dx-1)."""
    idx = jnp.arange(H * W, dtype=jnp.int32)
    hh = idx // W
    ww = idx % W
    rows = []
    for k in range(9):
        dy, dx = divmod(k, 3)
        valid = ((hh + dy - 1 >= 0) & (hh + dy - 1 < H) &
                 (ww + dx - 1 >= 0) & (ww + dx - 1 < W))
        rows.append(valid.astype(jnp.float32))
    m = jnp.stack(rows, axis=0)                 # (9, H*W)
    return jnp.tile(m, (1, batch_tile))         # (9, batch_tile*H*W)


def _pick_batch_tile(B, c_total, HW, budget_bytes=8 * 1024 * 1024):
    """Largest divisor of B whose resident activation footprint fits a crude budget."""
    bt = B
    while bt > 1 and not (B % bt == 0 and 8 * c_total * bt * HW <= budget_bytes):
        bt -= 1
    return bt


# ----------------------------------------------------------------------------
# Fused DenseBlockUp kernel. Grid iterates over groups of Bt batch images.
# Ref order: masks, x, scales, shifts, weights, bias, out, [xres scratch].
# ----------------------------------------------------------------------------
def _dense_block_kernel(mask_ref, x_ref, scale_ref, shift_ref, w_ref, b_ref,
                        o_ref, *scratch, n_layers, c_in, growth, W, upsample):
    N = o_ref.shape[-1]                          # Bt * H * W (lane axis)

    if upsample:
        xres_ref = scratch[0]                    # resident grown x (pre-BN), last y not kept
        xres_ref[0:c_in, :] = x_ref[0]
    else:
        o_ref[0, 0:c_in, :] = x_ref[0]           # o_ref itself is the resident grown x

    for i in range(n_layers):                    # static unroll over layers
        cin = c_in + i * growth
        raw = xres_ref[0:cin, :] if upsample else o_ref[0, 0:cin, :]

        # Folded BatchNorm (per-channel scale/shift broadcast over lanes) + ReLU, f32.
        a = jnp.maximum(raw * scale_ref[i, 0:cin, :] + shift_ref[i, 0:cin, :], 0.0)

        # 3x3 conv (pad=1) == 9 accumulated tap matmuls on lane-shifted activations.
        acc = jnp.zeros((growth, N), jnp.float32)
        for k in range(9):
            dy, dx = divmod(k, 3)
            off = (dy - 1) * W + (dx - 1)
            if off == 0:
                blk = a
            else:
                # XLU lane rotate; mask zeroes every wrapped / out-of-image position.
                blk = pltpu.roll(a, shift=(-off) % N, axis=1) * mask_ref[k:k + 1, :]
            acc = acc + jnp.dot(w_ref[i * 9 + k, :, 0:cin],        # bf16 (growth, cin)
                                blk.astype(jnp.bfloat16),          # bf16 (cin, N)
                                preferred_element_type=jnp.float32)
        y = acc + b_ref[i]                       # Dropout2d(0.2) is identity in eval mode

        if upsample:
            o_ref[0, i * growth:(i + 1) * growth, :] = y
            if i + 1 < n_layers:                 # last layer's y is never re-read
                xres_ref[cin:cin + growth, :] = y
        else:
            o_ref[0, cin:cin + growth, :] = y


# ----------------------------------------------------------------------------
# Wrapper: NCHW in, NCHW out.
# ----------------------------------------------------------------------------
def dense_block_up(x_nchw, layer_params, upsample, batch_tile=None):
    x = x_nchw.astype(jnp.float32)
    B, C, H, W = x.shape
    HW = H * W
    n_layers = len(layer_params)
    growth = layer_params[0]["w"].shape[-1]      # HWIO weights (3,3,cin,growth)
    eps = 1e-5

    c_total = C + n_layers * growth
    c_out = n_layers * growth if upsample else c_total
    c_max_in = C + (n_layers - 1) * growth

    Bt = batch_tile if batch_tile is not None else _pick_batch_tile(B, c_total, HW)
    assert B % Bt == 0
    G = B // Bt
    N = Bt * HW

    # Fold Bt images into the lane axis, channel-major: xg[g, c, b*HW + s].
    xg = x.reshape(G, Bt, C, HW).transpose(0, 2, 1, 3).reshape(G, C, N)

    # Pack per-layer params into stacked arrays (padded on the cin axis to c_max_in).
    scales = jnp.zeros((n_layers, c_max_in, 1), jnp.float32)
    shifts = jnp.zeros((n_layers, c_max_in, 1), jnp.float32)
    wpack = jnp.zeros((n_layers * 9, growth, c_max_in), jnp.float32)
    bpack = jnp.zeros((n_layers, growth, 1), jnp.float32)
    for i, p in enumerate(layer_params):
        cin = C + i * growth
        scale = p["gamma"] * jax.lax.rsqrt(p["var"] + eps)
        shift = p["beta"] - p["mean"] * scale
        scales = scales.at[i, :cin, 0].set(scale.astype(jnp.float32))
        shifts = shifts.at[i, :cin, 0].set(shift.astype(jnp.float32))
        # HWIO (3,3,cin,growth) -> (9, growth, cin); tap index k = dy*3 + dx.
        wk = jnp.transpose(p["w"], (0, 1, 3, 2)).reshape(9, growth, cin)
        wpack = wpack.at[i * 9:(i + 1) * 9, :, :cin].set(wk.astype(jnp.float32))
        bpack = bpack.at[i, :, 0].set(p["b"].astype(jnp.float32))
    wpack = wpack.astype(jnp.bfloat16)           # bf16 MXU operands, f32 accumulate

    masks = _tap_masks(H, W, Bt)

    kernel = functools.partial(
        _dense_block_kernel, n_layers=n_layers, c_in=C, growth=growth, W=W,
        upsample=upsample)

    scratch = [pltpu.VMEM((c_max_in, N), jnp.float32)] if upsample else []

    out = pl.pallas_call(
        kernel,
        out_shape=jax.ShapeDtypeStruct((G, c_out, N), jnp.float32),
        grid_spec=pltpu.PrefetchScalarGridSpec(
            num_scalar_prefetch=0,
            grid=(G,),
            in_specs=[
                pl.BlockSpec((9, N), lambda g: (0, 0)),
                pl.BlockSpec((1, C, N), lambda g: (g, 0, 0)),
                pl.BlockSpec((n_layers, c_max_in, 1), lambda g: (0, 0, 0)),
                pl.BlockSpec((n_layers, c_max_in, 1), lambda g: (0, 0, 0)),
                pl.BlockSpec((n_layers * 9, growth, c_max_in), lambda g: (0, 0, 0)),
                pl.BlockSpec((n_layers, growth, 1), lambda g: (0, 0, 0)),
            ],
            out_specs=pl.BlockSpec((1, c_out, N), lambda g: (g, 0, 0)),
            scratch_shapes=scratch,
        ),
        compiler_params=pltpu.CompilerParams(
            dimension_semantics=("parallel",)),
    )(masks, xg, scales, shifts, wpack, bpack)

    # Unfold the lane axis back to (B, c_out, H, W) — pure layout ops.
    return out.reshape(G, c_out, Bt, HW).transpose(0, 2, 1, 3).reshape(B, c_out, H, W)


# ----------------------------------------------------------------------------
# Pure-JAX reference. Mirrors the kernel's bf16 operand quantization at the conv
# boundary (f32 accumulation) so the self-test tolerance can stay tight; it only
# differs from the exact-f32 PyTorch math by bf16 operand rounding.
# ----------------------------------------------------------------------------
def _ref_layer(x_nhwc, p, eps=1e-5):
    xn = (x_nhwc - p["mean"]) * jax.lax.rsqrt(p["var"] + eps) * p["gamma"] \
         + p["beta"]
    a = jnp.maximum(xn, 0.0)
    a_q = a.astype(jnp.bfloat16).astype(jnp.float32)
    w_q = p["w"].astype(jnp.bfloat16).astype(jnp.float32)
    y = jax.lax.conv_general_dilated(
        a_q, w_q, window_strides=(1, 1), padding="SAME",
        dimension_numbers=("NHWC", "HWIO", "NHWC"),
        precision=jax.lax.Precision.HIGHEST)
    return y + p["b"]


def _ref_block(x_nchw, layer_params, upsample):
    x = jnp.transpose(x_nchw, (0, 2, 3, 1)).astype(jnp.float32)
    feats = []
    for p in layer_params:
        out = _ref_layer(x, p)
        x = jnp.concatenate([x, out], axis=-1)
        feats.append(out)
    res = jnp.concatenate(feats, axis=-1) if upsample else x
    return jnp.transpose(res, (0, 3, 1, 2))


# ----------------------------------------------------------------------------
# Deterministic parameter construction (shapes follow DenseBlockUp.__init__).
# ----------------------------------------------------------------------------
def make_params(key, in_channels, growth_rate, n_layers):
    params = []
    for i in range(n_layers):
        cin = in_channels + i * growth_rate
        cout = growth_rate
        key, kw, kb, kg, kbe, km, kv = jax.random.split(key, 7)
        w = jax.random.normal(kw, (3, 3, cin, cout), jnp.float32) \
            * (1.0 / jnp.sqrt(9.0 * cin))
        b = 0.1 * jax.random.normal(kb, (cout,), jnp.float32)
        gamma = 1.0 + 0.1 * jax.random.normal(kg, (cin,), jnp.float32)
        beta = 0.1 * jax.random.normal(kbe, (cin,), jnp.float32)
        mean = 0.05 * jax.random.normal(km, (cin,), jnp.float32)
        var = 1.0 + 0.2 * jax.random.uniform(kv, (cin,), jnp.float32)
        params.append(dict(w=w, b=b, gamma=gamma, beta=beta, mean=mean,
                           var=var))
    return params


if __name__ == "__main__":
    B, C, H, W = 2, 4, 16, 16
    growth_rate, n_layers = 4, 3

    key = jax.random.PRNGKey(0)
    key, kx = jax.random.split(key)
    x = jax.random.normal(kx, (B, C, H, W), jnp.float32)   # NCHW, like PyTorch
    params = make_params(key, C, growth_rate, n_layers)

    ok = True
    for upsample in (True, False):
        out = jax.block_until_ready(dense_block_up(x, params, upsample))
        ref = jax.block_until_ready(_ref_block(x, params, upsample))
        exp_c = n_layers * growth_rate if upsample else C + n_layers * growth_rate
        assert out.shape == (B, exp_c, H, W), out.shape
        if not jnp.allclose(out, ref, rtol=2e-3, atol=2e-3):
            ok = False

    print("KERNEL_OK" if ok else "KERNEL_MISMATCH")
</pallas_src>

<mosaic_0001>
module attributes {stable_mosaic.version = 11 : i64} {
  func.func @_dense_block_kernel(%arg0: i32, %arg1: memref<9x512xf32, #tpu.memory_space<vmem>>, %arg2: memref<1x4x512xf32, #tpu.memory_space<vmem>>, %arg3: memref<3x12x1xf32, #tpu.memory_space<vmem>>, %arg4: memref<3x12x1xf32, #tpu.memory_space<vmem>>, %arg5: memref<27x4x12xbf16, #tpu.memory_space<vmem>>, %arg6: memref<3x4x1xf32, #tpu.memory_space<vmem>>, %arg7: memref<1x12x512xf32, #tpu.memory_space<vmem>>, %arg8: memref<12x512xf32, #tpu.memory_space<vmem>>) attributes {dimension_semantics = [#tpu.dimension_semantics<parallel>], iteration_bounds = array<i64: 1>, scalar_prefetch = 0 : i64, scratch_operands = 1 : i64, tpu.core_type = #tpu.core_type<tc>, window_params = [{pipeline_mode = #tpu.pipeline_mode<synchronous>, transform_indices = @transform_0, window_bounds = array<i64: 9, 512>}, {transform_indices = @transform_1, window_bounds = array<i64: 1, 4, 512>}, {pipeline_mode = #tpu.pipeline_mode<synchronous>, transform_indices = @transform_2, window_bounds = array<i64: 3, 12, 1>}, {pipeline_mode = #tpu.pipeline_mode<synchronous>, transform_indices = @transform_3, window_bounds = array<i64: 3, 12, 1>}, {pipeline_mode = #tpu.pipeline_mode<synchronous>, transform_indices = @transform_4, window_bounds = array<i64: 27, 4, 12>}, {pipeline_mode = #tpu.pipeline_mode<synchronous>, transform_indices = @transform_5, window_bounds = array<i64: 3, 4, 1>}, {transform_indices = @transform_6, window_bounds = array<i64: 1, 12, 512>}]} {
    %c0 = arith.constant 0 : index
    %c0_0 = arith.constant 0 : index
    %c0_1 = arith.constant 0 : index
    %0 = vector.load %arg2[%c0, %c0_0, %c0_1] : memref<1x4x512xf32, #tpu.memory_space<vmem>>, vector<1x4x512xf32>
    %1 = vector.shape_cast %0 : vector<1x4x512xf32> to vector<4x512xf32>
    %c0_2 = arith.constant 0 : index
    %c0_3 = arith.constant 0 : index
    %2 = vector.load %arg8[%c0_2, %c0_3] : memref<12x512xf32, #tpu.memory_space<vmem>>, vector<4x512xf32>
    tpu.vector_store %arg8[%c0_2, %c0_3], %1 {strides = array<i32>} : memref<12x512xf32, #tpu.memory_space<vmem>>, vector<4x512xf32>,
    %c0_4 = arith.constant 0 : index
    %c0_5 = arith.constant 0 : index
    %3 = vector.load %arg8[%c0_4, %c0_5] : memref<12x512xf32, #tpu.memory_space<vmem>>, vector<4x512xf32>
    %c0_6 = arith.constant 0 : index
    %c0_7 = arith.constant 0 : index
    %c0_8 = arith.constant 0 : index
    %4 = vector.load %arg3[%c0_6, %c0_7, %c0_8] : memref<3x12x1xf32, #tpu.memory_space<vmem>>, vector<1x4x1xf32>
    %5 = vector.shape_cast %4 : vector<1x4x1xf32> to vector<4x1xf32>
    %6 = vector.broadcast %5 : vector<4x1xf32> to vector<4x512xf32>
    %7 = arith.mulf %3, %6 : vector<4x512xf32>
    %c0_9 = arith.constant 0 : index
    %c0_10 = arith.constant 0 : index
    %c0_11 = arith.constant 0 : index
    %8 = vector.load %arg4[%c0_9, %c0_10, %c0_11] : memref<3x12x1xf32, #tpu.memory_space<vmem>>, vector<1x4x1xf32>
    %9 = vector.shape_cast %8 : vector<1x4x1xf32> to vector<4x1xf32>
    %10 = vector.broadcast %9 : vector<4x1xf32> to vector<4x512xf32>
    %11 = arith.addf %7, %10 : vector<4x512xf32>
    %cst = arith.constant 0.000000e+00 : f32
    %12 = vector.broadcast %cst : f32 to vector<4x512xf32>
    %13 = arith.maximumf %11, %12 : vector<4x512xf32>
    %cst_12 = arith.constant 0.000000e+00 : f32
    %14 = vector.broadcast %cst_12 : f32 to vector<4x512xf32>
    %c17_i32 = arith.constant 17 : i32
    %15 = tpu.dynamic_rotate %13 by %c17_i32 dim 1 : vector<4x512xf32>, i32 -> vector<4x512xf32>
    %c0_13 = arith.constant 0 : index
    %c0_14 = arith.constant 0 : index
    %16 = vector.load %arg1[%c0_13, %c0_14] : memref<9x512xf32, #tpu.memory_space<vmem>>, vector<1x512xf32>
    %17 = vector.broadcast %16 : vector<1x512xf32> to vector<4x512xf32>
    %18 = arith.mulf %15, %17 : vector<4x512xf32>
    %c0_15 = arith.constant 0 : index
    %c0_16 = arith.constant 0 : index
    %c0_17 = arith.constant 0 : index
    %19 = vector.load %arg5[%c0_15, %c0_16, %c0_17] : memref<27x4x12xbf16, #tpu.memory_space<vmem>>, vector<1x4x4xbf16>
    %20 = vector.shape_cast %19 : vector<1x4x4xbf16> to vector<4x4xbf16>
    %21 = arith.truncf %18 : vector<4x512xf32> to vector<4x512xbf16>
    %cst_18 = arith.constant dense<0.000000e+00> : vector<4x512xf32>
    %22 = tpu.matmul %20, %21, %cst_18 {dimension_numbers = #tpu.dot_dimension_numbers<[1], [0], [0], [1], [0, 0, 1, 1], [], []>} : vector<4x4xbf16>, vector<4x512xbf16>, vector<4x512xf32> -> vector<4x512xf32>
    %23 = arith.addf %14, %22 : vector<4x512xf32>
    %c16_i32 = arith.constant 16 : i32
    %24 = tpu.dynamic_rotate %13 by %c16_i32 dim 1 : vector<4x512xf32>, i32 -> vector<4x512xf32>
    %c1 = arith.constant 1 : index
    %c0_19 = arith.constant 0 : index
    %25 = vector.load %arg1[%c1, %c0_19] : memref<9x512xf32, #tpu.memory_space<vmem>>, vector<1x512xf32>
    %26 = vector.broadcast %25 : vector<1x512xf32> to vector<4x512xf32>
    %27 = arith.mulf %24, %26 : vector<4x512xf32>
    %c1_20 = arith.constant 1 : index
    %c0_21 = arith.constant 0 : index
    %c0_22 = arith.constant 0 : index
    %28 = vector.load %arg5[%c1_20, %c0_21, %c0_22] : memref<27x4x12xbf16, #tpu.memory_space<vmem>>, vector<1x4x4xbf16>
    %29 = vector.shape_cast %28 : vector<1x4x4xbf16> to vector<4x4xbf16>
    %30 = arith.truncf %27 : vector<4x512xf32> to vector<4x512xbf16>
    %cst_23 = arith.constant dense<0.000000e+00> : vector<4x512xf32>
    %31 = tpu.matmul %29, %30, %cst_23 {dimension_numbers = #tpu.dot_dimension_numbers<[1], [0], [0], [1], [0, 0, 1, 1], [], []>} : vector<4x4xbf16>, vector<4x512xbf16>, vector<4x512xf32> -> vector<4x512xf32>
    %32 = arith.addf %23, %31 : vector<4x512xf32>
    %c15_i32 = arith.constant 15 : i32
    %33 = tpu.dynamic_rotate %13 by %c15_i32 dim 1 : vector<4x512xf32>, i32 -> vector<4x512xf32>
    %c2 = arith.constant 2 : index
    %c0_24 = arith.constant 0 : index
    %34 = vector.load %arg1[%c2, %c0_24] : memref<9x512xf32, #tpu.memory_space<vmem>>, vector<1x512xf32>
    %35 = vector.broadcast %34 : vector<1x512xf32> to vector<4x512xf32>
    %36 = arith.mulf %33, %35 : vector<4x512xf32>
    %c2_25 = arith.constant 2 : index
    %c0_26 = arith.constant 0 : index
    %c0_27 = arith.constant 0 : index
    %37 = vector.load %arg5[%c2_25, %c0_26, %c0_27] : memref<27x4x12xbf16, #tpu.memory_space<vmem>>, vector<1x4x4xbf16>
    %38 = vector.shape_cast %37 : vector<1x4x4xbf16> to vector<4x4xbf16>
    %39 = arith.truncf %36 : vector<4x512xf32> to vector<4x512xbf16>
    %cst_28 = arith.constant dense<0.000000e+00> : vector<4x512xf32>
    %40 = tpu.matmul %38, %39, %cst_28 {dimension_numbers = #tpu.dot_dimension_numbers<[1], [0], [0], [1], [0, 0, 1, 1], [], []>} : vector<4x4xbf16>, vector<4x512xbf16>, vector<4x512xf32> -> vector<4x512xf32>
    %41 = arith.addf %32, %40 : vector<4x512xf32>
    %c1_i32 = arith.constant 1 : i32
    %42 = tpu.dynamic_rotate %13 by %c1_i32 dim 1 : vector<4x512xf32>, i32 -> vector<4x512xf32>
    %c3 = arith.constant 3 : index
    %c0_29 = arith.constant 0 : index
    %43 = vector.load %arg1[%c3, %c0_29] : memref<9x512xf32, #tpu.memory_space<vmem>>, vector<1x512xf32>
    %44 = vector.broadcast %43 : vector<1x512xf32> to vector<4x512xf32>
    %45 = arith.mulf %42, %44 : vector<4x512xf32>
    %c3_30 = arith.constant 3 : index
    %c0_31 = arith.constant 0 : index
    %c0_32 = arith.constant 0 : index
    %46 = vector.load %arg5[%c3_30, %c0_31, %c0_32] : memref<27x4x12xbf16, #tpu.memory_space<vmem>>, vector<1x4x4xbf16>
    %47 = vector.shape_cast %46 : vector<1x4x4xbf16> to vector<4x4xbf16>
    %48 = arith.truncf %45 : vector<4x512xf32> to vector<4x512xbf16>
    %cst_33 = arith.constant dense<0.000000e+00> : vector<4x512xf32>
    %49 = tpu.matmul %47, %48, %cst_33 {dimension_numbers = #tpu.dot_dimension_numbers<[1], [0], [0], [1], [0, 0, 1, 1], [], []>} : vector<4x4xbf16>, vector<4x512xbf16>, vector<4x512xf32> -> vector<4x512xf32>
    %50 = arith.addf %41, %49 : vector<4x512xf32>
    %c4 = arith.constant 4 : index
    %c0_34 = arith.constant 0 : index
    %c0_35 = arith.constant 0 : index
    %51 = vector.load %arg5[%c4, %c0_34, %c0_35] : memref<27x4x12xbf16, #tpu.memory_space<vmem>>, vector<1x4x4xbf16>
    %52 = vector.shape_cast %51 : vector<1x4x4xbf16> to vector<4x4xbf16>
    %53 = arith.truncf %13 : vector<4x512xf32> to vector<4x512xbf16>
    %cst_36 = arith.constant dense<0.000000e+00> : vector<4x512xf32>
    %54 = tpu.matmul %52, %53, %cst_36 {dimension_numbers = #tpu.dot_dimension_numbers<[1], [0], [0], [1], [0, 0, 1, 1], [], []>} : vector<4x4xbf16>, vector<4x512xbf16>, vector<4x512xf32> -> vector<4x512xf32>
    %55 = arith.addf %50, %54 : vector<4x512xf32>
    %c511_i32 = arith.constant 511 : i32
    %56 = tpu.dynamic_rotate %13 by %c511_i32 dim 1 : vector<4x512xf32>, i32 -> vector<4x512xf32>
    %c5 = arith.constant 5 : index
    %c0_37 = arith.constant 0 : index
    %57 = vector.load %arg1[%c5, %c0_37] : memref<9x512xf32, #tpu.memory_space<vmem>>, vector<1x512xf32>
    %58 = vector.broadcast %57 : vector<1x512xf32> to vector<4x512xf32>
    %59 = arith.mulf %56, %58 : vector<4x512xf32>
    %c5_38 = arith.constant 5 : index
    %c0_39 = arith.constant 0 : index
    %c0_40 = arith.constant 0 : index
    %60 = vector.load %arg5[%c5_38, %c0_39, %c0_40] : memref<27x4x12xbf16, #tpu.memory_space<vmem>>, vector<1x4x4xbf16>
    %61 = vector.shape_cast %60 : vector<1x4x4xbf16> to vector<4x4xbf16>
    %62 = arith.truncf %59 : vector<4x512xf32> to vector<4x512xbf16>
    %cst_41 = arith.constant dense<0.000000e+00> : vector<4x512xf32>
    %63 = tpu.matmul %61, %62, %cst_41 {dimension_numbers = #tpu.dot_dimension_numbers<[1], [0], [0], [1], [0, 0, 1, 1], [], []>} : vector<4x4xbf16>, vector<4x512xbf16>, vector<4x512xf32> -> vector<4x512xf32>
    %64 = arith.addf %55, %63 : vector<4x512xf32>
    %c497_i32 = arith.constant 497 : i32
    %65 = tpu.dynamic_rotate %13 by %c497_i32 dim 1 : vector<4x512xf32>, i32 -> vector<4x512xf32>
    %c6 = arith.constant 6 : index
    %c0_42 = arith.constant 0 : index
    %66 = vector.load %arg1[%c6, %c0_42] : memref<9x512xf32, #tpu.memory_space<vmem>>, vector<1x512xf32>
    %67 = vector.broadcast %66 : vector<1x512xf32> to vector<4x512xf32>
    %68 = arith.mulf %65, %67 : vector<4x512xf32>
    %c6_43 = arith.constant 6 : index
    %c0_44 = arith.constant 0 : index
    %c0_45 = arith.constant 0 : index
    %69 = vector.load %arg5[%c6_43, %c0_44, %c0_45] : memref<27x4x12xbf16, #tpu.memory_space<vmem>>, vector<1x4x4xbf16>
    %70 = vector.shape_cast %69 : vector<1x4x4xbf16> to vector<4x4xbf16>
    %71 = arith.truncf %68 : vector<4x512xf32> to vector<4x512xbf16>
    %cst_46 = arith.constant dense<0.000000e+00> : vector<4x512xf32>
    %72 = tpu.matmul %70, %71, %cst_46 {dimension_numbers = #tpu.dot_dimension_numbers<[1], [0], [0], [1], [0, 0, 1, 1], [], []>} : vector<4x4xbf16>, vector<4x512xbf16>, vector<4x512xf32> -> vector<4x512xf32>
    %73 = arith.addf %64, %72 : vector<4x512xf32>
    %c496_i32 = arith.constant 496 : i32
    %74 = tpu.dynamic_rotate %13 by %c496_i32 dim 1 : vector<4x512xf32>, i32 -> vector<4x512xf32>
    %c7 = arith.constant 7 : index
    %c0_47 = arith.constant 0 : index
    %75 = vector.load %arg1[%c7, %c0_47] : memref<9x512xf32, #tpu.memory_space<vmem>>, vector<1x512xf32>
    %76 = vector.broadcast %75 : vector<1x512xf32> to vector<4x512xf32>
    %77 = arith.mulf %74, %76 : vector<4x512xf32>
    %c7_48 = arith.constant 7 : index
    %c0_49 = arith.constant 0 : index
    %c0_50 = arith.constant 0 : index
    %78 = vector.load %arg5[%c7_48, %c0_49, %c0_50] : memref<27x4x12xbf16, #tpu.memory_space<vmem>>, vector<1x4x4xbf16>
    %79 = vector.shape_cast %78 : vector<1x4x4xbf16> to vector<4x4xbf16>
    %80 = arith.truncf %77 : vector<4x512xf32> to vector<4x512xbf16>
    %cst_51 = arith.constant dense<0.000000e+00> : vector<4x512xf32>
    %81 = tpu.matmul %79, %80, %cst_51 {dimension_numbers = #tpu.dot_dimension_numbers<[1], [0], [0], [1], [0, 0, 1, 1], [], []>} : vector<4x4xbf16>, vector<4x512xbf16>, vector<4x512xf32> -> vector<4x512xf32>
    %82 = arith.addf %73, %81 : vector<4x512xf32>
    %c495_i32 = arith.constant 495 : i32
    %83 = tpu.dynamic_rotate %13 by %c495_i32 dim 1 : vector<4x512xf32>, i32 -> vector<4x512xf32>
    %c8 = arith.constant 8 : index
    %c0_52 = arith.constant 0 : index
    %84 = vector.load %arg1[%c8, %c0_52] : memref<9x512xf32, #tpu.memory_space<vmem>>, vector<1x512xf32>
    %85 = vector.broadcast %84 : vector<1x512xf32> to vector<4x512xf32>
    %86 = arith.mulf %83, %85 : vector<4x512xf32>
    %c8_53 = arith.constant 8 : index
    %c0_54 = arith.constant 0 : index
    %c0_55 = arith.constant 0 : index
    %87 = vector.load %arg5[%c8_53, %c0_54, %c0_55] : memref<27x4x12xbf16, #tpu.memory_space<vmem>>, vector<1x4x4xbf16>
    %88 = vector.shape_cast %87 : vector<1x4x4xbf16> to vector<4x4xbf16>
    %89 = arith.truncf %86 : vector<4x512xf32> to vector<4x512xbf16>
    %cst_56 = arith.constant dense<0.000000e+00> : vector<4x512xf32>
    %90 = tpu.matmul %88, %89, %cst_56 {dimension_numbers = #tpu.dot_dimension_numbers<[1], [0], [0], [1], [0, 0, 1, 1], [], []>} : vector<4x4xbf16>, vector<4x512xbf16>, vector<4x512xf32> -> vector<4x512xf32>
    %91 = arith.addf %82, %90 : vector<4x512xf32>
    %c0_57 = arith.constant 0 : index
    %c0_58 = arith.constant 0 : index
    %c0_59 = arith.constant 0 : index
    %92 = vector.load %arg6[%c0_57, %c0_58, %c0_59] : memref<3x4x1xf32, #tpu.memory_space<vmem>>, vector<1x4x1xf32>
    %93 = vector.shape_cast %92 : vector<1x4x1xf32> to vector<4x1xf32>
    %94 = vector.broadcast %93 : vector<4x1xf32> to vector<4x512xf32>
    %95 = arith.addf %91, %94 : vector<4x512xf32>
    %c0_60 = arith.constant 0 : index
    %c0_61 = arith.constant 0 : index
    %c0_62 = arith.constant 0 : index
    %96 = vector.load %arg7[%c0_60, %c0_61, %c0_62] : memref<1x12x512xf32, #tpu.memory_space<vmem>>, vector<1x4x512xf32>
    %97 = vector.shape_cast %96 : vector<1x4x512xf32> to vector<4x512xf32>
    %98 = vector.shape_cast %95 : vector<4x512xf32> to vector<1x4x512xf32>
    tpu.vector_store %arg7[%c0_60, %c0_61, %c0_62], %98 {strides = array<i32>} : memref<1x12x512xf32, #tpu.memory_space<vmem>>, vector<1x4x512xf32>,
    %c4_63 = arith.constant 4 : index
    %c0_64 = arith.constant 0 : index
    %99 = vector.load %arg8[%c4_63, %c0_64] : memref<12x512xf32, #tpu.memory_space<vmem>>, vector<4x512xf32>
    tpu.vector_store %arg8[%c4_63, %c0_64], %95 {strides = array<i32>} : memref<12x512xf32, #tpu.memory_space<vmem>>, vector<4x512xf32>,
    %c0_65 = arith.constant 0 : index
    %c0_66 = arith.constant 0 : index
    %100 = vector.load %arg8[%c0_65, %c0_66] : memref<12x512xf32, #tpu.memory_space<vmem>>, vector<8x512xf32>
    %c1_67 = arith.constant 1 : index
    %c0_68 = arith.constant 0 : index
    %c0_69 = arith.constant 0 : index
    %101 = vector.load %arg3[%c1_67, %c0_68, %c0_69] : memref<3x12x1xf32, #tpu.memory_space<vmem>>, vector<1x8x1xf32>
    %102 = vector.shape_cast %101 : vector<1x8x1xf32> to vector<8x1xf32>
    %103 = vector.broadcast %102 : vector<8x1xf32> to vector<8x512xf32>
    %104 = arith.mulf %100, %103 : vector<8x512xf32>
    %c1_70 = arith.constant 1 : index
    %c0_71 = arith.constant 0 : index
    %c0_72 = arith.constant 0 : index
    %105 = vector.load %arg4[%c1_70, %c0_71, %c0_72] : memref<3x12x1xf32, #tpu.memory_space<vmem>>, vector<1x8x1xf32>
    %106 = vector.shape_cast %105 : vector<1x8x1xf32> to vector<8x1xf32>
    %107 = vector.broadcast %106 : vector<8x1xf32> to vector<8x512xf32>
    %108 = arith.addf %104, %107 : vector<8x512xf32>
    %cst_73 = arith.constant 0.000000e+00 : f32
    %109 = vector.broadcast %cst_73 : f32 to vector<8x512xf32>
    %110 = arith.maximumf %108, %109 : vector<8x512xf32>
    %cst_74 = arith.constant 0.000000e+00 : f32
    %111 = vector.broadcast %cst_74 : f32 to vector<4x512xf32>
    %c17_i32_75 = arith.constant 17 : i32
    %112 = tpu.dynamic_rotate %110 by %c17_i32_75 dim 1 : vector<8x512xf32>, i32 -> vector<8x512xf32>
    %c0_76 = arith.constant 0 : index
    %c0_77 = arith.constant 0 : index
    %113 = vector.load %arg1[%c0_76, %c0_77] : memref<9x512xf32, #tpu.memory_space<vmem>>, vector<1x512xf32>
    %114 = vector.broadcast %113 : vector<1x512xf32> to vector<8x512xf32>
    %115 = arith.mulf %112, %114 : vector<8x512xf32>
    %c9 = arith.constant 9 : index
    %c0_78 = arith.constant 0 : index
    %c0_79 = arith.constant 0 : index
    %116 = vector.load %arg5[%c9, %c0_78, %c0_79] : memref<27x4x12xbf16, #tpu.memory_space<vmem>>, vector<1x4x8xbf16>
    %117 = vector.shape_cast %116 : vector<1x4x8xbf16> to vector<4x8xbf16>
    %118 = arith.truncf %115 : vector<8x512xf32> to vector<8x512xbf16>
    %cst_80 = arith.constant dense<0.000000e+00> : vector<4x512xf32>
    %119 = tpu.matmul %117, %118, %cst_80 {dimension_numbers = #tpu.dot_dimension_numbers<[1], [0], [0], [1], [0, 0, 1, 1], [], []>} : vector<4x8xbf16>, vector<8x512xbf16>, vector<4x512xf32> -> vector<4x512xf32>
    %120 = arith.addf %111, %119 : vector<4x512xf32>
    %c16_i32_81 = arith.constant 16 : i32
    %121 = tpu.dynamic_rotate %110 by %c16_i32_81 dim 1 : vector<8x512xf32>, i32 -> vector<8x512xf32>
    %c1_82 = arith.constant 1 : index
    %c0_83 = arith.constant 0 : index
    %122 = vector.load %arg1[%c1_82, %c0_83] : memref<9x512xf32, #tpu.memory_space<vmem>>, vector<1x512xf32>
    %123 = vector.broadcast %122 : vector<1x512xf32> to vector<8x512xf32>
    %124 = arith.mulf %121, %123 : vector<8x512xf32>
    %c10 = arith.constant 10 : index
    %c0_84 = arith.constant 0 : index
    %c0_85 = arith.constant 0 : index
    %125 = vector.load %arg5[%c10, %c0_84, %c0_85] : memref<27x4x12xbf16, #tpu.memory_space<vmem>>, vector<1x4x8xbf16>
    %126 = vector.shape_cast %125 : vector<1x4x8xbf16> to vector<4x8xbf16>
    %127 = arith.truncf %124 : vector<8x512xf32> to vector<8x512xbf16>
    %cst_86 = arith.constant dense<0.000000e+00> : vector<4x512xf32>
    %128 = tpu.matmul %126, %127, %cst_86 {dimension_numbers = #tpu.dot_dimension_numbers<[1], [0], [0], [1], [0, 0, 1, 1], [], []>} : vector<4x8xbf16>, vector<8x512xbf16>, vector<4x512xf32> -> vector<4x512xf32>
    %129 = arith.addf %120, %128 : vector<4x512xf32>
    %c15_i32_87 = arith.constant 15 : i32
    %130 = tpu.dynamic_rotate %110 by %c15_i32_87 dim 1 : vector<8x512xf32>, i32 -> vector<8x512xf32>
    %c2_88 = arith.constant 2 : index
    %c0_89 = arith.constant 0 : index
    %131 = vector.load %arg1[%c2_88, %c0_89] : memref<9x512xf32, #tpu.memory_space<vmem>>, vector<1x512xf32>
    %132 = vector.broadcast %131 : vector<1x512xf32> to vector<8x512xf32>
    %133 = arith.mulf %130, %132 : vector<8x512xf32>
    %c11 = arith.constant 11 : index
    %c0_90 = arith.constant 0 : index
    %c0_91 = arith.constant 0 : index
    %134 = vector.load %arg5[%c11, %c0_90, %c0_91] : memref<27x4x12xbf16, #tpu.memory_space<vmem>>, vector<1x4x8xbf16>
    %135 = vector.shape_cast %134 : vector<1x4x8xbf16> to vector<4x8xbf16>
    %136 = arith.truncf %133 : vector<8x512xf32> to vector<8x512xbf16>
    %cst_92 = arith.constant dense<0.000000e+00> : vector<4x512xf32>
    %137 = tpu.matmul %135, %136, %cst_92 {dimension_numbers = #tpu.dot_dimension_numbers<[1], [0], [0], [1], [0, 0, 1, 1], [], []>} : vector<4x8xbf16>, vector<8x512xbf16>, vector<4x512xf32> -> vector<4x512xf32>
    %138 = arith.addf %129, %137 : vector<4x512xf32>
    %c1_i32_93 = arith.constant 1 : i32
    %139 = tpu.dynamic_rotate %110 by %c1_i32_93 dim 1 : vector<8x512xf32>, i32 -> vector<8x512xf32>
    %c3_94 = arith.constant 3 : index
    %c0_95 = arith.constant 0 : index
    %140 = vector.load %arg1[%c3_94, %c0_95] : memref<9x512xf32, #tpu.memory_space<vmem>>, vector<1x512xf32>
    %141 = vector.broadcast %140 : vector<1x512xf32> to vector<8x512xf32>
    %142 = arith.mulf %139, %141 : vector<8x512xf32>
    %c12 = arith.constant 12 : index
    %c0_96 = arith.constant 0 : index
    %c0_97 = arith.constant 0 : index
    %143 = vector.load %arg5[%c12, %c0_96, %c0_97] : memref<27x4x12xbf16, #tpu.memory_space<vmem>>, vector<1x4x8xbf16>
    %144 = vector.shape_cast %143 : vector<1x4x8xbf16> to vector<4x8xbf16>
    %145 = arith.truncf %142 : vector<8x512xf32> to vector<8x512xbf16>
    %cst_98 = arith.constant dense<0.000000e+00> : vector<4x512xf32>
    %146 = tpu.matmul %144, %145, %cst_98 {dimension_numbers = #tpu.dot_dimension_numbers<[1], [0], [0], [1], [0, 0, 1, 1], [], []>} : vector<4x8xbf16>, vector<8x512xbf16>, vector<4x512xf32> -> vector<4x512xf32>
    %147 = arith.addf %138, %146 : vector<4x512xf32>
    %c13 = arith.constant 13 : index
    %c0_99 = arith.constant 0 : index
    %c0_100 = arith.constant 0 : index
    %148 = vector.load %arg5[%c13, %c0_99, %c0_100] : memref<27x4x12xbf16, #tpu.memory_space<vmem>>, vector<1x4x8xbf16>
    %149 = vector.shape_cast %148 : vector<1x4x8xbf16> to vector<4x8xbf16>
    %150 = arith.truncf %110 : vector<8x512xf32> to vector<8x512xbf16>
    %cst_101 = arith.constant dense<0.000000e+00> : vector<4x512xf32>
    %151 = tpu.matmul %149, %150, %cst_101 {dimension_numbers = #tpu.dot_dimension_numbers<[1], [0], [0], [1], [0, 0, 1, 1], [], []>} : vector<4x8xbf16>, vector<8x512xbf16>, vector<4x512xf32> -> vector<4x512xf32>
    %152 = arith.addf %147, %151 : vector<4x512xf32>
    %c511_i32_102 = arith.constant 511 : i32
    %153 = tpu.dynamic_rotate %110 by %c511_i32_102 dim 1 : vector<8x512xf32>, i32 -> vector<8x512xf32>
    %c5_103 = arith.constant 5 : index
    %c0_104 = arith.constant 0 : index
    %154 = vector.load %arg1[%c5_103, %c0_104] : memref<9x512xf32, #tpu.memory_space<vmem>>, vector<1x512xf32>
    %155 = vector.broadcast %154 : vector<1x512xf32> to vector<8x512xf32>
    %156 = arith.mulf %153, %155 : vector<8x512xf32>
    %c14 = arith.constant 14 : index
    %c0_105 = arith.constant 0 : index
    %c0_106 = arith.constant 0 : index
    %157 = vector.load %arg5[%c14, %c0_105, %c0_106] : memref<27x4x12xbf16, #tpu.memory_space<vmem>>, vector<1x4x8xbf16>
    %158 = vector.shape_cast %157 : vector<1x4x8xbf16> to vector<4x8xbf16>
    %159 = arith.truncf %156 : vector<8x512xf32> to vector<8x512xbf16>
    %cst_107 = arith.constant dense<0.000000e+00> : vector<4x512xf32>
    %160 = tpu.matmul %158, %159, %cst_107 {dimension_numbers = #tpu.dot_dimension_numbers<[1], [0], [0], [1], [0, 0, 1, 1], [], []>} : vector<4x8xbf16>, vector<8x512xbf16>, vector<4x512xf32> -> vector<4x512xf32>
    %161 = arith.addf %152, %160 : vector<4x512xf32>
    %c497_i32_108 = arith.constant 497 : i32
    %162 = tpu.dynamic_rotate %110 by %c497_i32_108 dim 1 : vector<8x512xf32>, i32 -> vector<8x512xf32>
    %c6_109 = arith.constant 6 : index
    %c0_110 = arith.constant 0 : index
    %163 = vector.load %arg1[%c6_109, %c0_110] : memref<9x512xf32, #tpu.memory_space<vmem>>, vector<1x512xf32>
    %164 = vector.broadcast %163 : vector<1x512xf32> to vector<8x512xf32>
    %165 = arith.mulf %162, %164 : vector<8x512xf32>
    %c15 = arith.constant 15 : index
    %c0_111 = arith.constant 0 : index
    %c0_112 = arith.constant 0 : index
    %166 = vector.load %arg5[%c15, %c0_111, %c0_112] : memref<27x4x12xbf16, #tpu.memory_space<vmem>>, vector<1x4x8xbf16>
    %167 = vector.shape_cast %166 : vector<1x4x8xbf16> to vector<4x8xbf16>
    %168 = arith.truncf %165 : vector<8x512xf32> to vector<8x512xbf16>
    %cst_113 = arith.constant dense<0.000000e+00> : vector<4x512xf32>
    %169 = tpu.matmul %167, %168, %cst_113 {dimension_numbers = #tpu.dot_dimension_numbers<[1], [0], [0], [1], [0, 0, 1, 1], [], []>} : vector<4x8xbf16>, vector<8x512xbf16>, vector<4x512xf32> -> vector<4x512xf32>
    %170 = arith.addf %161, %169 : vector<4x512xf32>
    %c496_i32_114 = arith.constant 496 : i32
    %171 = tpu.dynamic_rotate %110 by %c496_i32_114 dim 1 : vector<8x512xf32>, i32 -> vector<8x512xf32>
    %c7_115 = arith.constant 7 : index
    %c0_116 = arith.constant 0 : index
    %172 = vector.load %arg1[%c7_115, %c0_116] : memref<9x512xf32, #tpu.memory_space<vmem>>, vector<1x512xf32>
    %173 = vector.broadcast %172 : vector<1x512xf32> to vector<8x512xf32>
    %174 = arith.mulf %171, %173 : vector<8x512xf32>
    %c16 = arith.constant 16 : index
    %c0_117 = arith.constant 0 : index
    %c0_118 = arith.constant 0 : index
    %175 = vector.load %arg5[%c16, %c0_117, %c0_118] : memref<27x4x12xbf16, #tpu.memory_space<vmem>>, vector<1x4x8xbf16>
    %176 = vector.shape_cast %175 : vector<1x4x8xbf16> to vector<4x8xbf16>
    %177 = arith.truncf %174 : vector<8x512xf32> to vector<8x512xbf16>
    %cst_119 = arith.constant dense<0.000000e+00> : vector<4x512xf32>
    %178 = tpu.matmul %176, %177, %cst_119 {dimension_numbers = #tpu.dot_dimension_numbers<[1], [0], [0], [1], [0, 0, 1, 1], [], []>} : vector<4x8xbf16>, vector<8x512xbf16>, vector<4x512xf32> -> vector<4x512xf32>
    %179 = arith.addf %170, %178 : vector<4x512xf32>
    %c495_i32_120 = arith.constant 495 : i32
    %180 = tpu.dynamic_rotate %110 by %c495_i32_120 dim 1 : vector<8x512xf32>, i32 -> vector<8x512xf32>
    %c8_121 = arith.constant 8 : index
    %c0_122 = arith.constant 0 : index
    %181 = vector.load %arg1[%c8_121, %c0_122] : memref<9x512xf32, #tpu.memory_space<vmem>>, vector<1x512xf32>
    %182 = vector.broadcast %181 : vector<1x512xf32> to vector<8x512xf32>
    %183 = arith.mulf %180, %182 : vector<8x512xf32>
    %c17 = arith.constant 17 : index
    %c0_123 = arith.constant 0 : index
    %c0_124 = arith.constant 0 : index
    %184 = vector.load %arg5[%c17, %c0_123, %c0_124] : memref<27x4x12xbf16, #tpu.memory_space<vmem>>, vector<1x4x8xbf16>
    %185 = vector.shape_cast %184 : vector<1x4x8xbf16> to vector<4x8xbf16>
    %186 = arith.truncf %183 : vector<8x512xf32> to vector<8x512xbf16>
    %cst_125 = arith.constant dense<0.000000e+00> : vector<4x512xf32>
    %187 = tpu.matmul %185, %186, %cst_125 {dimension_numbers = #tpu.dot_dimension_numbers<[1], [0], [0], [1], [0, 0, 1, 1], [], []>} : vector<4x8xbf16>, vector<8x512xbf16>, vector<4x512xf32> -> vector<4x512xf32>
    %188 = arith.addf %179, %187 : vector<4x512xf32>
    %c1_126 = arith.constant 1 : index
    %c0_127 = arith.constant 0 : index
    %c0_128 = arith.constant 0 : index
    %189 = vector.load %arg6[%c1_126, %c0_127, %c0_128] : memref<3x4x1xf32, #tpu.memory_space<vmem>>, vector<1x4x1xf32>
    %190 = vector.shape_cast %189 : vector<1x4x1xf32> to vector<4x1xf32>
    %191 = vector.broadcast %190 : vector<4x1xf32> to vector<4x512xf32>
    %192 = arith.addf %188, %191 : vector<4x512xf32>
    %c0_129 = arith.constant 0 : index
    %c4_130 = arith.constant 4 : index
    %c0_131 = arith.constant 0 : index
    %193 = vector.load %arg7[%c0_129, %c4_130, %c0_131] : memref<1x12x512xf32, #tpu.memory_space<vmem>>, vector<1x4x512xf32>
    %194 = vector.shape_cast %193 : vector<1x4x512xf32> to vector<4x512xf32>
    %195 = vector.shape_cast %192 : vector<4x512xf32> to vector<1x4x512xf32>
    tpu.vector_store %arg7[%c0_129, %c4_130, %c0_131], %195 {strides = array<i32>} : memref<1x12x512xf32, #tpu.memory_space<vmem>>, vector<1x4x512xf32>,
    %c8_132 = arith.constant 8 : index
    %c0_133 = arith.constant 0 : index
    %196 = vector.load %arg8[%c8_132, %c0_133] : memref<12x512xf32, #tpu.memory_space<vmem>>, vector<4x512xf32>
    tpu.vector_store %arg8[%c8_132, %c0_133], %192 {strides = array<i32>} : memref<12x512xf32, #tpu.memory_space<vmem>>, vector<4x512xf32>,
    %c0_134 = arith.constant 0 : index
    %c0_135 = arith.constant 0 : index
    %197 = vector.load %arg8[%c0_134, %c0_135] : memref<12x512xf32, #tpu.memory_space<vmem>>, vector<12x512xf32>
    %c2_136 = arith.constant 2 : index
    %c0_137 = arith.constant 0 : index
    %c0_138 = arith.constant 0 : index
    %198 = vector.load %arg3[%c2_136, %c0_137, %c0_138] : memref<3x12x1xf32, #tpu.memory_space<vmem>>, vector<1x12x1xf32>
    %199 = vector.shape_cast %198 : vector<1x12x1xf32> to vector<12x1xf32>
    %200 = vector.broadcast %199 : vector<12x1xf32> to vector<12x512xf32>
    %201 = arith.mulf %197, %200 : vector<12x512xf32>
    %c2_139 = arith.constant 2 : index
    %c0_140 = arith.constant 0 : index
    %c0_141 = arith.constant 0 : index
    %202 = vector.load %arg4[%c2_139, %c0_140, %c0_141] : memref<3x12x1xf32, #tpu.memory_space<vmem>>, vector<1x12x1xf32>
    %203 = vector.shape_cast %202 : vector<1x12x1xf32> to vector<12x1xf32>
    %204 = vector.broadcast %203 : vector<12x1xf32> to vector<12x512xf32>
    %205 = arith.addf %201, %204 : vector<12x512xf32>
    %cst_142 = arith.constant 0.000000e+00 : f32
    %206 = vector.broadcast %cst_142 : f32 to vector<12x512xf32>
    %207 = arith.maximumf %205, %206 : vector<12x512xf32>
    %cst_143 = arith.constant 0.000000e+00 : f32
    %208 = vector.broadcast %cst_143 : f32 to vector<4x512xf32>
    %c17_i32_144 = arith.constant 17 : i32
    %209 = tpu.dynamic_rotate %207 by %c17_i32_144 dim 1 : vector<12x512xf32>, i32 -> vector<12x512xf32>
    %c0_145 = arith.constant 0 : index
    %c0_146 = arith.constant 0 : index
    %210 = vector.load %arg1[%c0_145, %c0_146] : memref<9x512xf32, #tpu.memory_space<vmem>>, vector<1x512xf32>
    %211 = vector.broadcast %210 : vector<1x512xf32> to vector<12x512xf32>
    %212 = arith.mulf %209, %211 : vector<12x512xf32>
    %c18 = arith.constant 18 : index
    %c0_147 = arith.constant 0 : index
    %c0_148 = arith.constant 0 : index
    %213 = vector.load %arg5[%c18, %c0_147, %c0_148] : memref<27x4x12xbf16, #tpu.memory_space<vmem>>, vector<1x4x12xbf16>
    %214 = vector.shape_cast %213 : vector<1x4x12xbf16> to vector<4x12xbf16>
    %215 = arith.truncf %212 : vector<12x512xf32> to vector<12x512xbf16>
    %cst_149 = arith.constant dense<0.000000e+00> : vector<4x512xf32>
    %216 = tpu.matmul %214, %215, %cst_149 {dimension_numbers = #tpu.dot_dimension_numbers<[1], [0], [0], [1], [0, 0, 1, 1], [], []>} : vector<4x12xbf16>, vector<12x512xbf16>, vector<4x512xf32> -> vector<4x512xf32>
    %217 = arith.addf %208, %216 : vector<4x512xf32>
    %c16_i32_150 = arith.constant 16 : i32
    %218 = tpu.dynamic_rotate %207 by %c16_i32_150 dim 1 : vector<12x512xf32>, i32 -> vector<12x512xf32>
    %c1_151 = arith.constant 1 : index
    %c0_152 = arith.constant 0 : index
    %219 = vector.load %arg1[%c1_151, %c0_152] : memref<9x512xf32, #tpu.memory_space<vmem>>, vector<1x512xf32>
    %220 = vector.broadcast %219 : vector<1x512xf32> to vector<12x512xf32>
    %221 = arith.mulf %218, %220 : vector<12x512xf32>
    %c19 = arith.constant 19 : index
    %c0_153 = arith.constant 0 : index
    %c0_154 = arith.constant 0 : index
    %222 = vector.load %arg5[%c19, %c0_153, %c0_154] : memref<27x4x12xbf16, #tpu.memory_space<vmem>>, vector<1x4x12xbf16>
    %223 = vector.shape_cast %222 : vector<1x4x12xbf16> to vector<4x12xbf16>
    %224 = arith.truncf %221 : vector<12x512xf32> to vector<12x512xbf16>
    %cst_155 = arith.constant dense<0.000000e+00> : vector<4x512xf32>
    %225 = tpu.matmul %223, %224, %cst_155 {dimension_numbers = #tpu.dot_dimension_numbers<[1], [0], [0], [1], [0, 0, 1, 1], [], []>} : vector<4x12xbf16>, vector<12x512xbf16>, vector<4x512xf32> -> vector<4x512xf32>
    %226 = arith.addf %217, %225 : vector<4x512xf32>
    %c15_i32_156 = arith.constant 15 : i32
    %227 = tpu.dynamic_rotate %207 by %c15_i32_156 dim 1 : vector<12x512xf32>, i32 -> vector<12x512xf32>
    %c2_157 = arith.constant 2 : index
    %c0_158 = arith.constant 0 : index
    %228 = vector.load %arg1[%c2_157, %c0_158] : memref<9x512xf32, #tpu.memory_space<vmem>>, vector<1x512xf32>
    %229 = vector.broadcast %228 : vector<1x512xf32> to vector<12x512xf32>
    %230 = arith.mulf %227, %229 : vector<12x512xf32>
    %c20 = arith.constant 20 : index
    %c0_159 = arith.constant 0 : index
    %c0_160 = arith.constant 0 : index
    %231 = vector.load %arg5[%c20, %c0_159, %c0_160] : memref<27x4x12xbf16, #tpu.memory_space<vmem>>, vector<1x4x12xbf16>
    %232 = vector.shape_cast %231 : vector<1x4x12xbf16> to vector<4x12xbf16>
    %233 = arith.truncf %230 : vector<12x512xf32> to vector<12x512xbf16>
    %cst_161 = arith.constant dense<0.000000e+00> : vector<4x512xf32>
    %234 = tpu.matmul %232, %233, %cst_161 {dimension_numbers = #tpu.dot_dimension_numbers<[1], [0], [0], [1], [0, 0, 1, 1], [], []>} : vector<4x12xbf16>, vector<12x512xbf16>, vector<4x512xf32> -> vector<4x512xf32>
    %235 = arith.addf %226, %234 : vector<4x512xf32>
    %c1_i32_162 = arith.constant 1 : i32
    %236 = tpu.dynamic_rotate %207 by %c1_i32_162 dim 1 : vector<12x512xf32>, i32 -> vector<12x512xf32>
    %c3_163 = arith.constant 3 : index
    %c0_164 = arith.constant 0 : index
    %237 = vector.load %arg1[%c3_163, %c0_164] : memref<9x512xf32, #tpu.memory_space<vmem>>, vector<1x512xf32>
    %238 = vector.broadcast %237 : vector<1x512xf32> to vector<12x512xf32>
    %239 = arith.mulf %236, %238 : vector<12x512xf32>
    %c21 = arith.constant 21 : index
    %c0_165 = arith.constant 0 : index
    %c0_166 = arith.constant 0 : index
    %240 = vector.load %arg5[%c21, %c0_165, %c0_166] : memref<27x4x12xbf16, #tpu.memory_space<vmem>>, vector<1x4x12xbf16>
    %241 = vector.shape_cast %240 : vector<1x4x12xbf16> to vector<4x12xbf16>
    %242 = arith.truncf %239 : vector<12x512xf32> to vector<12x512xbf16>
    %cst_167 = arith.constant dense<0.000000e+00> : vector<4x512xf32>
    %243 = tpu.matmul %241, %242, %cst_167 {dimension_numbers = #tpu.dot_dimension_numbers<[1], [0], [0], [1], [0, 0, 1, 1], [], []>} : vector<4x12xbf16>, vector<12x512xbf16>, vector<4x512xf32> -> vector<4x512xf32>
    %244 = arith.addf %235, %243 : vector<4x512xf32>
    %c22 = arith.constant 22 : index
    %c0_168 = arith.constant 0 : index
    %c0_169 = arith.constant 0 : index
    %245 = vector.load %arg5[%c22, %c0_168, %c0_169] : memref<27x4x12xbf16, #tpu.memory_space<vmem>>, vector<1x4x12xbf16>
    %246 = vector.shape_cast %245 : vector<1x4x12xbf16> to vector<4x12xbf16>
    %247 = arith.truncf %207 : vector<12x512xf32> to vector<12x512xbf16>
    %cst_170 = arith.constant dense<0.000000e+00> : vector<4x512xf32>
    %248 = tpu.matmul %246, %247, %cst_170 {dimension_numbers = #tpu.dot_dimension_numbers<[1], [0], [0], [1], [0, 0, 1, 1], [], []>} : vector<4x12xbf16>, vector<12x512xbf16>, vector<4x512xf32> -> vector<4x512xf32>
    %249 = arith.addf %244, %248 : vector<4x512xf32>
    %c511_i32_171 = arith.constant 511 : i32
    %250 = tpu.dynamic_rotate %207 by %c511_i32_171 dim 1 : vector<12x512xf32>, i32 -> vector<12x512xf32>
    %c5_172 = arith.constant 5 : index
    %c0_173 = arith.constant 0 : index
    %251 = vector.load %arg1[%c5_172, %c0_173] : memref<9x512xf32, #tpu.memory_space<vmem>>, vector<1x512xf32>
    %252 = vector.broadcast %251 : vector<1x512xf32> to vector<12x512xf32>
    %253 = arith.mulf %250, %252 : vector<12x512xf32>
    %c23 = arith.constant 23 : index
    %c0_174 = arith.constant 0 : index
    %c0_175 = arith.constant 0 : index
    %254 = vector.load %arg5[%c23, %c0_174, %c0_175] : memref<27x4x12xbf16, #tpu.memory_space<vmem>>, vector<1x4x12xbf16>
    %255 = vector.shape_cast %254 : vector<1x4x12xbf16> to vector<4x12xbf16>
    %256 = arith.truncf %253 : vector<12x512xf32> to vector<12x512xbf16>
    %cst_176 = arith.constant dense<0.000000e+00> : vector<4x512xf32>
    %257 = tpu.matmul %255, %256, %cst_176 {dimension_numbers = #tpu.dot_dimension_numbers<[1], [0], [0], [1], [0, 0, 1, 1], [], []>} : vector<4x12xbf16>, vector<12x512xbf16>, vector<4x512xf32> -> vector<4x512xf32>
    %258 = arith.addf %249, %257 : vector<4x512xf32>
    %c497_i32_177 = arith.constant 497 : i32
    %259 = tpu.dynamic_rotate %207 by %c497_i32_177 dim 1 : vector<12x512xf32>, i32 -> vector<12x512xf32>
    %c6_178 = arith.constant 6 : index
    %c0_179 = arith.constant 0 : index
    %260 = vector.load %arg1[%c6_178, %c0_179] : memref<9x512xf32, #tpu.memory_space<vmem>>, vector<1x512xf32>
    %261 = vector.broadcast %260 : vector<1x512xf32> to vector<12x512xf32>
    %262 = arith.mulf %259, %261 : vector<12x512xf32>
    %c24 = arith.constant 24 : index
    %c0_180 = arith.constant 0 : index
    %c0_181 = arith.constant 0 : index
    %263 = vector.load %arg5[%c24, %c0_180, %c0_181] : memref<27x4x12xbf16, #tpu.memory_space<vmem>>, vector<1x4x12xbf16>
    %264 = vector.shape_cast %263 : vector<1x4x12xbf16> to vector<4x12xbf16>
    %265 = arith.truncf %262 : vector<12x512xf32> to vector<12x512xbf16>
    %cst_182 = arith.constant dense<0.000000e+00> : vector<4x512xf32>
    %266 = tpu.matmul %264, %265, %cst_182 {dimension_numbers = #tpu.dot_dimension_numbers<[1], [0], [0], [1], [0, 0, 1, 1], [], []>} : vector<4x12xbf16>, vector<12x512xbf16>, vector<4x512xf32> -> vector<4x512xf32>
    %267 = arith.addf %258, %266 : vector<4x512xf32>
    %c496_i32_183 = arith.constant 496 : i32
    %268 = tpu.dynamic_rotate %207 by %c496_i32_183 dim 1 : vector<12x512xf32>, i32 -> vector<12x512xf32>
    %c7_184 = arith.constant 7 : index
    %c0_185 = arith.constant 0 : index
    %269 = vector.load %arg1[%c7_184, %c0_185] : memref<9x512xf32, #tpu.memory_space<vmem>>, vector<1x512xf32>
    %270 = vector.broadcast %269 : vector<1x512xf32> to vector<12x512xf32>
    %271 = arith.mulf %268, %270 : vector<12x512xf32>
    %c25 = arith.constant 25 : index
    %c0_186 = arith.constant 0 : index
    %c0_187 = arith.constant 0 : index
    %272 = vector.load %arg5[%c25, %c0_186, %c0_187] : memref<27x4x12xbf16, #tpu.memory_space<vmem>>, vector<1x4x12xbf16>
    %273 = vector.shape_cast %272 : vector<1x4x12xbf16> to vector<4x12xbf16>
    %274 = arith.truncf %271 : vector<12x512xf32> to vector<12x512xbf16>
    %cst_188 = arith.constant dense<0.000000e+00> : vector<4x512xf32>
    %275 = tpu.matmul %273, %274, %cst_188 {dimension_numbers = #tpu.dot_dimension_numbers<[1], [0], [0], [1], [0, 0, 1, 1], [], []>} : vector<4x12xbf16>, vector<12x512xbf16>, vector<4x512xf32> -> vector<4x512xf32>
    %276 = arith.addf %267, %275 : vector<4x512xf32>
    %c495_i32_189 = arith.constant 495 : i32
    %277 = tpu.dynamic_rotate %207 by %c495_i32_189 dim 1 : vector<12x512xf32>, i32 -> vector<12x512xf32>
    %c8_190 = arith.constant 8 : index
    %c0_191 = arith.constant 0 : index
    %278 = vector.load %arg1[%c8_190, %c0_191] : memref<9x512xf32, #tpu.memory_space<vmem>>, vector<1x512xf32>
    %279 = vector.broadcast %278 : vector<1x512xf32> to vector<12x512xf32>
    %280 = arith.mulf %277, %279 : vector<12x512xf32>
    %c26 = arith.constant 26 : index
    %c0_192 = arith.constant 0 : index
    %c0_193 = arith.constant 0 : index
    %281 = vector.load %arg5[%c26, %c0_192, %c0_193] : memref<27x4x12xbf16, #tpu.memory_space<vmem>>, vector<1x4x12xbf16>
    %282 = vector.shape_cast %281 : vector<1x4x12xbf16> to vector<4x12xbf16>
    %283 = arith.truncf %280 : vector<12x512xf32> to vector<12x512xbf16>
    %cst_194 = arith.constant dense<0.000000e+00> : vector<4x512xf32>
    %284 = tpu.matmul %282, %283, %cst_194 {dimension_numbers = #tpu.dot_dimension_numbers<[1], [0], [0], [1], [0, 0, 1, 1], [], []>} : vector<4x12xbf16>, vector<12x512xbf16>, vector<4x512xf32> -> vector<4x512xf32>
    %285 = arith.addf %276, %284 : vector<4x512xf32>
    %c2_195 = arith.constant 2 : index
    %c0_196 = arith.constant 0 : index
    %c0_197 = arith.constant 0 : index
    %286 = vector.load %arg6[%c2_195, %c0_196, %c0_197] : memref<3x4x1xf32, #tpu.memory_space<vmem>>, vector<1x4x1xf32>
    %287 = vector.shape_cast %286 : vector<1x4x1xf32> to vector<4x1xf32>
    %288 = vector.broadcast %287 : vector<4x1xf32> to vector<4x512xf32>
    %289 = arith.addf %285, %288 : vector<4x512xf32>
    %c0_198 = arith.constant 0 : index
    %c8_199 = arith.constant 8 : index
    %c0_200 = arith.constant 0 : index
    %290 = vector.load %arg7[%c0_198, %c8_199, %c0_200] : memref<1x12x512xf32, #tpu.memory_space<vmem>>, vector<1x4x512xf32>
    %291 = vector.shape_cast %290 : vector<1x4x512xf32> to vector<4x512xf32>
    %292 = vector.shape_cast %289 : vector<4x512xf32> to vector<1x4x512xf32>
    tpu.vector_store %arg7[%c0_198, %c8_199, %c0_200], %292 {strides = array<i32>} : memref<1x12x512xf32, #tpu.memory_space<vmem>>, vector<1x4x512xf32>,
    return
  }
  func.func @transform_0(%arg0: i32) -> (i32, i32) {
    %c0_i32 = arith.constant 0 : i32
    %c0_i32_0 = arith.constant 0 : i32
    %c0_i32_1 = arith.constant 0 : i32
    return %c0_i32, %c0_i32_0 : i32, i32
  }
  func.func @transform_1(%arg0: i32) -> (i32, i32, i32) {
    %c0_i32 = arith.constant 0 : i32
    %c0_i32_0 = arith.constant 0 : i32
    %c0_i32_1 = arith.constant 0 : i32
    return %arg0, %c0_i32, %c0_i32_0 : i32, i32, i32
  }
  func.func @transform_2(%arg0: i32) -> (i32, i32, i32) {
    %c0_i32 = arith.constant 0 : i32
    %c0_i32_0 = arith.constant 0 : i32
    %c0_i32_1 = arith.constant 0 : i32
    %c0_i32_2 = arith.constant 0 : i32
    return %c0_i32, %c0_i32_0, %c0_i32_1 : i32, i32, i32
  }
  func.func @transform_3(%arg0: i32) -> (i32, i32, i32) {
    %c0_i32 = arith.constant 0 : i32
    %c0_i32_0 = arith.constant 0 : i32
    %c0_i32_1 = arith.constant 0 : i32
    %c0_i32_2 = arith.constant 0 : i32
    return %c0_i32, %c0_i32_0, %c0_i32_1 : i32, i32, i32
  }
  func.func @transform_4(%arg0: i32) -> (i32, i32, i32) {
    %c0_i32 = arith.constant 0 : i32
    %c0_i32_0 = arith.constant 0 : i32
    %c0_i32_1 = arith.constant 0 : i32
    %c0_i32_2 = arith.constant 0 : i32
    return %c0_i32, %c0_i32_0, %c0_i32_1 : i32, i32, i32
  }
  func.func @transform_5(%arg0: i32) -> (i32, i32, i32) {
    %c0_i32 = arith.constant 0 : i32
    %c0_i32_0 = arith.constant 0 : i32
    %c0_i32_1 = arith.constant 0 : i32
    %c0_i32_2 = arith.constant 0 : i32
    return %c0_i32, %c0_i32_0, %c0_i32_1 : i32, i32, i32
  }
  func.func @transform_6(%arg0: i32) -> (i32, i32, i32) {
    %c0_i32 = arith.constant 0 : i32
    %c0_i32_0 = arith.constant 0 : i32
    %c0_i32_1 = arith.constant 0 : i32
    return %arg0, %c0_i32, %c0_i32_0 : i32, i32, i32
  }
}

</mosaic_0001>

<llo_original>
// kernel: tpu_custom_call.1
$region0: #{tpu_custom_call.1}
  #allocation0 [shape = 'u32[]', space=smem, size = 0x4, offset = 0x4, fixed_abs, tag = 'smem constant byte address 0x4 - core index']
  #allocation1 [shape = 'u32[144,128]{1,0:T(1,128)}', space=vmem, size = 0x12000, scoped, tag = 'internal scratch']
  #allocation2 [shape = 'f32[12,512]{1,0:T(8,128)}', space=vmem, size = 0x8000, scoped, tag = 'scratch operand']
  %s0 = inlined_call_operand.vmem [shape: f32[9,512], index: 0, kind: input, shape index: {}]
  %s1 = inlined_call_operand.vmem [shape: f32[1,4,512], index: 1, kind: input, shape index: {}]
  %s2 = inlined_call_operand.vmem [shape: f32[3,12,1], index: 2, kind: input, shape index: {}]
  %s3 = inlined_call_operand.vmem [shape: f32[3,12,1], index: 3, kind: input, shape index: {}]
  %s4 = inlined_call_operand.vmem [shape: bf16[27,4,12], index: 4, kind: input, shape index: {}]
  %s5 = inlined_call_operand.vmem [shape: f32[3,4,1], index: 5, kind: input, shape index: {}]
  %s6 = inlined_call_operand.vmem [shape: f32[1,12,512], index: 6, kind: output, shape index: {}]
  %s7 = sld [smem:[#allocation0]]
  $region34: #{tpu_custom_call.1} parent=0
    _
  %s9 = ssub.s32 1, %s7
  %s10 = scalar_select 0, %s9, %s7
  // Predicated region
  $region2: #{tpu_custom_call.1} parent=0 // pred_check
    _
  $region3: #{tpu_custom_call.1} parent=0 // pred_check_branch
    %12 = sbr.rel (0) target = $region5
  $region4: #{tpu_custom_call.1} parent=0 // pred_region
    _
  $region5: #{tpu_custom_call.1} parent=0 // pred_fallthru
    _
  // Predicated region
  $region6: #{tpu_custom_call.1} parent=0 // pred_check
    _
  $region7: #{tpu_custom_call.1} parent=0 // pred_check_branch
    %14 = sbr.rel (0) target = $region9
  $region8: #{tpu_custom_call.1} parent=0 // pred_region
    _
  $region9: #{tpu_custom_call.1} parent=0 // pred_fallthru
    _
  // Predicated region
  $region10: #{tpu_custom_call.1} parent=0 // pred_check
    _
  $region11: #{tpu_custom_call.1} parent=0 // pred_check_branch
    %16 = sbr.rel (0) target = $region13
  $region12: #{tpu_custom_call.1} parent=0 // pred_region
    _
  $region13: #{tpu_custom_call.1} parent=0 // pred_fallthru
    _
  // Predicated region
  $region14: #{tpu_custom_call.1} parent=0 // pred_check
    _
  $region15: #{tpu_custom_call.1} parent=0 // pred_check_branch
    %18 = sbr.rel (0) target = $region17
  $region16: #{tpu_custom_call.1} parent=0 // pred_region
    _
  $region17: #{tpu_custom_call.1} parent=0 // pred_fallthru
    _
  // Predicated region
  $region18: #{tpu_custom_call.1} parent=0 // pred_check
    _
  $region19: #{tpu_custom_call.1} parent=0 // pred_check_branch
    %20 = sbr.rel (0) target = $region21
  $region20: #{tpu_custom_call.1} parent=0 // pred_region
    _
  $region21: #{tpu_custom_call.1} parent=0 // pred_fallthru
    _
  // Predicated region
  $region22: #{tpu_custom_call.1} parent=0 // pred_check
    _
  $region23: #{tpu_custom_call.1} parent=0 // pred_check_branch
    %22 = sbr.rel (0) target = $region25
  $region24: #{tpu_custom_call.1} parent=0 // pred_region
    _
  $region25: #{tpu_custom_call.1} parent=0 // pred_fallthru
    _
  %v24 = vld [vmem:[%s1] sm:$0xff]
  %v25 = vld [vmem:[%s1 + $0x8] sm:$0xff]
  %v28 = vcombine.high %v24, %v24
  %v29 = vcombine.high %v25, %v25
  %32 = vst [vmem:[#allocation2] sm:$0xf] %v24
  %33 = vst [vmem:[#allocation2 + $0x8] sm:$0xf] %v28
  %34 = vst [vmem:[#allocation2 + $0x10] sm:$0xf] %v25
  %35 = vst [vmem:[#allocation2 + $0x18] sm:$0xf] %v29
  %v36 = vld [vmem:[#allocation2] sm:$0xf]
  %v37 = vld [vmem:[#allocation2 + $0x8] sm:$0xf]
  %v38 = vld [vmem:[#allocation2 + $0x10] sm:$0xf]
  %v39 = vld [vmem:[#allocation2 + $0x18] sm:$0xf]
  %v40 = vld [vmem:[%s2] sm:$0xf]
  %42 = vset.pattern.permute.xlu0 0
  %43 = vperm.xlu0 %42, %v40
  %v44 = vpop.permute.xlu0 %43
  %v46 = vmul.f32 %v36, %v44
  %v47 = vmul.f32 %v37, %v44
  %v48 = vmul.f32 %v38, %v44
  %v49 = vmul.f32 %v39, %v44
  %v50 = vld [vmem:[%s3] sm:$0xf]
  %52 = vset.pattern.permute.xlu0 0
  %53 = vperm.xlu0 %52, %v50
  %v54 = vpop.permute.xlu0 %53
  %v56 = vadd.f32 %v46, %v54
  %v57 = vadd.f32 %v47, %v54
  %v58 = vadd.f32 %v48, %v54
  %v59 = vadd.f32 %v49, %v54
  %v60 = vmax.f32 %v56, 0.0
  %v61 = vmax.f32 %v57, 0.0
  %v62 = vmax.f32 %v58, 0.0
  %v63 = vmax.f32 %v59, 0.0
  %64 = vrot.lane.b32.xlu0 %v60, 17
  %v65 = vpop.permute.xlu0 %64
  %66 = vrot.lane.b32.xlu0 %v61, 17
  %v67 = vpop.permute.xlu0 %66
  %68 = vrot.lane.b32.xlu0 %v62, 17
  %v69 = vpop.permute.xlu0 %68
  %70 = vrot.lane.b32.xlu0 %v63, 17
  %v71 = vpop.permute.xlu0 %70
  %v72 = vlaneseq
  %v73 = vand.u32 %v72, 127
  %vm74 = vcmp.lt.s32.totalorder %v73, 17
  %v75 = vsel %vm74, %v69, %v71
  %v76 = vsel %vm74, %v67, %v69
  %v77 = vsel %vm74, %v65, %v67
  %v78 = vsel %vm74, %v71, %v65
  %v79 = vld [vmem:[%s0] ss:$8 sm:$0xf]
  %v81 = vlaneseq
  %v82 = vshrl.u32 %v81, 7
  %v83 = vsub.s32 0, %v82
  %v84 = vrot.slane %v79, %v83
  %v85 = vlaneseq
  %v86 = vshrl.u32 %v85, 7
  %v87 = vsub.s32 1, %v86
  %v88 = vrot.slane %v79, %v87
  %v89 = vlaneseq
  %v90 = vshrl.u32 %v89, 7
  %v91 = vsub.s32 2, %v90
  %v92 = vrot.slane %v79, %v91
  %v93 = vlaneseq
  %v94 = vshrl.u32 %v93, 7
  %v95 = vsub.s32 3, %v94
  %v96 = vrot.slane %v79, %v95
  %v101 = vmul.f32 %v78, %v84
  %v102 = vmul.f32 %v77, %v88
  %v103 = vmul.f32 %v76, %v92
  %v104 = vmul.f32 %v75, %v96
  %v105 = vld [vmem:[%s4] sm:$0x3]
  %v106 = vpack.c.bf16 %v101, %v101
  %v107 = vpack.c.bf16 %v102, %v102
  %v108 = vpack.c.bf16 %v103, %v103
  %v109 = vpack.c.bf16 %v104, %v104
  %110 = vrot.lane.b32.xlu0 %v60, 16
  %v111 = vpop.permute.xlu0 %110
  %112 = vrot.lane.b32.xlu0 %v61, 16
  %v113 = vpop.permute.xlu0 %112
  %114 = vrot.lane.b32.xlu0 %v62, 16
  %v115 = vpop.permute.xlu0 %114
  %116 = vrot.lane.b32.xlu0 %v63, 16
  %v117 = vpop.permute.xlu0 %116
  %vm118 = vcmp.lt.s32.totalorder %v73, 16
  %v119 = vsel %vm118, %v115, %v117
  %v120 = vsel %vm118, %v113, %v115
  %v121 = vsel %vm118, %v111, %v113
  %v122 = vsel %vm118, %v117, %v111
  %s123 = scalar_lea.vmem %s0, 1
  %v124 = vld [vmem:[%s123] ss:$8 sm:$0xf]
  %v126 = vlaneseq
  %v127 = vshrl.u32 %v126, 7
  %v128 = vsub.s32 0, %v127
  %v129 = vrot.slane %v124, %v128
  %v130 = vlaneseq
  %v131 = vshrl.u32 %v130, 7
  %v132 = vsub.s32 1, %v131
  %v133 = vrot.slane %v124, %v132
  %v134 = vlaneseq
  %v135 = vshrl.u32 %v134, 7
  %v136 = vsub.s32 2, %v135
  %v137 = vrot.slane %v124, %v136
  %v138 = vlaneseq
  %v139 = vshrl.u32 %v138, 7
  %v140 = vsub.s32 3, %v139
  %v141 = vrot.slane %v124, %v140
  %v146 = vmul.f32 %v122, %v129
  %v147 = vmul.f32 %v121, %v133
  %v148 = vmul.f32 %v120, %v137
  %v149 = vmul.f32 %v119, %v141
  %s150 = scalar_lea.vmem %s4, 2
  %v151 = vld [vmem:[%s150] sm:$0x3]
  %v152 = vpack.c.bf16 %v146, %v146
  %v153 = vpack.c.bf16 %v147, %v147
  %v154 = vpack.c.bf16 %v148, %v148
  %v155 = vpack.c.bf16 %v149, %v149
  %vm156 = vcmask 31744
  %v158 = vsel %vm156, %v151, 0
  %vm160 = vcmask 1041408
  %v162 = vsel %vm160, %v152, 0
  %v165 = vsel %vm160, %v153, 0
  %v168 = vsel %vm160, %v154, 0
  %v171 = vsel %vm160, %v155, 0
  %173 = vmatprep.subr.bf16.mxu0 0
  %174 = vmatpush1.bf16.msra.mxu0 0
  %175 = vmatprep.subr.bf16.mxu0 0
  %176 = vmatpush1.bf16.msra.mxu0 0
  %177 = vmatprep.subr.bf16.mxu0 0
  %178 = vmatpush1.bf16.msra.mxu0 0
  %179 = vmatprep.subr.bf16.mxu0 0
  %180 = vmatpush1.bf16.msra.mxu0 0
  %181 = vmatprep.subr.bf16.mxu0 0
  %182 = vmatpush1.bf16.msra.mxu0 0
  %183 = vmatprep.subr.bf16.mxu0 0
  %184 = vmatpush1.bf16.msra.mxu0 0
  %185 = vmatprep.subr.bf16.mxu0 0
  %186 = vmatpush1.bf16.msra.mxu0 0
  %187 = vmatprep.subr.bf16.mxu0 %v165
  %188 = vmatpush1.bf16.msra.mxu0 %v162
  %189 = vmatprep.subr.bf16.mxu0 0
  %190 = vmatpush2.bf16.msra.mxu0 0
  %191 = vmatprep.subr.bf16.mxu0 0
  %192 = vmatpush2.bf16.msra.mxu0 0
  %193 = vmatprep.subr.bf16.mxu0 0
  %194 = vmatpush2.bf16.msra.mxu0 0
  %195 = vmatprep.subr.bf16.mxu0 0
  %196 = vmatpush2.bf16.msra.mxu0 0
  %197 = vmatprep.subr.bf16.mxu0 0
  %198 = vmatpush2.bf16.msra.mxu0 0
  %199 = vmatprep.subr.bf16.mxu0 0
  %200 = vmatpush2.bf16.msra.mxu0 0
  %201 = vmatprep.subr.bf16.mxu0 0
  %202 = vmatpush2.bf16.msra.mxu0 0
  %203 = vmatprep.subr.bf16.mxu0 0
  %204 = vmatpush2.bf16.msra.mxu0 0
  %205 = vmatprep.mubr.bf16.mxu0 0
  %206 = vmatmul.mubr.bf16.gmra.mxu0 %v158
  %v207 = vpop.f32.mrf.mxu0
  %v208 = vadd.f32 0.0, %v207
  %v209 = vpop.f32.mrf.mxu0
  %v210 = vadd.f32 0.0, %v209
  %v211 = vpop.f32.mrf.mxu0
  %v212 = vpop.f32.mrf.mxu0
  %213 = vdwg.mxu0
  %214 = vmatprep.subr.bf16.mxu0 0
  %215 = vmatpush1.bf16.msra.mxu0 0
  %216 = vmatprep.subr.bf16.mxu0 0
  %217 = vmatpush1.bf16.msra.mxu0 0
  %218 = vmatprep.subr.bf16.mxu0 0
  %219 = vmatpush1.bf16.msra.mxu0 0
  %220 = vmatprep.subr.bf16.mxu0 0
  %221 = vmatpush1.bf16.msra.mxu0 0
  %222 = vmatprep.subr.bf16.mxu0 0
  %223 = vmatpush1.bf16.msra.mxu0 0
  %224 = vmatprep.subr.bf16.mxu0 0
  %225 = vmatpush1.bf16.msra.mxu0 0
  %226 = vmatprep.subr.bf16.mxu0 0
  %227 = vmatpush1.bf16.msra.mxu0 0
  %228 = vmatprep.subr.bf16.mxu0 %v171
  %229 = vmatpush1.bf16.msra.mxu0 %v168
  %230 = vmatprep.subr.bf16.mxu0 0
  %231 = vmatpush2.bf16.msra.mxu0 0
  %232 = vmatprep.subr.bf16.mxu0 0
  %233 = vmatpush2.bf16.msra.mxu0 0
  %234 = vmatprep.subr.bf16.mxu0 0
  %235 = vmatpush2.bf16.msra.mxu0 0
  %236 = vmatprep.subr.bf16.mxu0 0
  %237 = vmatpush2.bf16.msra.mxu0 0
  %238 = vmatprep.subr.bf16.mxu0 0
  %239 = vmatpush2.bf16.msra.mxu0 0
  %240 = vmatprep.subr.bf16.mxu0 0
  %241 = vmatpush2.bf16.msra.mxu0 0
  %242 = vmatprep.subr.bf16.mxu0 0
  %243 = vmatpush2.bf16.msra.mxu0 0
  %244 = vmatprep.subr.bf16.mxu0 0
  %245 = vmatpush2.bf16.msra.mxu0 0
  %246 = vmatprep.mubr.bf16.mxu0 0
  %247 = vmatmul.mubr.bf16.gmra.mxu0 %v158
  %v248 = vpop.f32.mrf.mxu0
  %v249 = vadd.f32 0.0, %v248
  %v250 = vpop.f32.mrf.mxu0
  %v251 = vadd.f32 0.0, %v250
  %v252 = vpop.f32.mrf.mxu0
  %v253 = vpop.f32.mrf.mxu0
  %254 = vdwg.mxu0
  %v256 = vsel %vm156, %v105, 0
  %v259 = vsel %vm160, %v106, 0
  %v262 = vsel %vm160, %v107, 0
  %v265 = vsel %vm160, %v108, 0
  %v268 = vsel %vm160, %v109, 0
  %270 = vmatprep.subr.bf16.mxu0 0
  %271 = vmatpush1.bf16.msra.mxu0 0
  %272 = vmatprep.subr.bf16.mxu0 0
  %273 = vmatpush1.bf16.msra.mxu0 0
  %274 = vmatprep.subr.bf16.mxu0 0
  %275 = vmatpush1.bf16.msra.mxu0 0
  %276 = vmatprep.subr.bf16.mxu0 0
  %277 = vmatpush1.bf16.msra.mxu0 0
  %278 = vmatprep.subr.bf16.mxu0 0
  %279 = vmatpush1.bf16.msra.mxu0 0
  %280 = vmatprep.subr.bf16.mxu0 0
  %281 = vmatpush1.bf16.msra.mxu0 0
  %282 = vmatprep.subr.bf16.mxu0 0
  %283 = vmatpush1.bf16.msra.mxu0 0
  %284 = vmatprep.subr.bf16.mxu0 %v262
  %285 = vmatpush1.bf16.msra.mxu0 %v259
  %286 = vmatprep.subr.bf16.mxu0 0
  %287 = vmatpush2.bf16.msra.mxu0 0
  %288 = vmatprep.subr.bf16.mxu0 0
  %289 = vmatpush2.bf16.msra.mxu0 0
  %290 = vmatprep.subr.bf16.mxu0 0
  %291 = vmatpush2.bf16.msra.mxu0 0
  %292 = vmatprep.subr.bf16.mxu0 0
  %293 = vmatpush2.bf16.msra.mxu0 0
  %294 = vmatprep.subr.bf16.mxu0 0
  %295 = vmatpush2.bf16.msra.mxu0 0
  %296 = vmatprep.subr.bf16.mxu0 0
  %297 = vmatpush2.bf16.msra.mxu0 0
  %298 = vmatprep.subr.bf16.mxu0 0
  %299 = vmatpush2.bf16.msra.mxu0 0
  %300 = vmatprep.subr.bf16.mxu0 0
  %301 = vmatpush2.bf16.msra.mxu0 0
  %302 = vmatprep.mubr.bf16.mxu0 0
  %303 = vmatmul.mubr.bf16.gmra.mxu0 %v256
  %v304 = vpop.f32.mrf.mxu0
  %v305 = vadd.f32 %v208, %v304
  %v306 = vpop.f32.mrf.mxu0
  %v307 = vadd.f32 %v210, %v306
  %v308 = vpop.f32.mrf.mxu0
  %v309 = vpop.f32.mrf.mxu0
  %310 = vdwg.mxu0
  %311 = vmatprep.subr.bf16.mxu0 0
  %312 = vmatpush1.bf16.msra.mxu0 0
  %313 = vmatprep.subr.bf16.mxu0 0
  %314 = vmatpush1.bf16.msra.mxu0 0
  %315 = vmatprep.subr.bf16.mxu0 0
  %316 = vmatpush1.bf16.msra.mxu0 0
  %317 = vmatprep.subr.bf16.mxu0 0
  %318 = vmatpush1.bf16.msra.mxu0 0
  %319 = vmatprep.subr.bf16.mxu0 0
  %320 = vmatpush1.bf16.msra.mxu0 0
  %321 = vmatprep.subr.bf16.mxu0 0
  %322 = vmatpush1.bf16.msra.mxu0 0
  %323 = vmatprep.subr.bf16.mxu0 0
  %324 = vmatpush1.bf16.msra.mxu0 0
  %325 = vmatprep.subr.bf16.mxu0 %v268
  %326 = vmatpush1.bf16.msra.mxu0 %v265
  %327 = vmatprep.subr.bf16.mxu0 0
  %328 = vmatpush2.bf16.msra.mxu0 0
  %329 = vmatprep.subr.bf16.mxu0 0
  %330 = vmatpush2.bf16.msra.mxu0 0
  %331 = vmatprep.subr.bf16.mxu0 0
  %332 = vmatpush2.bf16.msra.mxu0 0
  %333 = vmatprep.subr.bf16.mxu0 0
  %334 = vmatpush2.bf16.msra.mxu0 0
  %335 = vmatprep.subr.bf16.mxu0 0
  %336 = vmatpush2.bf16.msra.mxu0 0
  %337 = vmatprep.subr.bf16.mxu0 0
  %338 = vmatpush2.bf16.msra.mxu0 0
  %339 = vmatprep.subr.bf16.mxu0 0
  %340 = vmatpush2.bf16.msra.mxu0 0
  %341 = vmatprep.subr.bf16.mxu0 0
  %342 = vmatpush2.bf16.msra.mxu0 0
  %343 = vmatprep.mubr.bf16.mxu0 0
  %344 = vmatmul.mubr.bf16.gmra.mxu0 %v256
  %v345 = vpop.f32.mrf.mxu0
  %v346 = vadd.f32 %v249, %v345
  %v347 = vpop.f32.mrf.mxu0
  %v348 = vadd.f32 %v251, %v347
  %v349 = vpop.f32.mrf.mxu0
  %v350 = vpop.f32.mrf.mxu0
  %351 = vdwg.mxu0
  %352 = vrot.lane.b32.xlu0 %v60, 15
  %v353 = vpop.permute.xlu0 %352
  %354 = vrot.lane.b32.xlu0 %v61, 15
  %v355 = vpop.permute.xlu0 %354
  %356 = vrot.lane.b32.xlu0 %v62, 15
  %v357 = vpop.permute.xlu0 %356
  %358 = vrot.lane.b32.xlu0 %v63, 15
  %v359 = vpop.permute.xlu0 %358
  %vm360 = vcmp.lt.s32.totalorder %v73, 15
  %v361 = vsel %vm360, %v357, %v359
  %v362 = vsel %vm360, %v355, %v357
  %v363 = vsel %vm360, %v353, %v355
  %v364 = vsel %vm360, %v359, %v353
  %s365 = scalar_lea.vmem %s0, 2
  %v366 = vld [vmem:[%s365] ss:$8 sm:$0xf]
  %v368 = vlaneseq
  %v369 = vshrl.u32 %v368, 7
  %v370 = vsub.s32 0, %v369
  %v371 = vrot.slane %v366, %v370
  %v372 = vlaneseq
  %v373 = vshrl.u32 %v372, 7
  %v374 = vsub.s32 1, %v373
  %v375 = vrot.slane %v366, %v374
  %v376 = vlaneseq
  %v377 = vshrl.u32 %v376, 7
  %v378 = vsub.s32 2, %v377
  %v379 = vrot.slane %v366, %v378
  %v380 = vlaneseq
  %v381 = vshrl.u32 %v380, 7
  %v382 = vsub.s32 3, %v381
  %v383 = vrot.slane %v366, %v382
  %v388 = vmul.f32 %v364, %v371
  %v389 = vmul.f32 %v363, %v375
  %v390 = vmul.f32 %v362, %v379
  %v391 = vmul.f32 %v361, %v383
  %s392 = scalar_lea.vmem %s4, 4
  %v393 = vld [vmem:[%s392] sm:$0x3]
  %v394 = vpack.c.bf16 %v388, %v388
  %v395 = vpack.c.bf16 %v389, %v389
  %v396 = vpack.c.bf16 %v390, %v390
  %v397 = vpack.c.bf16 %v391, %v391
  %v399 = vsel %vm156, %v393, 0
  %v402 = vsel %vm160, %v394, 0
  %v405 = vsel %vm160, %v395, 0
  %v408 = vsel %vm160, %v396, 0
  %v411 = vsel %vm160, %v397, 0
  %413 = vmatprep.subr.bf16.mxu0 0
  %414 = vmatpush1.bf16.msra.mxu0 0
  %415 = vmatprep.subr.bf16.mxu0 0
  %416 = vmatpush1.bf16.msra.mxu0 0
  %417 = vmatprep.subr.bf16.mxu0 0
  %418 = vmatpush1.bf16.msra.mxu0 0
  %419 = vmatprep.subr.bf16.mxu0 0
  %420 = vmatpush1.bf16.msra.mxu0 0
  %421 = vmatprep.subr.bf16.mxu0 0
  %422 = vmatpush1.bf16.msra.mxu0 0
  %423 = vmatprep.subr.bf16.mxu0 0
  %424 = vmatpush1.bf16.msra.mxu0 0
  %425 = vmatprep.subr.bf16.mxu0 0
  %426 = vmatpush1.bf16.msra.mxu0 0
  %427 = vmatprep.subr.bf16.mxu0 %v405
  %428 = vmatpush1.bf16.msra.mxu0 %v402
  %429 = vmatprep.subr.bf16.mxu0 0
  %430 = vmatpush2.bf16.msra.mxu0 0
  %431 = vmatprep.subr.bf16.mxu0 0
  %432 = vmatpush2.bf16.msra.mxu0 0
  %433 = vmatprep.subr.bf16.mxu0 0
  %434 = vmatpush2.bf16.msra.mxu0 0
  %435 = vmatprep.subr.bf16.mxu0 0
  %436 = vmatpush2.bf16.msra.mxu0 0
  %437 = vmatprep.subr.bf16.mxu0 0
  %438 = vmatpush2.bf16.msra.mxu0 0
  %439 = vmatprep.subr.bf16.mxu0 0
  %440 = vmatpush2.bf16.msra.mxu0 0
  %441 = vmatprep.subr.bf16.mxu0 0
  %442 = vmatpush2.bf16.msra.mxu0 0
  %443 = vmatprep.subr.bf16.mxu0 0
  %444 = vmatpush2.bf16.msra.mxu0 0
  %445 = vmatprep.mubr.bf16.mxu0 0
  %446 = vmatmul.mubr.bf16.gmra.mxu0 %v399
  %v447 = vpop.f32.mrf.mxu0
  %v448 = vadd.f32 0.0, %v447
  %v449 = vpop.f32.mrf.mxu0
  %v450 = vadd.f32 0.0, %v449
  %v451 = vpop.f32.mrf.mxu0
  %v452 = vpop.f32.mrf.mxu0
  %453 = vdwg.mxu0
  %454 = vmatprep.subr.bf16.mxu0 0
  %455 = vmatpush1.bf16.msra.mxu0 0
  %456 = vmatprep.subr.bf16.mxu0 0
  %457 = vmatpush1.bf16.msra.mxu0 0
  %458 = vmatprep.subr.bf16.mxu0 0
  %459 = vmatpush1.bf16.msra.mxu0 0
  %460 = vmatprep.subr.bf16.mxu0 0
  %461 = vmatpush1.bf16.msra.mxu0 0
  %462 = vmatprep.subr.bf16.mxu0 0
  %463 = vmatpush1.bf16.msra.mxu0 0
  %464 = vmatprep.subr.bf16.mxu0 0
  %465 = vmatpush1.bf16.msra.mxu0 0
  %466 = vmatprep.subr.bf16.mxu0 0
  %467 = vmatpush1.bf16.msra.mxu0 0
  %468 = vmatprep.subr.bf16.mxu0 %v411
  %469 = vmatpush1.bf16.msra.mxu0 %v408
  %470 = vmatprep.subr.bf16.mxu0 0
  %471 = vmatpush2.bf16.msra.mxu0 0
  %472 = vmatprep.subr.bf16.mxu0 0
  %473 = vmatpush2.bf16.msra.mxu0 0
  %474 = vmatprep.subr.bf16.mxu0 0
  %475 = vmatpush2.bf16.msra.mxu0 0
  %476 = vmatprep.subr.bf16.mxu0 0
  %477 = vmatpush2.bf16.msra.mxu0 0
  %478 = vmatprep.subr.bf16.mxu0 0
  %479 = vmatpush2.bf16.msra.mxu0 0
  %480 = vmatprep.subr.bf16.mxu0 0
  %481 = vmatpush2.bf16.msra.mxu0 0
  %482 = vmatprep.subr.bf16.mxu0 0
  %483 = vmatpush2.bf16.msra.mxu0 0
  %484 = vmatprep.subr.bf16.mxu0 0
  %485 = vmatpush2.bf16.msra.mxu0 0
  %486 = vmatprep.mubr.bf16.mxu0 0
  %487 = vmatmul.mubr.bf16.gmra.mxu0 %v399
  %v488 = vpop.f32.mrf.mxu0
  %v489 = vadd.f32 0.0, %v488
  %v490 = vpop.f32.mrf.mxu0
  %v491 = vadd.f32 0.0, %v490
  %v492 = vpop.f32.mrf.mxu0
  %v493 = vpop.f32.mrf.mxu0
  %494 = vdwg.mxu0
  %v495 = vadd.f32 %v305, %v448
  %v496 = vadd.f32 %v307, %v450
  %v497 = vadd.f32 %v346, %v489
  %v498 = vadd.f32 %v348, %v491
  %499 = vrot.lane.b32.xlu0 %v60, 1
  %v500 = vpop.permute.xlu0 %499
  %501 = vrot.lane.b32.xlu0 %v61, 1
  %v502 = vpop.permute.xlu0 %501
  %503 = vrot.lane.b32.xlu0 %v62, 1
  %v504 = vpop.permute.xlu0 %503
  %505 = vrot.lane.b32.xlu0 %v63, 1
  %v506 = vpop.permute.xlu0 %505
  %vm507 = vcmp.lt.s32.totalorder %v73, 1
  %v508 = vsel %vm507, %v504, %v506
  %v509 = vsel %vm507, %v502, %v504
  %v510 = vsel %vm507, %v500, %v502
  %v511 = vsel %vm507, %v506, %v500
  %s512 = scalar_lea.vmem %s0, 3
  %v513 = vld [vmem:[%s512] ss:$8 sm:$0xf]
  %v515 = vlaneseq
  %v516 = vshrl.u32 %v515, 7
  %v517 = vsub.s32 0, %v516
  %v518 = vrot.slane %v513, %v517
  %v519 = vlaneseq
  %v520 = vshrl.u32 %v519, 7
  %v521 = vsub.s32 1, %v520
  %v522 = vrot.slane %v513, %v521
  %v523 = vlaneseq
  %v524 = vshrl.u32 %v523, 7
  %v525 = vsub.s32 2, %v524
  %v526 = vrot.slane %v513, %v525
  %v527 = vlaneseq
  %v528 = vshrl.u32 %v527, 7
  %v529 = vsub.s32 3, %v528
  %v530 = vrot.slane %v513, %v529
  %v535 = vmul.f32 %v511, %v518
  %v536 = vmul.f32 %v510, %v522
  %v537 = vmul.f32 %v509, %v526
  %v538 = vmul.f32 %v508, %v530
  %s539 = scalar_lea.vmem %s4, 6
  %v540 = vld [vmem:[%s539] sm:$0x3]
  %v541 = vpack.c.bf16 %v535, %v535
  %v542 = vpack.c.bf16 %v536, %v536
  %v543 = vpack.c.bf16 %v537, %v537
  %v544 = vpack.c.bf16 %v538, %v538
  %v546 = vsel %vm156, %v540, 0
  %v549 = vsel %vm160, %v541, 0
  %v552 = vsel %vm160, %v542, 0
  %v555 = vsel %vm160, %v543, 0
  %v558 = vsel %vm160, %v544, 0
  %560 = vmatprep.subr.bf16.mxu0 0
  %561 = vmatpush1.bf16.msra.mxu0 0
  %562 = vmatprep.subr.bf16.mxu0 0
  %563 = vmatpush1.bf16.msra.mxu0 0
  %564 = vmatprep.subr.bf16.mxu0 0
  %565 = vmatpush1.bf16.msra.mxu0 0
  %566 = vmatprep.subr.bf16.mxu0 0
  %567 = vmatpush1.bf16.msra.mxu0 0
  %568 = vmatprep.subr.bf16.mxu0 0
  %569 = vmatpush1.bf16.msra.mxu0 0
  %570 = vmatprep.subr.bf16.mxu0 0
  %571 = vmatpush1.bf16.msra.mxu0 0
  %572 = vmatprep.subr.bf16.mxu0 0
  %573 = vmatpush1.bf16.msra.mxu0 0
  %574 = vmatprep.subr.bf16.mxu0 %v552
  %575 = vmatpush1.bf16.msra.mxu0 %v549
  %576 = vmatprep.subr.bf16.mxu0 0
  %577 = vmatpush2.bf16.msra.mxu0 0
  %578 = vmatprep.subr.bf16.mxu0 0
  %579 = vmatpush2.bf16.msra.mxu0 0
  %580 = vmatprep.subr.bf16.mxu0 0
  %581 = vmatpush2.bf16.msra.mxu0 0
  %582 = vmatprep.subr.bf16.mxu0 0
  %583 = vmatpush2.bf16.msra.mxu0 0
  %584 = vmatprep.subr.bf16.mxu0 0
  %585 = vmatpush2.bf16.msra.mxu0 0
  %586 = vmatprep.subr.bf16.mxu0 0
  %587 = vmatpush2.bf16.msra.mxu0 0
  %588 = vmatprep.subr.bf16.mxu0 0
  %589 = vmatpush2.bf16.msra.mxu0 0
  %590 = vmatprep.subr.bf16.mxu0 0
  %591 = vmatpush2.bf16.msra.mxu0 0
  %592 = vmatprep.mubr.bf16.mxu0 0
  %593 = vmatmul.mubr.bf16.gmra.mxu0 %v546
  %v594 = vpop.f32.mrf.mxu0
  %v595 = vadd.f32 0.0, %v594
  %v596 = vpop.f32.mrf.mxu0
  %v597 = vadd.f32 0.0, %v596
  %v598 = vpop.f32.mrf.mxu0
  %v599 = vpop.f32.mrf.mxu0
  %600 = vdwg.mxu0
  %601 = vmatprep.subr.bf16.mxu0 0
  %602 = vmatpush1.bf16.msra.mxu0 0
  %603 = vmatprep.subr.bf16.mxu0 0
  %604 = vmatpush1.bf16.msra.mxu0 0
  %605 = vmatprep.subr.bf16.mxu0 0
  %606 = vmatpush1.bf16.msra.mxu0 0
  %607 = vmatprep.subr.bf16.mxu0 0
  %608 = vmatpush1.bf16.msra.mxu0 0
  %609 = vmatprep.subr.bf16.mxu0 0
  %610 = vmatpush1.bf16.msra.mxu0 0
  %611 = vmatprep.subr.bf16.mxu0 0
  %612 = vmatpush1.bf16.msra.mxu0 0
  %613 = vmatprep.subr.bf16.mxu0 0
  %614 = vmatpush1.bf16.msra.mxu0 0
  %615 = vmatprep.subr.bf16.mxu0 %v558
  %616 = vmatpush1.bf16.msra.mxu0 %v555
  %617 = vmatprep.subr.bf16.mxu0 0
  %618 = vmatpush2.bf16.msra.mxu0 0
  %619 = vmatprep.subr.bf16.mxu0 0
  %620 = vmatpush2.bf16.msra.mxu0 0
  %621 = vmatprep.subr.bf16.mxu0 0
  %622 = vmatpush2.bf16.msra.mxu0 0
  %623 = vmatprep.subr.bf16.mxu0 0
  %624 = vmatpush2.bf16.msra.mxu0 0
  %625 = vmatprep.subr.bf16.mxu0 0
  %626 = vmatpush2.bf16.msra.mxu0 0
  %627 = vmatprep.subr.bf16.mxu0 0
  %628 = vmatpush2.bf16.msra.mxu0 0
  %629 = vmatprep.subr.bf16.mxu0 0
  %630 = vmatpush2.bf16.msra.mxu0 0
  %631 = vmatprep.subr.bf16.mxu0 0
  %632 = vmatpush2.bf16.msra.mxu0 0
  %633 = vmatprep.mubr.bf16.mxu0 0
  %634 = vmatmul.mubr.bf16.gmra.mxu0 %v546
  %v635 = vpop.f32.mrf.mxu0
  %v636 = vadd.f32 0.0, %v635
  %v637 = vpop.f32.mrf.mxu0
  %v638 = vadd.f32 0.0, %v637
  %v639 = vpop.f32.mrf.mxu0
  %v640 = vpop.f32.mrf.mxu0
  %641 = vdwg.mxu0
  %v642 = vadd.f32 %v495, %v595
  %v643 = vadd.f32 %v496, %v597
  %v644 = vadd.f32 %v497, %v636
  %v645 = vadd.f32 %v498, %v638
  %s646 = scalar_lea.vmem %s4, 8
  %v647 = vld [vmem:[%s646] sm:$0x3]
  %v648 = vpack.c.bf16 %v60, %v60
  %v649 = vpack.c.bf16 %v61, %v61
  %v650 = vpack.c.bf16 %v62, %v62
  %v651 = vpack.c.bf16 %v63, %v63
  %v653 = vsel %vm156, %v647, 0
  %v656 = vsel %vm160, %v648, 0
  %v659 = vsel %vm160, %v649, 0
  %v662 = vsel %vm160, %v650, 0
  %v665 = vsel %vm160, %v651, 0
  %667 = vmatprep.subr.bf16.mxu0 0
  %668 = vmatpush1.bf16.msra.mxu0 0
  %669 = vmatprep.subr.bf16.mxu0 0
  %670 = vmatpush1.bf16.msra.mxu0 0
  %671 = vmatprep.subr.bf16.mxu0 0
  %672 = vmatpush1.bf16.msra.mxu0 0
  %673 = vmatprep.subr.bf16.mxu0 0
  %674 = vmatpush1.bf16.msra.mxu0 0
  %675 = vmatprep.subr.bf16.mxu0 0
  %676 = vmatpush1.bf16.msra.mxu0 0
  %677 = vmatprep.subr.bf16.mxu0 0
  %678 = vmatpush1.bf16.msra.mxu0 0
  %679 = vmatprep.subr.bf16.mxu0 0
  %680 = vmatpush1.bf16.msra.mxu0 0
  %681 = vmatprep.subr.bf16.mxu0 %v659
  %682 = vmatpush1.bf16.msra.mxu0 %v656
  %683 = vmatprep.subr.bf16.mxu0 0
  %684 = vmatpush2.bf16.msra.mxu0 0
  %685 = vmatprep.subr.bf16.mxu0 0
  %686 = vmatpush2.bf16.msra.mxu0 0
  %687 = vmatprep.subr.bf16.mxu0 0
  %688 = vmatpush2.bf16.msra.mxu0 0
  %689 = vmatprep.subr.bf16.mxu0 0
  %690 = vmatpush2.bf16.msra.mxu0 0
  %691 = vmatprep.subr.bf16.mxu0 0
  %692 = vmatpush2.bf16.msra.mxu0 0
  %693 = vmatprep.subr.bf16.mxu0 0
  %694 = vmatpush2.bf16.msra.mxu0 0
  %695 = vmatprep.subr.bf16.mxu0 0
  %696 = vmatpush2.bf16.msra.mxu0 0
  %697 = vmatprep.subr.bf16.mxu0 0
  %698 = vmatpush2.bf16.msra.mxu0 0
  %699 = vmatprep.mubr.bf16.mxu0 0
  %700 = vmatmul.mubr.bf16.gmra.mxu0 %v653
  %v701 = vpop.f32.mrf.mxu0
  %v702 = vadd.f32 0.0, %v701
  %v703 = vpop.f32.mrf.mxu0
  %v704 = vadd.f32 0.0, %v703
  %v705 = vpop.f32.mrf.mxu0
  %v706 = vpop.f32.mrf.mxu0
  %707 = vdwg.mxu0
  %708 = vmatprep.subr.bf16.mxu0 0
  %709 = vmatpush1.bf16.msra.mxu0 0
  %710 = vmatprep.subr.bf16.mxu0 0
  %711 = vmatpush1.bf16.msra.mxu0 0
  %712 = vmatprep.subr.bf16.mxu0 0
  %713 = vmatpush1.bf16.msra.mxu0 0
  %714 = vmatprep.subr.bf16.mxu0 0
  %715 = vmatpush1.bf16.msra.mxu0 0
  %716 = vmatprep.subr.bf16.mxu0 0
  %717 = vmatpush1.bf16.msra.mxu0 0
  %718 = vmatprep.subr.bf16.mxu0 0
  %719 = vmatpush1.bf16.msra.mxu0 0
  %720 = vmatprep.subr.bf16.mxu0 0
  %721 = vmatpush1.bf16.msra.mxu0 0
  %722 = vmatprep.subr.bf16.mxu0 %v665
  %723 = vmatpush1.bf16.msra.mxu0 %v662
  %724 = vmatprep.subr.bf16.mxu0 0
  %725 = vmatpush2.bf16.msra.mxu0 0
  %726 = vmatprep.subr.bf16.mxu0 0
  %727 = vmatpush2.bf16.msra.mxu0 0
  %728 = vmatprep.subr.bf16.mxu0 0
  %729 = vmatpush2.bf16.msra.mxu0 0
  %730 = vmatprep.subr.bf16.mxu0 0
  %731 = vmatpush2.bf16.msra.mxu0 0
  %732 = vmatprep.subr.bf16.mxu0 0
  %733 = vmatpush2.bf16.msra.mxu0 0
  %734 = vmatprep.subr.bf16.mxu0 0
  %735 = vmatpush2.bf16.msra.mxu0 0
  %736 = vmatprep.subr.bf16.mxu0 0
  %737 = vmatpush2.bf16.msra.mxu0 0
  %738 = vmatprep.subr.bf16.mxu0 0
  %739 = vmatpush2.bf16.msra.mxu0 0
  %740 = vmatprep.mubr.bf16.mxu0 0
  %741 = vmatmul.mubr.bf16.gmra.mxu0 %v653
  %v742 = vpop.f32.mrf.mxu0
  %v743 = vadd.f32 0.0, %v742
  %v744 = vpop.f32.mrf.mxu0
  %v745 = vadd.f32 0.0, %v744
  %v746 = vpop.f32.mrf.mxu0
  %v747 = vpop.f32.mrf.mxu0
  %748 = vdwg.mxu0
  %v749 = vadd.f32 %v642, %v702
  %v750 = vadd.f32 %v643, %v704
  %v751 = vadd.f32 %v644, %v743
  %v752 = vadd.f32 %v645, %v745
  %753 = vrot.lane.b32.xlu0 %v60, 127
  %v754 = vpop.permute.xlu0 %753
  %755 = vrot.lane.b32.xlu0 %v61, 127
  %v756 = vpop.permute.xlu0 %755
  %757 = vrot.lane.b32.xlu0 %v62, 127
  %v758 = vpop.permute.xlu0 %757
  %759 = vrot.lane.b32.xlu0 %v63, 127
  %v760 = vpop.permute.xlu0 %759
  %vm761 = vcmp.lt.s32.totalorder %v73, 127
  %v762 = vsel %vm761, %v758, %v760
  %v763 = vsel %vm761, %v756, %v758
  %v764 = vsel %vm761, %v754, %v756
  %v765 = vsel %vm761, %v760, %v754
  %s766 = scalar_lea.vmem %s0, 5
  %v767 = vld [vmem:[%s766] ss:$8 sm:$0xf]
  %v769 = vlaneseq
  %v770 = vshrl.u32 %v769, 7
  %v771 = vsub.s32 0, %v770
  %v772 = vrot.slane %v767, %v771
  %v773 = vlaneseq
  %v774 = vshrl.u32 %v773, 7
  %v775 = vsub.s32 1, %v774
  %v776 = vrot.slane %v767, %v775
  %v777 = vlaneseq
  %v778 = vshrl.u32 %v777, 7
  %v779 = vsub.s32 2, %v778
  %v780 = vrot.slane %v767, %v779
  %v781 = vlaneseq
  %v782 = vshrl.u32 %v781, 7
  %v783 = vsub.s32 3, %v782
  %v784 = vrot.slane %v767, %v783
  %v789 = vmul.f32 %v764, %v772
  %v790 = vmul.f32 %v763, %v776
  %v791 = vmul.f32 %v762, %v780
  %v792 = vmul.f32 %v765, %v784
  %s793 = scalar_lea.vmem %s4, 10
  %v794 = vld [vmem:[%s793] sm:$0x3]
  %v795 = vpack.c.bf16 %v789, %v789
  %v796 = vpack.c.bf16 %v790, %v790
  %v797 = vpack.c.bf16 %v791, %v791
  %v798 = vpack.c.bf16 %v792, %v792
  %v800 = vsel %vm156, %v794, 0
  %v803 = vsel %vm160, %v795, 0
  %v806 = vsel %vm160, %v796, 0
  %v809 = vsel %vm160, %v797, 0
  %v812 = vsel %vm160, %v798, 0
  %814 = vmatprep.subr.bf16.mxu0 0
  %815 = vmatpush1.bf16.msra.mxu0 0
  %816 = vmatprep.subr.bf16.mxu0 0
  %817 = vmatpush1.bf16.msra.mxu0 0
  %818 = vmatprep.subr.bf16.mxu0 0
  %819 = vmatpush1.bf16.msra.mxu0 0
  %820 = vmatprep.subr.bf16.mxu0 0
  %821 = vmatpush1.bf16.msra.mxu0 0
  %822 = vmatprep.subr.bf16.mxu0 0
  %823 = vmatpush1.bf16.msra.mxu0 0
  %824 = vmatprep.subr.bf16.mxu0 0
  %825 = vmatpush1.bf16.msra.mxu0 0
  %826 = vmatprep.subr.bf16.mxu0 0
  %827 = vmatpush1.bf16.msra.mxu0 0
  %828 = vmatprep.subr.bf16.mxu0 %v806
  %829 = vmatpush1.bf16.msra.mxu0 %v803
  %830 = vmatprep.subr.bf16.mxu0 0
  %831 = vmatpush2.bf16.msra.mxu0 0
  %832 = vmatprep.subr.bf16.mxu0 0
  %833 = vmatpush2.bf16.msra.mxu0 0
  %834 = vmatprep.subr.bf16.mxu0 0
  %835 = vmatpush2.bf16.msra.mxu0 0
  %836 = vmatprep.subr.bf16.mxu0 0
  %837 = vmatpush2.bf16.msra.mxu0 0
  %838 = vmatprep.subr.bf16.mxu0 0
  %839 = vmatpush2.bf16.msra.mxu0 0
  %840 = vmatprep.subr.bf16.mxu0 0
  %841 = vmatpush2.bf16.msra.mxu0 0
  %842 = vmatprep.subr.bf16.mxu0 0
  %843 = vmatpush2.bf16.msra.mxu0 0
  %844 = vmatprep.subr.bf16.mxu0 0
  %845 = vmatpush2.bf16.msra.mxu0 0
  %846 = vmatprep.mubr.bf16.mxu0 0
  %847 = vmatmul.mubr.bf16.gmra.mxu0 %v800
  %v848 = vpop.f32.mrf.mxu0
  %v849 = vadd.f32 0.0, %v848
  %v850 = vpop.f32.mrf.mxu0
  %v851 = vadd.f32 0.0, %v850
  %v852 = vpop.f32.mrf.mxu0
  %v853 = vpop.f32.mrf.mxu0
  %854 = vdwg.mxu0
  %855 = vmatprep.subr.bf16.mxu0 0
  %856 = vmatpush1.bf16.msra.mxu0 0
  %857 = vmatprep.subr.bf16.mxu0 0
  %858 = vmatpush1.bf16.msra.mxu0 0
  %859 = vmatprep.subr.bf16.mxu0 0
  %860 = vmatpush1.bf16.msra.mxu0 0
  %861 = vmatprep.subr.bf16.mxu0 0
  %862 = vmatpush1.bf16.msra.mxu0 0
  %863 = vmatprep.subr.bf16.mxu0 0
  %864 = vmatpush1.bf16.msra.mxu0 0
  %865 = vmatprep.subr.bf16.mxu0 0
  %866 = vmatpush1.bf16.msra.mxu0 0
  %867 = vmatprep.subr.bf16.mxu0 0
  %868 = vmatpush1.bf16.msra.mxu0 0
  %869 = vmatprep.subr.bf16.mxu0 %v812
  %870 = vmatpush1.bf16.msra.mxu0 %v809
  %871 = vmatprep.subr.bf16.mxu0 0
  %872 = vmatpush2.bf16.msra.mxu0 0
  %873 = vmatprep.subr.bf16.mxu0 0
  %874 = vmatpush2.bf16.msra.mxu0 0
  %875 = vmatprep.subr.bf16.mxu0 0
  %876 = vmatpush2.bf16.msra.mxu0 0
  %877 = vmatprep.subr.bf16.mxu0 0
  %878 = vmatpush2.bf16.msra.mxu0 0
  %879 = vmatprep.subr.bf16.mxu0 0
  %880 = vmatpush2.bf16.msra.mxu0 0
  %881 = vmatprep.subr.bf16.mxu0 0
  %882 = vmatpush2.bf16.msra.mxu0 0
  %883 = vmatprep.subr.bf16.mxu0 0
  %884 = vmatpush2.bf16.msra.mxu0 0
  %885 = vmatprep.subr.bf16.mxu0 0
  %886 = vmatpush2.bf16.msra.mxu0 0
  %887 = vmatprep.mubr.bf16.mxu0 0
  %888 = vmatmul.mubr.bf16.gmra.mxu0 %v800
  %v889 = vpop.f32.mrf.mxu0
  %v890 = vadd.f32 0.0, %v889
  %v891 = vpop.f32.mrf.mxu0
  %v892 = vadd.f32 0.0, %v891
  %v893 = vpop.f32.mrf.mxu0
  %v894 = vpop.f32.mrf.mxu0
  %895 = vdwg.mxu0
  %v896 = vadd.f32 %v749, %v849
  %v897 = vadd.f32 %v750, %v851
  %v898 = vadd.f32 %v751, %v890
  %v899 = vadd.f32 %v752, %v892
  %900 = vrot.lane.b32.xlu0 %v60, 113
  %v901 = vpop.permute.xlu0 %900
  %902 = vrot.lane.b32.xlu0 %v61, 113
  %v903 = vpop.permute.xlu0 %902
  %904 = vrot.lane.b32.xlu0 %v62, 113
  %v905 = vpop.permute.xlu0 %904
  %906 = vrot.lane.b32.xlu0 %v63, 113
  %v907 = vpop.permute.xlu0 %906
  %vm908 = vcmp.lt.s32.totalorder %v73, 113
  %v909 = vsel %vm908, %v905, %v907
  %v910 = vsel %vm908, %v903, %v905
  %v911 = vsel %vm908, %v901, %v903
  %v912 = vsel %vm908, %v907, %v901
  %s913 = scalar_lea.vmem %s0, 6
  %v914 = vld [vmem:[%s913] ss:$8 sm:$0xf]
  %v916 = vlaneseq
  %v917 = vshrl.u32 %v916, 7
  %v918 = vsub.s32 0, %v917
  %v919 = vrot.slane %v914, %v918
  %v920 = vlaneseq
  %v921 = vshrl.u32 %v920, 7
  %v922 = vsub.s32 1, %v921
  %v923 = vrot.slane %v914, %v922
  %v924 = vlaneseq
  %v925 = vshrl.u32 %v924, 7
  %v926 = vsub.s32 2, %v925
  %v927 = vrot.slane %v914, %v926
  %v928 = vlaneseq
  %v929 = vshrl.u32 %v928, 7
  %v930 = vsub.s32 3, %v929
  %v931 = vrot.slane %v914, %v930
  %v936 = vmul.f32 %v911, %v919
  %v937 = vmul.f32 %v910, %v923
  %v938 = vmul.f32 %v909, %v927
  %v939 = vmul.f32 %v912, %v931
  %s940 = scalar_lea.vmem %s4, 12
  %v941 = vld [vmem:[%s940] sm:$0x3]
  %v942 = vpack.c.bf16 %v936, %v936
  %v943 = vpack.c.bf16 %v937, %v937
  %v944 = vpack.c.bf16 %v938, %v938
  %v945 = vpack.c.bf16 %v939, %v939
  %v947 = vsel %vm156, %v941, 0
  %v950 = vsel %vm160, %v942, 0
  %v953 = vsel %vm160, %v943, 0
  %v956 = vsel %vm160, %v944, 0
  %v959 = vsel %vm160, %v945, 0
  %961 = vmatprep.subr.bf16.mxu0 0
  %962 = vmatpush1.bf16.msra.mxu0 0
  %963 = vmatprep.subr.bf16.mxu0 0
  %964 = vmatpush1.bf16.msra.mxu0 0
  %965 = vmatprep.subr.bf16.mxu0 0
  %966 = vmatpush1.bf16.msra.mxu0 0
  %967 = vmatprep.subr.bf16.mxu0 0
  %968 = vmatpush1.bf16.msra.mxu0 0
  %969 = vmatprep.subr.bf16.mxu0 0
  %970 = vmatpush1.bf16.msra.mxu0 0
  %971 = vmatprep.subr.bf16.mxu0 0
  %972 = vmatpush1.bf16.msra.mxu0 0
  %973 = vmatprep.subr.bf16.mxu0 0
  %974 = vmatpush1.bf16.msra.mxu0 0
  %975 = vmatprep.subr.bf16.mxu0 %v953
  %976 = vmatpush1.bf16.msra.mxu0 %v950
  %977 = vmatprep.subr.bf16.mxu0 0
  %978 = vmatpush2.bf16.msra.mxu0 0
  %979 = vmatprep.subr.bf16.mxu0 0
  %980 = vmatpush2.bf16.msra.mxu0 0
  %981 = vmatprep.subr.bf16.mxu0 0
  %982 = vmatpush2.bf16.msra.mxu0 0
  %983 = vmatprep.subr.bf16.mxu0 0
  %984 = vmatpush2.bf16.msra.mxu0 0
  %985 = vmatprep.subr.bf16.mxu0 0
  %986 = vmatpush2.bf16.msra.mxu0 0
  %987 = vmatprep.subr.bf16.mxu0 0
  %988 = vmatpush2.bf16.msra.mxu0 0
  %989 = vmatprep.subr.bf16.mxu0 0
  %990 = vmatpush2.bf16.msra.mxu0 0
  %991 = vmatprep.subr.bf16.mxu0 0
  %992 = vmatpush2.bf16.msra.mxu0 0
  %993 = vmatprep.mubr.bf16.mxu0 0
  %994 = vmatmul.mubr.bf16.gmra.mxu0 %v947
  %v995 = vpop.f32.mrf.mxu0
  %v996 = vadd.f32 0.0, %v995
  %v997 = vpop.f32.mrf.mxu0
  %v998 = vadd.f32 0.0, %v997
  %v999 = vpop.f32.mrf.mxu0
  %v1000 = vpop.f32.mrf.mxu0
  %1001 = vdwg.mxu0
  %1002 = vmatprep.subr.bf16.mxu0 0
  %1003 = vmatpush1.bf16.msra.mxu0 0
  %1004 = vmatprep.subr.bf16.mxu0 0
  %1005 = vmatpush1.bf16.msra.mxu0 0
  %1006 = vmatprep.subr.bf16.mxu0 0
  %1007 = vmatpush1.bf16.msra.mxu0 0
  %1008 = vmatprep.subr.bf16.mxu0 0
  %1009 = vmatpush1.bf16.msra.mxu0 0
  %1010 = vmatprep.subr.bf16.mxu0 0
  %1011 = vmatpush1.bf16.msra.mxu0 0
  %1012 = vmatprep.subr.bf16.mxu0 0
  %1013 = vmatpush1.bf16.msra.mxu0 0
  %1014 = vmatprep.subr.bf16.mxu0 0
  %1015 = vmatpush1.bf16.msra.mxu0 0
  %1016 = vmatprep.subr.bf16.mxu0 %v959
  %1017 = vmatpush1.bf16.msra.mxu0 %v956
  %1018 = vmatprep.subr.bf16.mxu0 0
  %1019 = vmatpush2.bf16.msra.mxu0 0
  %1020 = vmatprep.subr.bf16.mxu0 0
  %1021 = vmatpush2.bf16.msra.mxu0 0
  %1022 = vmatprep.subr.bf16.mxu0 0
  %1023 = vmatpush2.bf16.msra.mxu0 0
  %1024 = vmatprep.subr.bf16.mxu0 0
  %1025 = vmatpush2.bf16.msra.mxu0 0
  %1026 = vmatprep.subr.bf16.mxu0 0
  %1027 = vmatpush2.bf16.msra.mxu0 0
  %1028 = vmatprep.subr.bf16.mxu0 0
  %1029 = vmatpush2.bf16.msra.mxu0 0
  %1030 = vmatprep.subr.bf16.mxu0 0
  %1031 = vmatpush2.bf16.msra.mxu0 0
  %1032 = vmatprep.subr.bf16.mxu0 0
  %1033 = vmatpush2.bf16.msra.mxu0 0
  %1034 = vmatprep.mubr.bf16.mxu0 0
  %1035 = vmatmul.mubr.bf16.gmra.mxu0 %v947
  %v1036 = vpop.f32.mrf.mxu0
  %v1037 = vadd.f32 0.0, %v1036
  %v1038 = vpop.f32.mrf.mxu0
  %v1039 = vadd.f32 0.0, %v1038
  %v1040 = vpop.f32.mrf.mxu0
  %v1041 = vpop.f32.mrf.mxu0
  %1042 = vdwg.mxu0
  %v1043 = vadd.f32 %v896, %v996
  %v1044 = vadd.f32 %v897, %v998
  %v1045 = vadd.f32 %v898, %v1037
  %v1046 = vadd.f32 %v899, %v1039
  %1047 = vrot.lane.b32.xlu0 %v60, 112
  %v1048 = vpop.permute.xlu0 %1047
  %1049 = vrot.lane.b32.xlu0 %v61, 112
  %v1050 = vpop.permute.xlu0 %1049
  %1051 = vrot.lane.b32.xlu0 %v62, 112
  %v1052 = vpop.permute.xlu0 %1051
  %1053 = vrot.lane.b32.xlu0 %v63, 112
  %v1054 = vpop.permute.xlu0 %1053
  %vm1055 = vcmp.lt.s32.totalorder %v73, 112
  %v1056 = vsel %vm1055, %v1052, %v1054
  %v1057 = vsel %vm1055, %v1050, %v1052
  %v1058 = vsel %vm1055, %v1048, %v1050
  %v1059 = vsel %vm1055, %v1054, %v1048
  %s1060 = scalar_lea.vmem %s0, 7
  %v1061 = vld [vmem:[%s1060] ss:$8 sm:$0xf]
  %v1063 = vlaneseq
  %v1064 = vshrl.u32 %v1063, 7
  %v1065 = vsub.s32 0, %v1064
  %v1066 = vrot.slane %v1061, %v1065
  %v1067 = vlaneseq
  %v1068 = vshrl.u32 %v1067, 7
  %v1069 = vsub.s32 1, %v1068
  %v1070 = vrot.slane %v1061, %v1069
  %v1071 = vlaneseq
  %v1072 = vshrl.u32 %v1071, 7
  %v1073 = vsub.s32 2, %v1072
  %v1074 = vrot.slane %v1061, %v1073
  %v1075 = vlaneseq
  %v1076 = vshrl.u32 %v1075, 7
  %v1077 = vsub.s32 3, %v1076
  %v1078 = vrot.slane %v1061, %v1077
  %v1083 = vmul.f32 %v1058, %v1066
  %v1084 = vmul.f32 %v1057, %v1070
  %v1085 = vmul.f32 %v1056, %v1074
  %v1086 = vmul.f32 %v1059, %v1078
  %s1087 = scalar_lea.vmem %s4, 14
  %v1088 = vld [vmem:[%s1087] sm:$0x3]
  %v1089 = vpack.c.bf16 %v1083, %v1083
  %v1090 = vpack.c.bf16 %v1084, %v1084
  %v1091 = vpack.c.bf16 %v1085, %v1085
  %v1092 = vpack.c.bf16 %v1086, %v1086
  %v1094 = vsel %vm156, %v1088, 0
  %v1097 = vsel %vm160, %v1089, 0
  %v1100 = vsel %vm160, %v1090, 0
  %v1103 = vsel %vm160, %v1091, 0
  %v1106 = vsel %vm160, %v1092, 0
  %1108 = vmatprep.subr.bf16.mxu0 0
  %1109 = vmatpush1.bf16.msra.mxu0 0
  %1110 = vmatprep.subr.bf16.mxu0 0
  %1111 = vmatpush1.bf16.msra.mxu0 0
  %1112 = vmatprep.subr.bf16.mxu0 0
  %1113 = vmatpush1.bf16.msra.mxu0 0
  %1114 = vmatprep.subr.bf16.mxu0 0
  %1115 = vmatpush1.bf16.msra.mxu0 0
  %1116 = vmatprep.subr.bf16.mxu0 0
  %1117 = vmatpush1.bf16.msra.mxu0 0
  %1118 = vmatprep.subr.bf16.mxu0 0
  %1119 = vmatpush1.bf16.msra.mxu0 0
  %1120 = vmatprep.subr.bf16.mxu0 0
  %1121 = vmatpush1.bf16.msra.mxu0 0
  %1122 = vmatprep.subr.bf16.mxu0 %v1100
  %1123 = vmatpush1.bf16.msra.mxu0 %v1097
  %1124 = vmatprep.subr.bf16.mxu0 0
  %1125 = vmatpush2.bf16.msra.mxu0 0
  %1126 = vmatprep.subr.bf16.mxu0 0
  %1127 = vmatpush2.bf16.msra.mxu0 0
  %1128 = vmatprep.subr.bf16.mxu0 0
  %1129 = vmatpush2.bf16.msra.mxu0 0
  %1130 = vmatprep.subr.bf16.mxu0 0
  %1131 = vmatpush2.bf16.msra.mxu0 0
  %1132 = vmatprep.subr.bf16.mxu0 0
  %1133 = vmatpush2.bf16.msra.mxu0 0
  %1134 = vmatprep.subr.bf16.mxu0 0
  %1135 = vmatpush2.bf16.msra.mxu0 0
  %1136 = vmatprep.subr.bf16.mxu0 0
  %1137 = vmatpush2.bf16.msra.mxu0 0
  %1138 = vmatprep.subr.bf16.mxu0 0
  %1139 = vmatpush2.bf16.msra.mxu0 0
  %1140 = vmatprep.mubr.bf16.mxu0 0
  %1141 = vmatmul.mubr.bf16.gmra.mxu0 %v1094
  %v1142 = vpop.f32.mrf.mxu0
  %v1143 = vadd.f32 0.0, %v1142
  %v1144 = vpop.f32.mrf.mxu0
  %v1145 = vadd.f32 0.0, %v1144
  %v1146 = vpop.f32.mrf.mxu0
  %v1147 = vpop.f32.mrf.mxu0
  %1148 = vdwg.mxu0
  %1149 = vmatprep.subr.bf16.mxu0 0
  %1150 = vmatpush1.bf16.msra.mxu0 0
  %1151 = vmatprep.subr.bf16.mxu0 0
  %1152 = vmatpush1.bf16.msra.mxu0 0
  %1153 = vmatprep.subr.bf16.mxu0 0
  %1154 = vmatpush1.bf16.msra.mxu0 0
  %1155 = vmatprep.subr.bf16.mxu0 0
  %1156 = vmatpush1.bf16.msra.mxu0 0
  %1157 = vmatprep.subr.bf16.mxu0 0
  %1158 = vmatpush1.bf16.msra.mxu0 0
  %1159 = vmatprep.subr.bf16.mxu0 0
  %1160 = vmatpush1.bf16.msra.mxu0 0
  %1161 = vmatprep.subr.bf16.mxu0 0
  %1162 = vmatpush1.bf16.msra.mxu0 0
  %1163 = vmatprep.subr.bf16.mxu0 %v1106
  %1164 = vmatpush1.bf16.msra.mxu0 %v1103
  %1165 = vmatprep.subr.bf16.mxu0 0
  %1166 = vmatpush2.bf16.msra.mxu0 0
  %1167 = vmatprep.subr.bf16.mxu0 0
  %1168 = vmatpush2.bf16.msra.mxu0 0
  %1169 = vmatprep.subr.bf16.mxu0 0
  %1170 = vmatpush2.bf16.msra.mxu0 0
  %1171 = vmatprep.subr.bf16.mxu0 0
  %1172 = vmatpush2.bf16.msra.mxu0 0
  %1173 = vmatprep.subr.bf16.mxu0 0
  %1174 = vmatpush2.bf16.msra.mxu0 0
  %1175 = vmatprep.subr.bf16.mxu0 0
  %1176 = vmatpush2.bf16.msra.mxu0 0
  %1177 = vmatprep.subr.bf16.mxu0 0
  %1178 = vmatpush2.bf16.msra.mxu0 0
  %1179 = vmatprep.subr.bf16.mxu0 0
  %1180 = vmatpush2.bf16.msra.mxu0 0
  %1181 = vmatprep.mubr.bf16.mxu0 0
  %1182 = vmatmul.mubr.bf16.gmra.mxu0 %v1094
  %v1183 = vpop.f32.mrf.mxu0
  %v1184 = vadd.f32 0.0, %v1183
  %v1185 = vpop.f32.mrf.mxu0
  %v1186 = vadd.f32 0.0, %v1185
  %v1187 = vpop.f32.mrf.mxu0
  %v1188 = vpop.f32.mrf.mxu0
  %1189 = vdwg.mxu0
  %v1190 = vadd.f32 %v1043, %v1143
  %v1191 = vadd.f32 %v1044, %v1145
  %v1192 = vadd.f32 %v1045, %v1184
  %v1193 = vadd.f32 %v1046, %v1186
  %1194 = vrot.lane.b32.xlu0 %v60, 111
  %v1195 = vpop.permute.xlu0 %1194
  %1196 = vrot.lane.b32.xlu0 %v61, 111
  %v1197 = vpop.permute.xlu0 %1196
  %1198 = vrot.lane.b32.xlu0 %v62, 111
  %v1199 = vpop.permute.xlu0 %1198
  %1200 = vrot.lane.b32.xlu0 %v63, 111
  %v1201 = vpop.permute.xlu0 %1200
  %vm1202 = vcmp.lt.s32.totalorder %v73, 111
  %v1203 = vsel %vm1202, %v1199, %v1201
  %v1204 = vsel %vm1202, %v1197, %v1199
  %v1205 = vsel %vm1202, %v1195, %v1197
  %v1206 = vsel %vm1202, %v1201, %v1195
  %s1207 = scalar_lea.vmem %s0, 32
  %v1208 = vld [vmem:[%s1207] ss:$8 sm:$0xf]
  %v1210 = vlaneseq
  %v1211 = vshrl.u32 %v1210, 7
  %v1212 = vsub.s32 0, %v1211
  %v1213 = vrot.slane %v1208, %v1212
  %v1214 = vlaneseq
  %v1215 = vshrl.u32 %v1214, 7
  %v1216 = vsub.s32 1, %v1215
  %v1217 = vrot.slane %v1208, %v1216
  %v1218 = vlaneseq
  %v1219 = vshrl.u32 %v1218, 7
  %v1220 = vsub.s32 2, %v1219
  %v1221 = vrot.slane %v1208, %v1220
  %v1222 = vlaneseq
  %v1223 = vshrl.u32 %v1222, 7
  %v1224 = vsub.s32 3, %v1223
  %v1225 = vrot.slane %v1208, %v1224
  %v1230 = vmul.f32 %v1205, %v1213
  %v1231 = vmul.f32 %v1204, %v1217
  %v1232 = vmul.f32 %v1203, %v1221
  %v1233 = vmul.f32 %v1206, %v1225
  %s1234 = scalar_lea.vmem %s4, 16
  %v1235 = vld [vmem:[%s1234] sm:$0x3]
  %v1236 = vpack.c.bf16 %v1230, %v1230
  %v1237 = vpack.c.bf16 %v1231, %v1231
  %v1238 = vpack.c.bf16 %v1232, %v1232
  %v1239 = vpack.c.bf16 %v1233, %v1233
  %v1241 = vsel %vm156, %v1235, 0
  %v1244 = vsel %vm160, %v1236, 0
  %v1247 = vsel %vm160, %v1237, 0
  %v1250 = vsel %vm160, %v1238, 0
  %v1253 = vsel %vm160, %v1239, 0
  %1255 = vmatprep.subr.bf16.mxu0 0
  %1256 = vmatpush1.bf16.msra.mxu0 0
  %1257 = vmatprep.subr.bf16.mxu0 0
  %1258 = vmatpush1.bf16.msra.mxu0 0
  %1259 = vmatprep.subr.bf16.mxu0 0
  %1260 = vmatpush1.bf16.msra.mxu0 0
  %1261 = vmatprep.subr.bf16.mxu0 0
  %1262 = vmatpush1.bf16.msra.mxu0 0
  %1263 = vmatprep.subr.bf16.mxu0 0
  %1264 = vmatpush1.bf16.msra.mxu0 0
  %1265 = vmatprep.subr.bf16.mxu0 0
  %1266 = vmatpush1.bf16.msra.mxu0 0
  %1267 = vmatprep.subr.bf16.mxu0 0
  %1268 = vmatpush1.bf16.msra.mxu0 0
  %1269 = vmatprep.subr.bf16.mxu0 %v1247
  %1270 = vmatpush1.bf16.msra.mxu0 %v1244
  %1271 = vmatprep.subr.bf16.mxu0 0
  %1272 = vmatpush2.bf16.msra.mxu0 0
  %1273 = vmatprep.subr.bf16.mxu0 0
  %1274 = vmatpush2.bf16.msra.mxu0 0
  %1275 = vmatprep.subr.bf16.mxu0 0
  %1276 = vmatpush2.bf16.msra.mxu0 0
  %1277 = vmatprep.subr.bf16.mxu0 0
  %1278 = vmatpush2.bf16.msra.mxu0 0
  %1279 = vmatprep.subr.bf16.mxu0 0
  %1280 = vmatpush2.bf16.msra.mxu0 0
  %1281 = vmatprep.subr.bf16.mxu0 0
  %1282 = vmatpush2.bf16.msra.mxu0 0
  %1283 = vmatprep.subr.bf16.mxu0 0
  %1284 = vmatpush2.bf16.msra.mxu0 0
  %1285 = vmatprep.subr.bf16.mxu0 0
  %1286 = vmatpush2.bf16.msra.mxu0 0
  %1287 = vmatprep.mubr.bf16.mxu0 0
  %1288 = vmatmul.mubr.bf16.gmra.mxu0 %v1241
  %v1289 = vpop.f32.mrf.mxu0
  %v1290 = vadd.f32 0.0, %v1289
  %v1291 = vpop.f32.mrf.mxu0
  %v1292 = vadd.f32 0.0, %v1291
  %v1293 = vpop.f32.mrf.mxu0
  %v1294 = vpop.f32.mrf.mxu0
  %1295 = vdwg.mxu0
  %1296 = vmatprep.subr.bf16.mxu0 0
  %1297 = vmatpush1.bf16.msra.mxu0 0
  %1298 = vmatprep.subr.bf16.mxu0 0
  %1299 = vmatpush1.bf16.msra.mxu0 0
  %1300 = vmatprep.subr.bf16.mxu0 0
  %1301 = vmatpush1.bf16.msra.mxu0 0
  %1302 = vmatprep.subr.bf16.mxu0 0
  %1303 = vmatpush1.bf16.msra.mxu0 0
  %1304 = vmatprep.subr.bf16.mxu0 0
  %1305 = vmatpush1.bf16.msra.mxu0 0
  %1306 = vmatprep.subr.bf16.mxu0 0
  %1307 = vmatpush1.bf16.msra.mxu0 0
  %1308 = vmatprep.subr.bf16.mxu0 0
  %1309 = vmatpush1.bf16.msra.mxu0 0
  %1310 = vmatprep.subr.bf16.mxu0 %v1253
  %1311 = vmatpush1.bf16.msra.mxu0 %v1250
  %1312 = vmatprep.subr.bf16.mxu0 0
  %1313 = vmatpush2.bf16.msra.mxu0 0
  %1314 = vmatprep.subr.bf16.mxu0 0
  %1315 = vmatpush2.bf16.msra.mxu0 0
  %1316 = vmatprep.subr.bf16.mxu0 0
  %1317 = vmatpush2.bf16.msra.mxu0 0
  %1318 = vmatprep.subr.bf16.mxu0 0
  %1319 = vmatpush2.bf16.msra.mxu0 0
  %1320 = vmatprep.subr.bf16.mxu0 0
  %1321 = vmatpush2.bf16.msra.mxu0 0
  %1322 = vmatprep.subr.bf16.mxu0 0
  %1323 = vmatpush2.bf16.msra.mxu0 0
  %1324 = vmatprep.subr.bf16.mxu0 0
  %1325 = vmatpush2.bf16.msra.mxu0 0
  %1326 = vmatprep.subr.bf16.mxu0 0
  %1327 = vmatpush2.bf16.msra.mxu0 0
  %1328 = vmatprep.mubr.bf16.mxu0 0
  %1329 = vmatmul.mubr.bf16.gmra.mxu0 %v1241
  %v1330 = vpop.f32.mrf.mxu0
  %v1331 = vadd.f32 0.0, %v1330
  %v1332 = vpop.f32.mrf.mxu0
  %v1333 = vadd.f32 0.0, %v1332
  %v1334 = vpop.f32.mrf.mxu0
  %v1335 = vpop.f32.mrf.mxu0
  %1336 = vdwg.mxu0
  %v1337 = vadd.f32 %v1190, %v1290
  %v1338 = vadd.f32 %v1191, %v1292
  %v1339 = vadd.f32 %v1192, %v1331
  %v1340 = vadd.f32 %v1193, %v1333
  %v1341 = vld [vmem:[%s5] sm:$0xf]
  %1343 = vset.pattern.permute.xlu0 0
  %1344 = vperm.xlu0 %1343, %v1341
  %v1345 = vpop.permute.xlu0 %1344
  %v1347 = vadd.f32 %v1337, %v1345
  %v1348 = vadd.f32 %v1338, %v1345
  %v1349 = vadd.f32 %v1339, %v1345
  %v1350 = vadd.f32 %v1340, %v1345
  %1351 = vst [vmem:[%s6] sm:$0xf] %v1347
  %1352 = vst [vmem:[%s6 + $0x8] sm:$0xf] %v1348
  %1353 = vst [vmem:[%s6 + $0x10] sm:$0xf] %v1349
  %1354 = vst [vmem:[%s6 + $0x18] sm:$0xf] %v1350
  %v1359 = vrot.slane %v1347, 4
  %v1360 = vrot.slane %v1348, 4
  %v1361 = vrot.slane %v1349, 4
  %v1362 = vrot.slane %v1350, 4
  %1367 = vst [vmem:[#allocation2] sm:$0xf0] %v1359
  %1368 = vst [vmem:[#allocation2 + $0x8] sm:$0xf0] %v1360
  %1369 = vst [vmem:[#allocation2 + $0x10] sm:$0xf0] %v1361
  %1370 = vst [vmem:[#allocation2 + $0x18] sm:$0xf0] %v1362
  %v1371 = vld [vmem:[#allocation2] sm:$0xff]
  %v1372 = vld [vmem:[#allocation2 + $0x8] sm:$0xff]
  %v1373 = vld [vmem:[#allocation2 + $0x10] sm:$0xff]
  %v1374 = vld [vmem:[#allocation2 + $0x18] sm:$0xff]
  %s1375 = scalar_lea.vmem %s2, 16
  %v1376 = vld [vmem:[%s1375] sm:$0xff]
  %1378 = vset.pattern.permute.xlu0 0
  %1379 = vperm.xlu0 %1378, %v1376
  %v1380 = vpop.permute.xlu0 %1379
  %v1382 = vmul.f32 %v1371, %v1380
  %v1383 = vmul.f32 %v1372, %v1380
  %v1384 = vmul.f32 %v1373, %v1380
  %v1385 = vmul.f32 %v1374, %v1380
  %s1386 = scalar_lea.vmem %s3, 16
  %v1387 = vld [vmem:[%s1386] sm:$0xff]
  %1389 = vset.pattern.permute.xlu0 0
  %1390 = vperm.xlu0 %1389, %v1387
  %v1391 = vpop.permute.xlu0 %1390
  %v1393 = vadd.f32 %v1382, %v1391
  %v1394 = vadd.f32 %v1383, %v1391
  %v1395 = vadd.f32 %v1384, %v1391
  %v1396 = vadd.f32 %v1385, %v1391
  %v1397 = vmax.f32 %v1393, 0.0
  %v1398 = vmax.f32 %v1394, 0.0
  %v1399 = vmax.f32 %v1395, 0.0
  %v1400 = vmax.f32 %v1396, 0.0
  %1401 = vrot.lane.b32.xlu0 %v1397, 17
  %v1402 = vpop.permute.xlu0 %1401
  %1403 = vrot.lane.b32.xlu0 %v1398, 17
  %v1404 = vpop.permute.xlu0 %1403
  %1405 = vrot.lane.b32.xlu0 %v1399, 17
  %v1406 = vpop.permute.xlu0 %1405
  %1407 = vrot.lane.b32.xlu0 %v1400, 17
  %v1408 = vpop.permute.xlu0 %1407
  %v1409 = vsel %vm74, %v1406, %v1408
  %v1410 = vsel %vm74, %v1404, %v1406
  %v1411 = vsel %vm74, %v1402, %v1404
  %v1412 = vsel %vm74, %v1408, %v1402
  %v1413 = vld [vmem:[%s0] ss:$8 sm:$0xf]
  %v1415 = vlaneseq
  %v1416 = vshrl.u32 %v1415, 7
  %v1417 = vsub.s32 0, %v1416
  %v1418 = vrot.slane %v1413, %v1417
  %v1419 = vlaneseq
  %v1420 = vshrl.u32 %v1419, 7
  %v1421 = vsub.s32 1, %v1420
  %v1422 = vrot.slane %v1413, %v1421
  %v1423 = vlaneseq
  %v1424 = vshrl.u32 %v1423, 7
  %v1425 = vsub.s32 2, %v1424
  %v1426 = vrot.slane %v1413, %v1425
  %v1427 = vlaneseq
  %v1428 = vshrl.u32 %v1427, 7
  %v1429 = vsub.s32 3, %v1428
  %v1430 = vrot.slane %v1413, %v1429
  %v1435 = vmul.f32 %v1412, %v1418
  %v1436 = vmul.f32 %v1411, %v1422
  %v1437 = vmul.f32 %v1410, %v1426
  %v1438 = vmul.f32 %v1409, %v1430
  %s1439 = scalar_lea.vmem %s4, 18
  %v1440 = vld [vmem:[%s1439] sm:$0x3]
  %v1441 = vpack.c.bf16 %v1435, %v1435
  %v1442 = vpack.c.bf16 %v1436, %v1436
  %v1443 = vpack.c.bf16 %v1437, %v1437
  %v1444 = vpack.c.bf16 %v1438, %v1438
  %1445 = vrot.lane.b32.xlu0 %v1397, 16
  %v1446 = vpop.permute.xlu0 %1445
  %1447 = vrot.lane.b32.xlu0 %v1398, 16
  %v1448 = vpop.permute.xlu0 %1447
  %1449 = vrot.lane.b32.xlu0 %v1399, 16
  %v1450 = vpop.permute.xlu0 %1449
  %1451 = vrot.lane.b32.xlu0 %v1400, 16
  %v1452 = vpop.permute.xlu0 %1451
  %v1453 = vsel %vm118, %v1450, %v1452
  %v1454 = vsel %vm118, %v1448, %v1450
  %v1455 = vsel %vm118, %v1446, %v1448
  %v1456 = vsel %vm118, %v1452, %v1446
  %v1457 = vld [vmem:[%s123] ss:$8 sm:$0xf]
  %v1459 = vlaneseq
  %v1460 = vshrl.u32 %v1459, 7
  %v1461 = vsub.s32 0, %v1460
  %v1462 = vrot.slane %v1457, %v1461
  %v1463 = vlaneseq
  %v1464 = vshrl.u32 %v1463, 7
  %v1465 = vsub.s32 1, %v1464
  %v1466 = vrot.slane %v1457, %v1465
  %v1467 = vlaneseq
  %v1468 = vshrl.u32 %v1467, 7
  %v1469 = vsub.s32 2, %v1468
  %v1470 = vrot.slane %v1457, %v1469
  %v1471 = vlaneseq
  %v1472 = vshrl.u32 %v1471, 7
  %v1473 = vsub.s32 3, %v1472
  %v1474 = vrot.slane %v1457, %v1473
  %v1479 = vmul.f32 %v1456, %v1462
  %v1480 = vmul.f32 %v1455, %v1466
  %v1481 = vmul.f32 %v1454, %v1470
  %v1482 = vmul.f32 %v1453, %v1474
  %s1483 = scalar_lea.vmem %s4, 20
  %v1484 = vld [vmem:[%s1483] sm:$0x3]
  %v1485 = vpack.c.bf16 %v1479, %v1479
  %v1486 = vpack.c.bf16 %v1480, %v1480
  %v1487 = vpack.c.bf16 %v1481, %v1481
  %v1488 = vpack.c.bf16 %v1482, %v1482
  %vm1489 = vcmask 64512
  %v1491 = vsel %vm1489, %v1484, 0
  %vm1493 = vcmask 1043456
  %v1495 = vsel %vm1493, %v1485, 0
  %v1498 = vsel %vm1493, %v1486, 0
  %v1501 = vsel %vm1493, %v1487, 0
  %v1504 = vsel %vm1493, %v1488, 0
  %1506 = vmatprep.subr.bf16.mxu0 0
  %1507 = vmatpush1.bf16.msra.mxu0 0
  %1508 = vmatprep.subr.bf16.mxu0 0
  %1509 = vmatpush1.bf16.msra.mxu0 0
  %1510 = vmatprep.subr.bf16.mxu0 0
  %1511 = vmatpush1.bf16.msra.mxu0 0
  %1512 = vmatprep.subr.bf16.mxu0 0
  %1513 = vmatpush1.bf16.msra.mxu0 0
  %1514 = vmatprep.subr.bf16.mxu0 0
  %1515 = vmatpush1.bf16.msra.mxu0 0
  %1516 = vmatprep.subr.bf16.mxu0 0
  %1517 = vmatpush1.bf16.msra.mxu0 0
  %1518 = vmatprep.subr.bf16.mxu0 0
  %1519 = vmatpush1.bf16.msra.mxu0 0
  %1520 = vmatprep.subr.bf16.mxu0 %v1498
  %1521 = vmatpush1.bf16.msra.mxu0 %v1495
  %1522 = vmatprep.subr.bf16.mxu0 0
  %1523 = vmatpush2.bf16.msra.mxu0 0
  %1524 = vmatprep.subr.bf16.mxu0 0
  %1525 = vmatpush2.bf16.msra.mxu0 0
  %1526 = vmatprep.subr.bf16.mxu0 0
  %1527 = vmatpush2.bf16.msra.mxu0 0
  %1528 = vmatprep.subr.bf16.mxu0 0
  %1529 = vmatpush2.bf16.msra.mxu0 0
  %1530 = vmatprep.subr.bf16.mxu0 0
  %1531 = vmatpush2.bf16.msra.mxu0 0
  %1532 = vmatprep.subr.bf16.mxu0 0
  %1533 = vmatpush2.bf16.msra.mxu0 0
  %1534 = vmatprep.subr.bf16.mxu0 0
  %1535 = vmatpush2.bf16.msra.mxu0 0
  %1536 = vmatprep.subr.bf16.mxu0 0
  %1537 = vmatpush2.bf16.msra.mxu0 0
  %1538 = vmatprep.mubr.bf16.mxu0 0
  %1539 = vmatmul.mubr.bf16.gmra.mxu0 %v1491
  %v1540 = vpop.f32.mrf.mxu0
  %v1541 = vadd.f32 0.0, %v1540
  %v1542 = vpop.f32.mrf.mxu0
  %v1543 = vadd.f32 0.0, %v1542
  %v1544 = vpop.f32.mrf.mxu0
  %v1545 = vpop.f32.mrf.mxu0
  %1546 = vdwg.mxu0
  %1547 = vmatprep.subr.bf16.mxu0 0
  %1548 = vmatpush1.bf16.msra.mxu0 0
  %1549 = vmatprep.subr.bf16.mxu0 0
  %1550 = vmatpush1.bf16.msra.mxu0 0
  %1551 = vmatprep.subr.bf16.mxu0 0
  %1552 = vmatpush1.bf16.msra.mxu0 0
  %1553 = vmatprep.subr.bf16.mxu0 0
  %1554 = vmatpush1.bf16.msra.mxu0 0
  %1555 = vmatprep.subr.bf16.mxu0 0
  %1556 = vmatpush1.bf16.msra.mxu0 0
  %1557 = vmatprep.subr.bf16.mxu0 0
  %1558 = vmatpush1.bf16.msra.mxu0 0
  %1559 = vmatprep.subr.bf16.mxu0 0
  %1560 = vmatpush1.bf16.msra.mxu0 0
  %1561 = vmatprep.subr.bf16.mxu0 %v1504
  %1562 = vmatpush1.bf16.msra.mxu0 %v1501
  %1563 = vmatprep.subr.bf16.mxu0 0
  %1564 = vmatpush2.bf16.msra.mxu0 0
  %1565 = vmatprep.subr.bf16.mxu0 0
  %1566 = vmatpush2.bf16.msra.mxu0 0
  %1567 = vmatprep.subr.bf16.mxu0 0
  %1568 = vmatpush2.bf16.msra.mxu0 0
  %1569 = vmatprep.subr.bf16.mxu0 0
  %1570 = vmatpush2.bf16.msra.mxu0 0
  %1571 = vmatprep.subr.bf16.mxu0 0
  %1572 = vmatpush2.bf16.msra.mxu0 0
  %1573 = vmatprep.subr.bf16.mxu0 0
  %1574 = vmatpush2.bf16.msra.mxu0 0
  %1575 = vmatprep.subr.bf16.mxu0 0
  %1576 = vmatpush2.bf16.msra.mxu0 0
  %1577 = vmatprep.subr.bf16.mxu0 0
  %1578 = vmatpush2.bf16.msra.mxu0 0
  %1579 = vmatprep.mubr.bf16.mxu0 0
  %1580 = vmatmul.mubr.bf16.gmra.mxu0 %v1491
  %v1581 = vpop.f32.mrf.mxu0
  %v1582 = vadd.f32 0.0, %v1581
  %v1583 = vpop.f32.mrf.mxu0
  %v1584 = vadd.f32 0.0, %v1583
  %v1585 = vpop.f32.mrf.mxu0
  %v1586 = vpop.f32.mrf.mxu0
  %1587 = vdwg.mxu0
  %v1589 = vsel %vm1489, %v1440, 0
  %v1592 = vsel %vm1493, %v1441, 0
  %v1595 = vsel %vm1493, %v1442, 0
  %v1598 = vsel %vm1493, %v1443, 0
  %v1601 = vsel %vm1493, %v1444, 0
  %1603 = vmatprep.subr.bf16.mxu0 0
  %1604 = vmatpush1.bf16.msra.mxu0 0
  %1605 = vmatprep.subr.bf16.mxu0 0
  %1606 = vmatpush1.bf16.msra.mxu0 0
  %1607 = vmatprep.subr.bf16.mxu0 0
  %1608 = vmatpush1.bf16.msra.mxu0 0
  %1609 = vmatprep.subr.bf16.mxu0 0
  %1610 = vmatpush1.bf16.msra.mxu0 0
  %1611 = vmatprep.subr.bf16.mxu0 0
  %1612 = vmatpush1.bf16.msra.mxu0 0
  %1613 = vmatprep.subr.bf16.mxu0 0
  %1614 = vmatpush1.bf16.msra.mxu0 0
  %1615 = vmatprep.subr.bf16.mxu0 0
  %1616 = vmatpush1.bf16.msra.mxu0 0
  %1617 = vmatprep.subr.bf16.mxu0 %v1595
  %1618 = vmatpush1.bf16.msra.mxu0 %v1592
  %1619 = vmatprep.subr.bf16.mxu0 0
  %1620 = vmatpush2.bf16.msra.mxu0 0
  %1621 = vmatprep.subr.bf16.mxu0 0
  %1622 = vmatpush2.bf16.msra.mxu0 0
  %1623 = vmatprep.subr.bf16.mxu0 0
  %1624 = vmatpush2.bf16.msra.mxu0 0
  %1625 = vmatprep.subr.bf16.mxu0 0
  %1626 = vmatpush2.bf16.msra.mxu0 0
  %1627 = vmatprep.subr.bf16.mxu0 0
  %1628 = vmatpush2.bf16.msra.mxu0 0
  %1629 = vmatprep.subr.bf16.mxu0 0
  %1630 = vmatpush2.bf16.msra.mxu0 0
  %1631 = vmatprep.subr.bf16.mxu0 0
  %1632 = vmatpush2.bf16.msra.mxu0 0
  %1633 = vmatprep.subr.bf16.mxu0 0
  %1634 = vmatpush2.bf16.msra.mxu0 0
  %1635 = vmatprep.mubr.bf16.mxu0 0
  %1636 = vmatmul.mubr.bf16.gmra.mxu0 %v1589
  %v1637 = vpop.f32.mrf.mxu0
  %v1638 = vadd.f32 %v1541, %v1637
  %v1639 = vpop.f32.mrf.mxu0
  %v1640 = vadd.f32 %v1543, %v1639
  %v1641 = vpop.f32.mrf.mxu0
  %v1642 = vpop.f32.mrf.mxu0
  %1643 = vdwg.mxu0
  %1644 = vmatprep.subr.bf16.mxu0 0
  %1645 = vmatpush1.bf16.msra.mxu0 0
  %1646 = vmatprep.subr.bf16.mxu0 0
  %1647 = vmatpush1.bf16.msra.mxu0 0
  %1648 = vmatprep.subr.bf16.mxu0 0
  %1649 = vmatpush1.bf16.msra.mxu0 0
  %1650 = vmatprep.subr.bf16.mxu0 0
  %1651 = vmatpush1.bf16.msra.mxu0 0
  %1652 = vmatprep.subr.bf16.mxu0 0
  %1653 = vmatpush1.bf16.msra.mxu0 0
  %1654 = vmatprep.subr.bf16.mxu0 0
  %1655 = vmatpush1.bf16.msra.mxu0 0
  %1656 = vmatprep.subr.bf16.mxu0 0
  %1657 = vmatpush1.bf16.msra.mxu0 0
  %1658 = vmatprep.subr.bf16.mxu0 %v1601
  %1659 = vmatpush1.bf16.msra.mxu0 %v1598
  %1660 = vmatprep.subr.bf16.mxu0 0
  %1661 = vmatpush2.bf16.msra.mxu0 0
  %1662 = vmatprep.subr.bf16.mxu0 0
  %1663 = vmatpush2.bf16.msra.mxu0 0
  %1664 = vmatprep.subr.bf16.mxu0 0
  %1665 = vmatpush2.bf16.msra.mxu0 0
  %1666 = vmatprep.subr.bf16.mxu0 0
  %1667 = vmatpush2.bf16.msra.mxu0 0
  %1668 = vmatprep.subr.bf16.mxu0 0
  %1669 = vmatpush2.bf16.msra.mxu0 0
  %1670 = vmatprep.subr.bf16.mxu0 0
  %1671 = vmatpush2.bf16.msra.mxu0 0
  %1672 = vmatprep.subr.bf16.mxu0 0
  %1673 = vmatpush2.bf16.msra.mxu0 0
  %1674 = vmatprep.subr.bf16.mxu0 0
  %1675 = vmatpush2.bf16.msra.mxu0 0
  %1676 = vmatprep.mubr.bf16.mxu0 0
  %1677 = vmatmul.mubr.bf16.gmra.mxu0 %v1589
  %v1678 = vpop.f32.mrf.mxu0
  %v1679 = vadd.f32 %v1582, %v1678
  %v1680 = vpop.f32.mrf.mxu0
  %v1681 = vadd.f32 %v1584, %v1680
  %v1682 = vpop.f32.mrf.mxu0
  %v1683 = vpop.f32.mrf.mxu0
  %1684 = vdwg.mxu0
  %1685 = vrot.lane.b32.xlu0 %v1397, 15
  %v1686 = vpop.permute.xlu0 %1685
  %1687 = vrot.lane.b32.xlu0 %v1398, 15
  %v1688 = vpop.permute.xlu0 %1687
  %1689 = vrot.lane.b32.xlu0 %v1399, 15
  %v1690 = vpop.permute.xlu0 %1689
  %1691 = vrot.lane.b32.xlu0 %v1400, 15
  %v1692 = vpop.permute.xlu0 %1691
  %v1693 = vsel %vm360, %v1690, %v1692
  %v1694 = vsel %vm360, %v1688, %v1690
  %v1695 = vsel %vm360, %v1686, %v1688
  %v1696 = vsel %vm360, %v1692, %v1686
  %v1697 = vld [vmem:[%s365] ss:$8 sm:$0xf]
  %v1699 = vlaneseq
  %v1700 = vshrl.u32 %v1699, 7
  %v1701 = vsub.s32 0, %v1700
  %v1702 = vrot.slane %v1697, %v1701
  %v1703 = vlaneseq
  %v1704 = vshrl.u32 %v1703, 7
  %v1705 = vsub.s32 1, %v1704
  %v1706 = vrot.slane %v1697, %v1705
  %v1707 = vlaneseq
  %v1708 = vshrl.u32 %v1707, 7
  %v1709 = vsub.s32 2, %v1708
  %v1710 = vrot.slane %v1697, %v1709
  %v1711 = vlaneseq
  %v1712 = vshrl.u32 %v1711, 7
  %v1713 = vsub.s32 3, %v1712
  %v1714 = vrot.slane %v1697, %v1713
  %v1719 = vmul.f32 %v1696, %v1702
  %v1720 = vmul.f32 %v1695, %v1706
  %v1721 = vmul.f32 %v1694, %v1710
  %v1722 = vmul.f32 %v1693, %v1714
  %s1723 = scalar_lea.vmem %s4, 22
  %v1724 = vld [vmem:[%s1723] sm:$0x3]
  %v1725 = vpack.c.bf16 %v1719, %v1719
  %v1726 = vpack.c.bf16 %v1720, %v1720
  %v1727 = vpack.c.bf16 %v1721, %v1721
  %v1728 = vpack.c.bf16 %v1722, %v1722
  %v1730 = vsel %vm1489, %v1724, 0
  %v1733 = vsel %vm1493, %v1725, 0
  %v1736 = vsel %vm1493, %v1726, 0
  %v1739 = vsel %vm1493, %v1727, 0
  %v1742 = vsel %vm1493, %v1728, 0
  %1744 = vmatprep.subr.bf16.mxu0 0
  %1745 = vmatpush1.bf16.msra.mxu0 0
  %1746 = vmatprep.subr.bf16.mxu0 0
  %1747 = vmatpush1.bf16.msra.mxu0 0
  %1748 = vmatprep.subr.bf16.mxu0 0
  %1749 = vmatpush1.bf16.msra.mxu0 0
  %1750 = vmatprep.subr.bf16.mxu0 0
  %1751 = vmatpush1.bf16.msra.mxu0 0
  %1752 = vmatprep.subr.bf16.mxu0 0
  %1753 = vmatpush1.bf16.msra.mxu0 0
  %1754 = vmatprep.subr.bf16.mxu0 0
  %1755 = vmatpush1.bf16.msra.mxu0 0
  %1756 = vmatprep.subr.bf16.mxu0 0
  %1757 = vmatpush1.bf16.msra.mxu0 0
  %1758 = vmatprep.subr.bf16.mxu0 %v1736
  %1759 = vmatpush1.bf16.msra.mxu0 %v1733
  %1760 = vmatprep.subr.bf16.mxu0 0
  %1761 = vmatpush2.bf16.msra.mxu0 0
  %1762 = vmatprep.subr.bf16.mxu0 0
  %1763 = vmatpush2.bf16.msra.mxu0 0
  %1764 = vmatprep.subr.bf16.mxu0 0
  %1765 = vmatpush2.bf16.msra.mxu0 0
  %1766 = vmatprep.subr.bf16.mxu0 0
  %1767 = vmatpush2.bf16.msra.mxu0 0
  %1768 = vmatprep.subr.bf16.mxu0 0
  %1769 = vmatpush2.bf16.msra.mxu0 0
  %1770 = vmatprep.subr.bf16.mxu0 0
  %1771 = vmatpush2.bf16.msra.mxu0 0
  %1772 = vmatprep.subr.bf16.mxu0 0
  %1773 = vmatpush2.bf16.msra.mxu0 0
  %1774 = vmatprep.subr.bf16.mxu0 0
  %1775 = vmatpush2.bf16.msra.mxu0 0
  %1776 = vmatprep.mubr.bf16.mxu0 0
  %1777 = vmatmul.mubr.bf16.gmra.mxu0 %v1730
  %v1778 = vpop.f32.mrf.mxu0
  %v1779 = vadd.f32 0.0, %v1778
  %v1780 = vpop.f32.mrf.mxu0
  %v1781 = vadd.f32 0.0, %v1780
  %v1782 = vpop.f32.mrf.mxu0
  %v1783 = vpop.f32.mrf.mxu0
  %1784 = vdwg.mxu0
  %1785 = vmatprep.subr.bf16.mxu0 0
  %1786 = vmatpush1.bf16.msra.mxu0 0
  %1787 = vmatprep.subr.bf16.mxu0 0
  %1788 = vmatpush1.bf16.msra.mxu0 0
  %1789 = vmatprep.subr.bf16.mxu0 0
  %1790 = vmatpush1.bf16.msra.mxu0 0
  %1791 = vmatprep.subr.bf16.mxu0 0
  %1792 = vmatpush1.bf16.msra.mxu0 0
  %1793 = vmatprep.subr.bf16.mxu0 0
  %1794 = vmatpush1.bf16.msra.mxu0 0
  %1795 = vmatprep.subr.bf16.mxu0 0
  %1796 = vmatpush1.bf16.msra.mxu0 0
  %1797 = vmatprep.subr.bf16.mxu0 0
  %1798 = vmatpush1.bf16.msra.mxu0 0
  %1799 = vmatprep.subr.bf16.mxu0 %v1742
  %1800 = vmatpush1.bf16.msra.mxu0 %v1739
  %1801 = vmatprep.subr.bf16.mxu0 0
  %1802 = vmatpush2.bf16.msra.mxu0 0
  %1803 = vmatprep.subr.bf16.mxu0 0
  %1804 = vmatpush2.bf16.msra.mxu0 0
  %1805 = vmatprep.subr.bf16.mxu0 0
  %1806 = vmatpush2.bf16.msra.mxu0 0
  %1807 = vmatprep.subr.bf16.mxu0 0
  %1808 = vmatpush2.bf16.msra.mxu0 0
  %1809 = vmatprep.subr.bf16.mxu0 0
  %1810 = vmatpush2.bf16.msra.mxu0 0
  %1811 = vmatprep.subr.bf16.mxu0 0
  %1812 = vmatpush2.bf16.msra.mxu0 0
  %1813 = vmatprep.subr.bf16.mxu0 0
  %1814 = vmatpush2.bf16.msra.mxu0 0
  %1815 = vmatprep.subr.bf16.mxu0 0
  %1816 = vmatpush2.bf16.msra.mxu0 0
  %1817 = vmatprep.mubr.bf16.mxu0 0
  %1818 = vmatmul.mubr.bf16.gmra.mxu0 %v1730
  %v1819 = vpop.f32.mrf.mxu0
  %v1820 = vadd.f32 0.0, %v1819
  %v1821 = vpop.f32.mrf.mxu0
  %v1822 = vadd.f32 0.0, %v1821
  %v1823 = vpop.f32.mrf.mxu0
  %v1824 = vpop.f32.mrf.mxu0
  %1825 = vdwg.mxu0
  %v1826 = vadd.f32 %v1638, %v1779
  %v1827 = vadd.f32 %v1640, %v1781
  %v1828 = vadd.f32 %v1679, %v1820
  %v1829 = vadd.f32 %v1681, %v1822
  %1830 = vrot.lane.b32.xlu0 %v1397, 1
  %v1831 = vpop.permute.xlu0 %1830
  %1832 = vrot.lane.b32.xlu0 %v1398, 1
  %v1833 = vpop.permute.xlu0 %1832
  %1834 = vrot.lane.b32.xlu0 %v1399, 1
  %v1835 = vpop.permute.xlu0 %1834
  %1836 = vrot.lane.b32.xlu0 %v1400, 1
  %v1837 = vpop.permute.xlu0 %1836
  %v1838 = vsel %vm507, %v1835, %v1837
  %v1839 = vsel %vm507, %v1833, %v1835
  %v1840 = vsel %vm507, %v1831, %v1833
  %v1841 = vsel %vm507, %v1837, %v1831
  %v1842 = vld [vmem:[%s512] ss:$8 sm:$0xf]
  %v1844 = vlaneseq
  %v1845 = vshrl.u32 %v1844, 7
  %v1846 = vsub.s32 0, %v1845
  %v1847 = vrot.slane %v1842, %v1846
  %v1848 = vlaneseq
  %v1849 = vshrl.u32 %v1848, 7
  %v1850 = vsub.s32 1, %v1849
  %v1851 = vrot.slane %v1842, %v1850
  %v1852 = vlaneseq
  %v1853 = vshrl.u32 %v1852, 7
  %v1854 = vsub.s32 2, %v1853
  %v1855 = vrot.slane %v1842, %v1854
  %v1856 = vlaneseq
  %v1857 = vshrl.u32 %v1856, 7
  %v1858 = vsub.s32 3, %v1857
  %v1859 = vrot.slane %v1842, %v1858
  %v1864 = vmul.f32 %v1841, %v1847
  %v1865 = vmul.f32 %v1840, %v1851
  %v1866 = vmul.f32 %v1839, %v1855
  %v1867 = vmul.f32 %v1838, %v1859
  %s1868 = scalar_lea.vmem %s4, 24
  %v1869 = vld [vmem:[%s1868] sm:$0x3]
  %v1870 = vpack.c.bf16 %v1864, %v1864
  %v1871 = vpack.c.bf16 %v1865, %v1865
  %v1872 = vpack.c.bf16 %v1866, %v1866
  %v1873 = vpack.c.bf16 %v1867, %v1867
  %v1875 = vsel %vm1489, %v1869, 0
  %v1878 = vsel %vm1493, %v1870, 0
  %v1881 = vsel %vm1493, %v1871, 0
  %v1884 = vsel %vm1493, %v1872, 0
  %v1887 = vsel %vm1493, %v1873, 0
  %1889 = vmatprep.subr.bf16.mxu0 0
  %1890 = vmatpush1.bf16.msra.mxu0 0
  %1891 = vmatprep.subr.bf16.mxu0 0
  %1892 = vmatpush1.bf16.msra.mxu0 0
  %1893 = vmatprep.subr.bf16.mxu0 0
  %1894 = vmatpush1.bf16.msra.mxu0 0
  %1895 = vmatprep.subr.bf16.mxu0 0
  %1896 = vmatpush1.bf16.msra.mxu0 0
  %1897 = vmatprep.subr.bf16.mxu0 0
  %1898 = vmatpush1.bf16.msra.mxu0 0
  %1899 = vmatprep.subr.bf16.mxu0 0
  %1900 = vmatpush1.bf16.msra.mxu0 0
  %1901 = vmatprep.subr.bf16.mxu0 0
  %1902 = vmatpush1.bf16.msra.mxu0 0
  %1903 = vmatprep.subr.bf16.mxu0 %v1881
  %1904 = vmatpush1.bf16.msra.mxu0 %v1878
  %1905 = vmatprep.subr.bf16.mxu0 0
  %1906 = vmatpush2.bf16.msra.mxu0 0
  %1907 = vmatprep.subr.bf16.mxu0 0
  %1908 = vmatpush2.bf16.msra.mxu0 0
  %1909 = vmatprep.subr.bf16.mxu0 0
  %1910 = vmatpush2.bf16.msra.mxu0 0
  %1911 = vmatprep.subr.bf16.mxu0 0
  %1912 = vmatpush2.bf16.msra.mxu0 0
  %1913 = vmatprep.subr.bf16.mxu0 0
  %1914 = vmatpush2.bf16.msra.mxu0 0
  %1915 = vmatprep.subr.bf16.mxu0 0
  %1916 = vmatpush2.bf16.msra.mxu0 0
  %1917 = vmatprep.subr.bf16.mxu0 0
  %1918 = vmatpush2.bf16.msra.mxu0 0
  %1919 = vmatprep.subr.bf16.mxu0 0
  %1920 = vmatpush2.bf16.msra.mxu0 0
  %1921 = vmatprep.mubr.bf16.mxu0 0
  %1922 = vmatmul.mubr.bf16.gmra.mxu0 %v1875
  %v1923 = vpop.f32.mrf.mxu0
  %v1924 = vadd.f32 0.0, %v1923
  %v1925 = vpop.f32.mrf.mxu0
  %v1926 = vadd.f32 0.0, %v1925
  %v1927 = vpop.f32.mrf.mxu0
  %v1928 = vpop.f32.mrf.mxu0
  %1929 = vdwg.mxu0
  %1930 = vmatprep.subr.bf16.mxu0 0
  %1931 = vmatpush1.bf16.msra.mxu0 0
  %1932 = vmatprep.subr.bf16.mxu0 0
  %1933 = vmatpush1.bf16.msra.mxu0 0
  %1934 = vmatprep.subr.bf16.mxu0 0
  %1935 = vmatpush1.bf16.msra.mxu0 0
  %1936 = vmatprep.subr.bf16.mxu0 0
  %1937 = vmatpush1.bf16.msra.mxu0 0
  %1938 = vmatprep.subr.bf16.mxu0 0
  %1939 = vmatpush1.bf16.msra.mxu0 0
  %1940 = vmatprep.subr.bf16.mxu0 0
  %1941 = vmatpush1.bf16.msra.mxu0 0
  %1942 = vmatprep.subr.bf16.mxu0 0
  %1943 = vmatpush1.bf16.msra.mxu0 0
  %1944 = vmatprep.subr.bf16.mxu0 %v1887
  %1945 = vmatpush1.bf16.msra.mxu0 %v1884
  %1946 = vmatprep.subr.bf16.mxu0 0
  %1947 = vmatpush2.bf16.msra.mxu0 0
  %1948 = vmatprep.subr.bf16.mxu0 0
  %1949 = vmatpush2.bf16.msra.mxu0 0
  %1950 = vmatprep.subr.bf16.mxu0 0
  %1951 = vmatpush2.bf16.msra.mxu0 0
  %1952 = vmatprep.subr.bf16.mxu0 0
  %1953 = vmatpush2.bf16.msra.mxu0 0
  %1954 = vmatprep.subr.bf16.mxu0 0
  %1955 = vmatpush2.bf16.msra.mxu0 0
  %1956 = vmatprep.subr.bf16.mxu0 0
  %1957 = vmatpush2.bf16.msra.mxu0 0
  %1958 = vmatprep.subr.bf16.mxu0 0
  %1959 = vmatpush2.bf16.msra.mxu0 0
  %1960 = vmatprep.subr.bf16.mxu0 0
  %1961 = vmatpush2.bf16.msra.mxu0 0
  %1962 = vmatprep.mubr.bf16.mxu0 0
  %1963 = vmatmul.mubr.bf16.gmra.mxu0 %v1875
  %v1964 = vpop.f32.mrf.mxu0
  %v1965 = vadd.f32 0.0, %v1964
  %v1966 = vpop.f32.mrf.mxu0
  %v1967 = vadd.f32 0.0, %v1966
  %v1968 = vpop.f32.mrf.mxu0
  %v1969 = vpop.f32.mrf.mxu0
  %1970 = vdwg.mxu0
  %v1971 = vadd.f32 %v1826, %v1924
  %v1972 = vadd.f32 %v1827, %v1926
  %v1973 = vadd.f32 %v1828, %v1965
  %v1974 = vadd.f32 %v1829, %v1967
  %s1975 = scalar_lea.vmem %s4, 26
  %v1976 = vld [vmem:[%s1975] sm:$0x3]
  %v1977 = vpack.c.bf16 %v1397, %v1397
  %v1978 = vpack.c.bf16 %v1398, %v1398
  %v1979 = vpack.c.bf16 %v1399, %v1399
  %v1980 = vpack.c.bf16 %v1400, %v1400
  %v1982 = vsel %vm1489, %v1976, 0
  %v1985 = vsel %vm1493, %v1977, 0
  %v1988 = vsel %vm1493, %v1978, 0
  %v1991 = vsel %vm1493, %v1979, 0
  %v1994 = vsel %vm1493, %v1980, 0
  %1996 = vmatprep.subr.bf16.mxu0 0
  %1997 = vmatpush1.bf16.msra.mxu0 0
  %1998 = vmatprep.subr.bf16.mxu0 0
  %1999 = vmatpush1.bf16.msra.mxu0 0
  %2000 = vmatprep.subr.bf16.mxu0 0
  %2001 = vmatpush1.bf16.msra.mxu0 0
  %2002 = vmatprep.subr.bf16.mxu0 0
  %2003 = vmatpush1.bf16.msra.mxu0 0
  %2004 = vmatprep.subr.bf16.mxu0 0
  %2005 = vmatpush1.bf16.msra.mxu0 0
  %2006 = vmatprep.subr.bf16.mxu0 0
  %2007 = vmatpush1.bf16.msra.mxu0 0
  %2008 = vmatprep.subr.bf16.mxu0 0
  %2009 = vmatpush1.bf16.msra.mxu0 0
  %2010 = vmatprep.subr.bf16.mxu0 %v1988
  %2011 = vmatpush1.bf16.msra.mxu0 %v1985
  %2012 = vmatprep.subr.bf16.mxu0 0
  %2013 = vmatpush2.bf16.msra.mxu0 0
  %2014 = vmatprep.subr.bf16.mxu0 0
  %2015 = vmatpush2.bf16.msra.mxu0 0
  %2016 = vmatprep.subr.bf16.mxu0 0
  %2017 = vmatpush2.bf16.msra.mxu0 0
  %2018 = vmatprep.subr.bf16.mxu0 0
  %2019 = vmatpush2.bf16.msra.mxu0 0
  %2020 = vmatprep.subr.bf16.mxu0 0
  %2021 = vmatpush2.bf16.msra.mxu0 0
  %2022 = vmatprep.subr.bf16.mxu0 0
  %2023 = vmatpush2.bf16.msra.mxu0 0
  %2024 = vmatprep.subr.bf16.mxu0 0
  %2025 = vmatpush2.bf16.msra.mxu0 0
  %2026 = vmatprep.subr.bf16.mxu0 0
  %2027 = vmatpush2.bf16.msra.mxu0 0
  %2028 = vmatprep.mubr.bf16.mxu0 0
  %2029 = vmatmul.mubr.bf16.gmra.mxu0 %v1982
  %v2030 = vpop.f32.mrf.mxu0
  %v2031 = vadd.f32 0.0, %v2030
  %v2032 = vpop.f32.mrf.mxu0
  %v2033 = vadd.f32 0.0, %v2032
  %v2034 = vpop.f32.mrf.mxu0
  %v2035 = vpop.f32.mrf.mxu0
  %2036 = vdwg.mxu0
  %2037 = vmatprep.subr.bf16.mxu0 0
  %2038 = vmatpush1.bf16.msra.mxu0 0
  %2039 = vmatprep.subr.bf16.mxu0 0
  %2040 = vmatpush1.bf16.msra.mxu0 0
  %2041 = vmatprep.subr.bf16.mxu0 0
  %2042 = vmatpush1.bf16.msra.mxu0 0
  %2043 = vmatprep.subr.bf16.mxu0 0
  %2044 = vmatpush1.bf16.msra.mxu0 0
  %2045 = vmatprep.subr.bf16.mxu0 0
  %2046 = vmatpush1.bf16.msra.mxu0 0
  %2047 = vmatprep.subr.bf16.mxu0 0
  %2048 = vmatpush1.bf16.msra.mxu0 0
  %2049 = vmatprep.subr.bf16.mxu0 0
  %2050 = vmatpush1.bf16.msra.mxu0 0
  %2051 = vmatprep.subr.bf16.mxu0 %v1994
  %2052 = vmatpush1.bf16.msra.mxu0 %v1991
  %2053 = vmatprep.subr.bf16.mxu0 0
  %2054 = vmatpush2.bf16.msra.mxu0 0
  %2055 = vmatprep.subr.bf16.mxu0 0
  %2056 = vmatpush2.bf16.msra.mxu0 0
  %2057 = vmatprep.subr.bf16.mxu0 0
  %2058 = vmatpush2.bf16.msra.mxu0 0
  %2059 = vmatprep.subr.bf16.mxu0 0
  %2060 = vmatpush2.bf16.msra.mxu0 0
  %2061 = vmatprep.subr.bf16.mxu0 0
  %2062 = vmatpush2.bf16.msra.mxu0 0
  %2063 = vmatprep.subr.bf16.mxu0 0
  %2064 = vmatpush2.bf16.msra.mxu0 0
  %2065 = vmatprep.subr.bf16.mxu0 0
  %2066 = vmatpush2.bf16.msra.mxu0 0
  %2067 = vmatprep.subr.bf16.mxu0 0
  %2068 = vmatpush2.bf16.msra.mxu0 0
  %2069 = vmatprep.mubr.bf16.mxu0 0
  %2070 = vmatmul.mubr.bf16.gmra.mxu0 %v1982
  %v2071 = vpop.f32.mrf.mxu0
  %v2072 = vadd.f32 0.0, %v2071
  %v2073 = vpop.f32.mrf.mxu0
  %v2074 = vadd.f32 0.0, %v2073
  %v2075 = vpop.f32.mrf.mxu0
  %v2076 = vpop.f32.mrf.mxu0
  %2077 = vdwg.mxu0
  %v2078 = vadd.f32 %v1971, %v2031
  %v2079 = vadd.f32 %v1972, %v2033
  %v2080 = vadd.f32 %v1973, %v2072
  %v2081 = vadd.f32 %v1974, %v2074
  %2082 = vrot.lane.b32.xlu0 %v1397, 127
  %v2083 = vpop.permute.xlu0 %2082
  %2084 = vrot.lane.b32.xlu0 %v1398, 127
  %v2085 = vpop.permute.xlu0 %2084
  %2086 = vrot.lane.b32.xlu0 %v1399, 127
  %v2087 = vpop.permute.xlu0 %2086
  %2088 = vrot.lane.b32.xlu0 %v1400, 127
  %v2089 = vpop.permute.xlu0 %2088
  %v2090 = vsel %vm761, %v2087, %v2089
  %v2091 = vsel %vm761, %v2085, %v2087
  %v2092 = vsel %vm761, %v2083, %v2085
  %v2093 = vsel %vm761, %v2089, %v2083
  %v2094 = vld [vmem:[%s766] ss:$8 sm:$0xf]
  %v2096 = vlaneseq
  %v2097 = vshrl.u32 %v2096, 7
  %v2098 = vsub.s32 0, %v2097
  %v2099 = vrot.slane %v2094, %v2098
  %v2100 = vlaneseq
  %v2101 = vshrl.u32 %v2100, 7
  %v2102 = vsub.s32 1, %v2101
  %v2103 = vrot.slane %v2094, %v2102
  %v2104 = vlaneseq
  %v2105 = vshrl.u32 %v2104, 7
  %v2106 = vsub.s32 2, %v2105
  %v2107 = vrot.slane %v2094, %v2106
  %v2108 = vlaneseq
  %v2109 = vshrl.u32 %v2108, 7
  %v2110 = vsub.s32 3, %v2109
  %v2111 = vrot.slane %v2094, %v2110
  %v2116 = vmul.f32 %v2092, %v2099
  %v2117 = vmul.f32 %v2091, %v2103
  %v2118 = vmul.f32 %v2090, %v2107
  %v2119 = vmul.f32 %v2093, %v2111
  %s2120 = scalar_lea.vmem %s4, 28
  %v2121 = vld [vmem:[%s2120] sm:$0x3]
  %v2122 = vpack.c.bf16 %v2116, %v2116
  %v2123 = vpack.c.bf16 %v2117, %v2117
  %v2124 = vpack.c.bf16 %v2118, %v2118
  %v2125 = vpack.c.bf16 %v2119, %v2119
  %v2127 = vsel %vm1489, %v2121, 0
  %v2130 = vsel %vm1493, %v2122, 0
  %v2133 = vsel %vm1493, %v2123, 0
  %v2136 = vsel %vm1493, %v2124, 0
  %v2139 = vsel %vm1493, %v2125, 0
  %2141 = vmatprep.subr.bf16.mxu0 0
  %2142 = vmatpush1.bf16.msra.mxu0 0
  %2143 = vmatprep.subr.bf16.mxu0 0
  %2144 = vmatpush1.bf16.msra.mxu0 0
  %2145 = vmatprep.subr.bf16.mxu0 0
  %2146 = vmatpush1.bf16.msra.mxu0 0
  %2147 = vmatprep.subr.bf16.mxu0 0
  %2148 = vmatpush1.bf16.msra.mxu0 0
  %2149 = vmatprep.subr.bf16.mxu0 0
  %2150 = vmatpush1.bf16.msra.mxu0 0
  %2151 = vmatprep.subr.bf16.mxu0 0
  %2152 = vmatpush1.bf16.msra.mxu0 0
  %2153 = vmatprep.subr.bf16.mxu0 0
  %2154 = vmatpush1.bf16.msra.mxu0 0
  %2155 = vmatprep.subr.bf16.mxu0 %v2133
  %2156 = vmatpush1.bf16.msra.mxu0 %v2130
  %2157 = vmatprep.subr.bf16.mxu0 0
  %2158 = vmatpush2.bf16.msra.mxu0 0
  %2159 = vmatprep.subr.bf16.mxu0 0
  %2160 = vmatpush2.bf16.msra.mxu0 0
  %2161 = vmatprep.subr.bf16.mxu0 0
  %2162 = vmatpush2.bf16.msra.mxu0 0
  %2163 = vmatprep.subr.bf16.mxu0 0
  %2164 = vmatpush2.bf16.msra.mxu0 0
  %2165 = vmatprep.subr.bf16.mxu0 0
  %2166 = vmatpush2.bf16.msra.mxu0 0
  %2167 = vmatprep.subr.bf16.mxu0 0
  %2168 = vmatpush2.bf16.msra.mxu0 0
  %2169 = vmatprep.subr.bf16.mxu0 0
  %2170 = vmatpush2.bf16.msra.mxu0 0
  %2171 = vmatprep.subr.bf16.mxu0 0
  %2172 = vmatpush2.bf16.msra.mxu0 0
  %2173 = vmatprep.mubr.bf16.mxu0 0
  %2174 = vmatmul.mubr.bf16.gmra.mxu0 %v2127
  %v2175 = vpop.f32.mrf.mxu0
  %v2176 = vadd.f32 0.0, %v2175
  %v2177 = vpop.f32.mrf.mxu0
  %v2178 = vadd.f32 0.0, %v2177
  %v2179 = vpop.f32.mrf.mxu0
  %v2180 = vpop.f32.mrf.mxu0
  %2181 = vdwg.mxu0
  %2182 = vmatprep.subr.bf16.mxu0 0
  %2183 = vmatpush1.bf16.msra.mxu0 0
  %2184 = vmatprep.subr.bf16.mxu0 0
  %2185 = vmatpush1.bf16.msra.mxu0 0
  %2186 = vmatprep.subr.bf16.mxu0 0
  %2187 = vmatpush1.bf16.msra.mxu0 0
  %2188 = vmatprep.subr.bf16.mxu0 0
  %2189 = vmatpush1.bf16.msra.mxu0 0
  %2190 = vmatprep.subr.bf16.mxu0 0
  %2191 = vmatpush1.bf16.msra.mxu0 0
  %2192 = vmatprep.subr.bf16.mxu0 0
  %2193 = vmatpush1.bf16.msra.mxu0 0
  %2194 = vmatprep.subr.bf16.mxu0 0
  %2195 = vmatpush1.bf16.msra.mxu0 0
  %2196 = vmatprep.subr.bf16.mxu0 %v2139
  %2197 = vmatpush1.bf16.msra.mxu0 %v2136
  %2198 = vmatprep.subr.bf16.mxu0 0
  %2199 = vmatpush2.bf16.msra.mxu0 0
  %2200 = vmatprep.subr.bf16.mxu0 0
  %2201 = vmatpush2.bf16.msra.mxu0 0
  %2202 = vmatprep.subr.bf16.mxu0 0
  %2203 = vmatpush2.bf16.msra.mxu0 0
  %2204 = vmatprep.subr.bf16.mxu0 0
  %2205 = vmatpush2.bf16.msra.mxu0 0
  %2206 = vmatprep.subr.bf16.mxu0 0
  %2207 = vmatpush2.bf16.msra.mxu0 0
  %2208 = vmatprep.subr.bf16.mxu0 0
  %2209 = vmatpush2.bf16.msra.mxu0 0
  %2210 = vmatprep.subr.bf16.mxu0 0
  %2211 = vmatpush2.bf16.msra.mxu0 0
  %2212 = vmatprep.subr.bf16.mxu0 0
  %2213 = vmatpush2.bf16.msra.mxu0 0
  %2214 = vmatprep.mubr.bf16.mxu0 0
  %2215 = vmatmul.mubr.bf16.gmra.mxu0 %v2127
  %v2216 = vpop.f32.mrf.mxu0
  %v2217 = vadd.f32 0.0, %v2216
  %v2218 = vpop.f32.mrf.mxu0
  %v2219 = vadd.f32 0.0, %v2218
  %v2220 = vpop.f32.mrf.mxu0
  %v2221 = vpop.f32.mrf.mxu0
  %2222 = vdwg.mxu0
  %v2223 = vadd.f32 %v2078, %v2176
  %v2224 = vadd.f32 %v2079, %v2178
  %v2225 = vadd.f32 %v2080, %v2217
  %v2226 = vadd.f32 %v2081, %v2219
  %2227 = vrot.lane.b32.xlu0 %v1397, 113
  %v2228 = vpop.permute.xlu0 %2227
  %2229 = vrot.lane.b32.xlu0 %v1398, 113
  %v2230 = vpop.permute.xlu0 %2229
  %2231 = vrot.lane.b32.xlu0 %v1399, 113
  %v2232 = vpop.permute.xlu0 %2231
  %2233 = vrot.lane.b32.xlu0 %v1400, 113
  %v2234 = vpop.permute.xlu0 %2233
  %v2235 = vsel %vm908, %v2232, %v2234
  %v2236 = vsel %vm908, %v2230, %v2232
  %v2237 = vsel %vm908, %v2228, %v2230
  %v2238 = vsel %vm908, %v2234, %v2228
  %v2239 = vld [vmem:[%s913] ss:$8 sm:$0xf]
  %v2241 = vlaneseq
  %v2242 = vshrl.u32 %v2241, 7
  %v2243 = vsub.s32 0, %v2242
  %v2244 = vrot.slane %v2239, %v2243
  %v2245 = vlaneseq
  %v2246 = vshrl.u32 %v2245, 7
  %v2247 = vsub.s32 1, %v2246
  %v2248 = vrot.slane %v2239, %v2247
  %v2249 = vlaneseq
  %v2250 = vshrl.u32 %v2249, 7
  %v2251 = vsub.s32 2, %v2250
  %v2252 = vrot.slane %v2239, %v2251
  %v2253 = vlaneseq
  %v2254 = vshrl.u32 %v2253, 7
  %v2255 = vsub.s32 3, %v2254
  %v2256 = vrot.slane %v2239, %v2255
  %v2261 = vmul.f32 %v2237, %v2244
  %v2262 = vmul.f32 %v2236, %v2248
  %v2263 = vmul.f32 %v2235, %v2252
  %v2264 = vmul.f32 %v2238, %v2256
  %s2265 = scalar_lea.vmem %s4, 30
  %v2266 = vld [vmem:[%s2265] sm:$0x3]
  %v2267 = vpack.c.bf16 %v2261, %v2261
  %v2268 = vpack.c.bf16 %v2262, %v2262
  %v2269 = vpack.c.bf16 %v2263, %v2263
  %v2270 = vpack.c.bf16 %v2264, %v2264
  %v2272 = vsel %vm1489, %v2266, 0
  %v2275 = vsel %vm1493, %v2267, 0
  %v2278 = vsel %vm1493, %v2268, 0
  %v2281 = vsel %vm1493, %v2269, 0
  %v2284 = vsel %vm1493, %v2270, 0
  %2286 = vmatprep.subr.bf16.mxu0 0
  %2287 = vmatpush1.bf16.msra.mxu0 0
  %2288 = vmatprep.subr.bf16.mxu0 0
  %2289 = vmatpush1.bf16.msra.mxu0 0
  %2290 = vmatprep.subr.bf16.mxu0 0
  %2291 = vmatpush1.bf16.msra.mxu0 0
  %2292 = vmatprep.subr.bf16.mxu0 0
  %2293 = vmatpush1.bf16.msra.mxu0 0
  %2294 = vmatprep.subr.bf16.mxu0 0
  %2295 = vmatpush1.bf16.msra.mxu0 0
  %2296 = vmatprep.subr.bf16.mxu0 0
  %2297 = vmatpush1.bf16.msra.mxu0 0
  %2298 = vmatprep.subr.bf16.mxu0 0
  %2299 = vmatpush1.bf16.msra.mxu0 0
  %2300 = vmatprep.subr.bf16.mxu0 %v2278
  %2301 = vmatpush1.bf16.msra.mxu0 %v2275
  %2302 = vmatprep.subr.bf16.mxu0 0
  %2303 = vmatpush2.bf16.msra.mxu0 0
  %2304 = vmatprep.subr.bf16.mxu0 0
  %2305 = vmatpush2.bf16.msra.mxu0 0
  %2306 = vmatprep.subr.bf16.mxu0 0
  %2307 = vmatpush2.bf16.msra.mxu0 0
  %2308 = vmatprep.subr.bf16.mxu0 0
  %2309 = vmatpush2.bf16.msra.mxu0 0
  %2310 = vmatprep.subr.bf16.mxu0 0
  %2311 = vmatpush2.bf16.msra.mxu0 0
  %2312 = vmatprep.subr.bf16.mxu0 0
  %2313 = vmatpush2.bf16.msra.mxu0 0
  %2314 = vmatprep.subr.bf16.mxu0 0
  %2315 = vmatpush2.bf16.msra.mxu0 0
  %2316 = vmatprep.subr.bf16.mxu0 0
  %2317 = vmatpush2.bf16.msra.mxu0 0
  %2318 = vmatprep.mubr.bf16.mxu0 0
  %2319 = vmatmul.mubr.bf16.gmra.mxu0 %v2272
  %v2320 = vpop.f32.mrf.mxu0
  %v2321 = vadd.f32 0.0, %v2320
  %v2322 = vpop.f32.mrf.mxu0
  %v2323 = vadd.f32 0.0, %v2322
  %v2324 = vpop.f32.mrf.mxu0
  %v2325 = vpop.f32.mrf.mxu0
  %2326 = vdwg.mxu0
  %2327 = vmatprep.subr.bf16.mxu0 0
  %2328 = vmatpush1.bf16.msra.mxu0 0
  %2329 = vmatprep.subr.bf16.mxu0 0
  %2330 = vmatpush1.bf16.msra.mxu0 0
  %2331 = vmatprep.subr.bf16.mxu0 0
  %2332 = vmatpush1.bf16.msra.mxu0 0
  %2333 = vmatprep.subr.bf16.mxu0 0
  %2334 = vmatpush1.bf16.msra.mxu0 0
  %2335 = vmatprep.subr.bf16.mxu0 0
  %2336 = vmatpush1.bf16.msra.mxu0 0
  %2337 = vmatprep.subr.bf16.mxu0 0
  %2338 = vmatpush1.bf16.msra.mxu0 0
  %2339 = vmatprep.subr.bf16.mxu0 0
  %2340 = vmatpush1.bf16.msra.mxu0 0
  %2341 = vmatprep.subr.bf16.mxu0 %v2284
  %2342 = vmatpush1.bf16.msra.mxu0 %v2281
  %2343 = vmatprep.subr.bf16.mxu0 0
  %2344 = vmatpush2.bf16.msra.mxu0 0
  %2345 = vmatprep.subr.bf16.mxu0 0
  %2346 = vmatpush2.bf16.msra.mxu0 0
  %2347 = vmatprep.subr.bf16.mxu0 0
  %2348 = vmatpush2.bf16.msra.mxu0 0
  %2349 = vmatprep.subr.bf16.mxu0 0
  %2350 = vmatpush2.bf16.msra.mxu0 0
  %2351 = vmatprep.subr.bf16.mxu0 0
  %2352 = vmatpush2.bf16.msra.mxu0 0
  %2353 = vmatprep.subr.bf16.mxu0 0
  %2354 = vmatpush2.bf16.msra.mxu0 0
  %2355 = vmatprep.subr.bf16.mxu0 0
  %2356 = vmatpush2.bf16.msra.mxu0 0
  %2357 = vmatprep.subr.bf16.mxu0 0
  %2358 = vmatpush2.bf16.msra.mxu0 0
  %2359 = vmatprep.mubr.bf16.mxu0 0
  %2360 = vmatmul.mubr.bf16.gmra.mxu0 %v2272
  %v2361 = vpop.f32.mrf.mxu0
  %v2362 = vadd.f32 0.0, %v2361
  %v2363 = vpop.f32.mrf.mxu0
  %v2364 = vadd.f32 0.0, %v2363
  %v2365 = vpop.f32.mrf.mxu0
  %v2366 = vpop.f32.mrf.mxu0
  %2367 = vdwg.mxu0
  %v2368 = vadd.f32 %v2223, %v2321
  %v2369 = vadd.f32 %v2224, %v2323
  %v2370 = vadd.f32 %v2225, %v2362
  %v2371 = vadd.f32 %v2226, %v2364
  %2372 = vrot.lane.b32.xlu0 %v1397, 112
  %v2373 = vpop.permute.xlu0 %2372
  %2374 = vrot.lane.b32.xlu0 %v1398, 112
  %v2375 = vpop.permute.xlu0 %2374
  %2376 = vrot.lane.b32.xlu0 %v1399, 112
  %v2377 = vpop.permute.xlu0 %2376
  %2378 = vrot.lane.b32.xlu0 %v1400, 112
  %v2379 = vpop.permute.xlu0 %2378
  %v2380 = vsel %vm1055, %v2377, %v2379
  %v2381 = vsel %vm1055, %v2375, %v2377
  %v2382 = vsel %vm1055, %v2373, %v2375
  %v2383 = vsel %vm1055, %v2379, %v2373
  %v2384 = vld [vmem:[%s1060] ss:$8 sm:$0xf]
  %v2386 = vlaneseq
  %v2387 = vshrl.u32 %v2386, 7
  %v2388 = vsub.s32 0, %v2387
  %v2389 = vrot.slane %v2384, %v2388
  %v2390 = vlaneseq
  %v2391 = vshrl.u32 %v2390, 7
  %v2392 = vsub.s32 1, %v2391
  %v2393 = vrot.slane %v2384, %v2392
  %v2394 = vlaneseq
  %v2395 = vshrl.u32 %v2394, 7
  %v2396 = vsub.s32 2, %v2395
  %v2397 = vrot.slane %v2384, %v2396
  %v2398 = vlaneseq
  %v2399 = vshrl.u32 %v2398, 7
  %v2400 = vsub.s32 3, %v2399
  %v2401 = vrot.slane %v2384, %v2400
  %v2406 = vmul.f32 %v2382, %v2389
  %v2407 = vmul.f32 %v2381, %v2393
  %v2408 = vmul.f32 %v2380, %v2397
  %v2409 = vmul.f32 %v2383, %v2401
  %s2410 = scalar_lea.vmem %s4, 32
  %v2411 = vld [vmem:[%s2410] sm:$0x3]
  %v2412 = vpack.c.bf16 %v2406, %v2406
  %v2413 = vpack.c.bf16 %v2407, %v2407
  %v2414 = vpack.c.bf16 %v2408, %v2408
  %v2415 = vpack.c.bf16 %v2409, %v2409
  %v2417 = vsel %vm1489, %v2411, 0
  %v2420 = vsel %vm1493, %v2412, 0
  %v2423 = vsel %vm1493, %v2413, 0
  %v2426 = vsel %vm1493, %v2414, 0
  %v2429 = vsel %vm1493, %v2415, 0
  %2431 = vmatprep.subr.bf16.mxu0 0
  %2432 = vmatpush1.bf16.msra.mxu0 0
  %2433 = vmatprep.subr.bf16.mxu0 0
  %2434 = vmatpush1.bf16.msra.mxu0 0
  %2435 = vmatprep.subr.bf16.mxu0 0
  %2436 = vmatpush1.bf16.msra.mxu0 0
  %2437 = vmatprep.subr.bf16.mxu0 0
  %2438 = vmatpush1.bf16.msra.mxu0 0
  %2439 = vmatprep.subr.bf16.mxu0 0
  %2440 = vmatpush1.bf16.msra.mxu0 0
  %2441 = vmatprep.subr.bf16.mxu0 0
  %2442 = vmatpush1.bf16.msra.mxu0 0
  %2443 = vmatprep.subr.bf16.mxu0 0
  %2444 = vmatpush1.bf16.msra.mxu0 0
  %2445 = vmatprep.subr.bf16.mxu0 %v2423
  %2446 = vmatpush1.bf16.msra.mxu0 %v2420
  %2447 = vmatprep.subr.bf16.mxu0 0
  %2448 = vmatpush2.bf16.msra.mxu0 0
  %2449 = vmatprep.subr.bf16.mxu0 0
  %2450 = vmatpush2.bf16.msra.mxu0 0
  %2451 = vmatprep.subr.bf16.mxu0 0
  %2452 = vmatpush2.bf16.msra.mxu0 0
  %2453 = vmatprep.subr.bf16.mxu0 0
  %2454 = vmatpush2.bf16.msra.mxu0 0
  %2455 = vmatprep.subr.bf16.mxu0 0
  %2456 = vmatpush2.bf16.msra.mxu0 0
  %2457 = vmatprep.subr.bf16.mxu0 0
  %2458 = vmatpush2.bf16.msra.mxu0 0
  %2459 = vmatprep.subr.bf16.mxu0 0
  %2460 = vmatpush2.bf16.msra.mxu0 0
  %2461 = vmatprep.subr.bf16.mxu0 0
  %2462 = vmatpush2.bf16.msra.mxu0 0
  %2463 = vmatprep.mubr.bf16.mxu0 0
  %2464 = vmatmul.mubr.bf16.gmra.mxu0 %v2417
  %v2465 = vpop.f32.mrf.mxu0
  %v2466 = vadd.f32 0.0, %v2465
  %v2467 = vpop.f32.mrf.mxu0
  %v2468 = vadd.f32 0.0, %v2467
  %v2469 = vpop.f32.mrf.mxu0
  %v2470 = vpop.f32.mrf.mxu0
  %2471 = vdwg.mxu0
  %2472 = vmatprep.subr.bf16.mxu0 0
  %2473 = vmatpush1.bf16.msra.mxu0 0
  %2474 = vmatprep.subr.bf16.mxu0 0
  %2475 = vmatpush1.bf16.msra.mxu0 0
  %2476 = vmatprep.subr.bf16.mxu0 0
  %2477 = vmatpush1.bf16.msra.mxu0 0
  %2478 = vmatprep.subr.bf16.mxu0 0
  %2479 = vmatpush1.bf16.msra.mxu0 0
  %2480 = vmatprep.subr.bf16.mxu0 0
  %2481 = vmatpush1.bf16.msra.mxu0 0
  %2482 = vmatprep.subr.bf16.mxu0 0
  %2483 = vmatpush1.bf16.msra.mxu0 0
  %2484 = vmatprep.subr.bf16.mxu0 0
  %2485 = vmatpush1.bf16.msra.mxu0 0
  %2486 = vmatprep.subr.bf16.mxu0 %v2429
  %2487 = vmatpush1.bf16.msra.mxu0 %v2426
  %2488 = vmatprep.subr.bf16.mxu0 0
  %2489 = vmatpush2.bf16.msra.mxu0 0
  %2490 = vmatprep.subr.bf16.mxu0 0
  %2491 = vmatpush2.bf16.msra.mxu0 0
  %2492 = vmatprep.subr.bf16.mxu0 0
  %2493 = vmatpush2.bf16.msra.mxu0 0
  %2494 = vmatprep.subr.bf16.mxu0 0
  %2495 = vmatpush2.bf16.msra.mxu0 0
  %2496 = vmatprep.subr.bf16.mxu0 0
  %2497 = vmatpush2.bf16.msra.mxu0 0
  %2498 = vmatprep.subr.bf16.mxu0 0
  %2499 = vmatpush2.bf16.msra.mxu0 0
  %2500 = vmatprep.subr.bf16.mxu0 0
  %2501 = vmatpush2.bf16.msra.mxu0 0
  %2502 = vmatprep.subr.bf16.mxu0 0
  %2503 = vmatpush2.bf16.msra.mxu0 0
  %2504 = vmatprep.mubr.bf16.mxu0 0
  %2505 = vmatmul.mubr.bf16.gmra.mxu0 %v2417
  %v2506 = vpop.f32.mrf.mxu0
  %v2507 = vadd.f32 0.0, %v2506
  %v2508 = vpop.f32.mrf.mxu0
  %v2509 = vadd.f32 0.0, %v2508
  %v2510 = vpop.f32.mrf.mxu0
  %v2511 = vpop.f32.mrf.mxu0
  %2512 = vdwg.mxu0
  %v2513 = vadd.f32 %v2368, %v2466
  %v2514 = vadd.f32 %v2369, %v2468
  %v2515 = vadd.f32 %v2370, %v2507
  %v2516 = vadd.f32 %v2371, %v2509
  %2517 = vrot.lane.b32.xlu0 %v1397, 111
  %v2518 = vpop.permute.xlu0 %2517
  %2519 = vrot.lane.b32.xlu0 %v1398, 111
  %v2520 = vpop.permute.xlu0 %2519
  %2521 = vrot.lane.b32.xlu0 %v1399, 111
  %v2522 = vpop.permute.xlu0 %2521
  %2523 = vrot.lane.b32.xlu0 %v1400, 111
  %v2524 = vpop.permute.xlu0 %2523
  %v2525 = vsel %vm1202, %v2522, %v2524
  %v2526 = vsel %vm1202, %v2520, %v2522
  %v2527 = vsel %vm1202, %v2518, %v2520
  %v2528 = vsel %vm1202, %v2524, %v2518
  %v2529 = vld [vmem:[%s1207] ss:$8 sm:$0xf]
  %v2531 = vlaneseq
  %v2532 = vshrl.u32 %v2531, 7
  %v2533 = vsub.s32 0, %v2532
  %v2534 = vrot.slane %v2529, %v2533
  %v2535 = vlaneseq
  %v2536 = vshrl.u32 %v2535, 7
  %v2537 = vsub.s32 1, %v2536
  %v2538 = vrot.slane %v2529, %v2537
  %v2539 = vlaneseq
  %v2540 = vshrl.u32 %v2539, 7
  %v2541 = vsub.s32 2, %v2540
  %v2542 = vrot.slane %v2529, %v2541
  %v2543 = vlaneseq
  %v2544 = vshrl.u32 %v2543, 7
  %v2545 = vsub.s32 3, %v2544
  %v2546 = vrot.slane %v2529, %v2545
  %v2551 = vmul.f32 %v2527, %v2534
  %v2552 = vmul.f32 %v2526, %v2538
  %v2553 = vmul.f32 %v2525, %v2542
  %v2554 = vmul.f32 %v2528, %v2546
  %s2555 = scalar_lea.vmem %s4, 34
  %v2556 = vld [vmem:[%s2555] sm:$0x3]
  %v2557 = vpack.c.bf16 %v2551, %v2551
  %v2558 = vpack.c.bf16 %v2552, %v2552
  %v2559 = vpack.c.bf16 %v2553, %v2553
  %v2560 = vpack.c.bf16 %v2554, %v2554
  %v2562 = vsel %vm1489, %v2556, 0
  %v2565 = vsel %vm1493, %v2557, 0
  %v2568 = vsel %vm1493, %v2558, 0
  %v2571 = vsel %vm1493, %v2559, 0
  %v2574 = vsel %vm1493, %v2560, 0
  %2576 = vmatprep.subr.bf16.mxu0 0
  %2577 = vmatpush1.bf16.msra.mxu0 0
  %2578 = vmatprep.subr.bf16.mxu0 0
  %2579 = vmatpush1.bf16.msra.mxu0 0
  %2580 = vmatprep.subr.bf16.mxu0 0
  %2581 = vmatpush1.bf16.msra.mxu0 0
  %2582 = vmatprep.subr.bf16.mxu0 0
  %2583 = vmatpush1.bf16.msra.mxu0 0
  %2584 = vmatprep.subr.bf16.mxu0 0
  %2585 = vmatpush1.bf16.msra.mxu0 0
  %2586 = vmatprep.subr.bf16.mxu0 0
  %2587 = vmatpush1.bf16.msra.mxu0 0
  %2588 = vmatprep.subr.bf16.mxu0 0
  %2589 = vmatpush1.bf16.msra.mxu0 0
  %2590 = vmatprep.subr.bf16.mxu0 %v2568
  %2591 = vmatpush1.bf16.msra.mxu0 %v2565
  %2592 = vmatprep.subr.bf16.mxu0 0
  %2593 = vmatpush2.bf16.msra.mxu0 0
  %2594 = vmatprep.subr.bf16.mxu0 0
  %2595 = vmatpush2.bf16.msra.mxu0 0
  %2596 = vmatprep.subr.bf16.mxu0 0
  %2597 = vmatpush2.bf16.msra.mxu0 0
  %2598 = vmatprep.subr.bf16.mxu0 0
  %2599 = vmatpush2.bf16.msra.mxu0 0
  %2600 = vmatprep.subr.bf16.mxu0 0
  %2601 = vmatpush2.bf16.msra.mxu0 0
  %2602 = vmatprep.subr.bf16.mxu0 0
  %2603 = vmatpush2.bf16.msra.mxu0 0
  %2604 = vmatprep.subr.bf16.mxu0 0
  %2605 = vmatpush2.bf16.msra.mxu0 0
  %2606 = vmatprep.subr.bf16.mxu0 0
  %2607 = vmatpush2.bf16.msra.mxu0 0
  %2608 = vmatprep.mubr.bf16.mxu0 0
  %2609 = vmatmul.mubr.bf16.gmra.mxu0 %v2562
  %v2610 = vpop.f32.mrf.mxu0
  %v2611 = vadd.f32 0.0, %v2610
  %v2612 = vpop.f32.mrf.mxu0
  %v2613 = vadd.f32 0.0, %v2612
  %v2614 = vpop.f32.mrf.mxu0
  %v2615 = vpop.f32.mrf.mxu0
  %2616 = vdwg.mxu0
  %2617 = vmatprep.subr.bf16.mxu0 0
  %2618 = vmatpush1.bf16.msra.mxu0 0
  %2619 = vmatprep.subr.bf16.mxu0 0
  %2620 = vmatpush1.bf16.msra.mxu0 0
  %2621 = vmatprep.subr.bf16.mxu0 0
  %2622 = vmatpush1.bf16.msra.mxu0 0
  %2623 = vmatprep.subr.bf16.mxu0 0
  %2624 = vmatpush1.bf16.msra.mxu0 0
  %2625 = vmatprep.subr.bf16.mxu0 0
  %2626 = vmatpush1.bf16.msra.mxu0 0
  %2627 = vmatprep.subr.bf16.mxu0 0
  %2628 = vmatpush1.bf16.msra.mxu0 0
  %2629 = vmatprep.subr.bf16.mxu0 0
  %2630 = vmatpush1.bf16.msra.mxu0 0
  %2631 = vmatprep.subr.bf16.mxu0 %v2574
  %2632 = vmatpush1.bf16.msra.mxu0 %v2571
  %2633 = vmatprep.subr.bf16.mxu0 0
  %2634 = vmatpush2.bf16.msra.mxu0 0
  %2635 = vmatprep.subr.bf16.mxu0 0
  %2636 = vmatpush2.bf16.msra.mxu0 0
  %2637 = vmatprep.subr.bf16.mxu0 0
  %2638 = vmatpush2.bf16.msra.mxu0 0
  %2639 = vmatprep.subr.bf16.mxu0 0
  %2640 = vmatpush2.bf16.msra.mxu0 0
  %2641 = vmatprep.subr.bf16.mxu0 0
  %2642 = vmatpush2.bf16.msra.mxu0 0
  %2643 = vmatprep.subr.bf16.mxu0 0
  %2644 = vmatpush2.bf16.msra.mxu0 0
  %2645 = vmatprep.subr.bf16.mxu0 0
  %2646 = vmatpush2.bf16.msra.mxu0 0
  %2647 = vmatprep.subr.bf16.mxu0 0
  %2648 = vmatpush2.bf16.msra.mxu0 0
  %2649 = vmatprep.mubr.bf16.mxu0 0
  %2650 = vmatmul.mubr.bf16.gmra.mxu0 %v2562
  %v2651 = vpop.f32.mrf.mxu0
  %v2652 = vadd.f32 0.0, %v2651
  %v2653 = vpop.f32.mrf.mxu0
  %v2654 = vadd.f32 0.0, %v2653
  %v2655 = vpop.f32.mrf.mxu0
  %v2656 = vpop.f32.mrf.mxu0
  %2657 = vdwg.mxu0
  %v2658 = vadd.f32 %v2513, %v2611
  %v2659 = vadd.f32 %v2514, %v2613
  %v2660 = vadd.f32 %v2515, %v2652
  %v2661 = vadd.f32 %v2516, %v2654
  %s2662 = scalar_lea.vmem %s5, 4
  %v2663 = vld [vmem:[%s2662] sm:$0xf]
  %2665 = vset.pattern.permute.xlu0 0
  %2666 = vperm.xlu0 %2665, %v2663
  %v2667 = vpop.permute.xlu0 %2666
  %v2669 = vadd.f32 %v2658, %v2667
  %v2670 = vadd.f32 %v2659, %v2667
  %v2671 = vadd.f32 %v2660, %v2667
  %v2672 = vadd.f32 %v2661, %v2667
  %v2677 = vrot.slane %v2669, 4
  %v2678 = vrot.slane %v2670, 4
  %v2679 = vrot.slane %v2671, 4
  %v2680 = vrot.slane %v2672, 4
  %2685 = vst [vmem:[%s6] sm:$0xf0] %v2677
  %2686 = vst [vmem:[%s6 + $0x8] sm:$0xf0] %v2678
  %2687 = vst [vmem:[%s6 + $0x10] sm:$0xf0] %v2679
  %2688 = vst [vmem:[%s6 + $0x18] sm:$0xf0] %v2680
  %2689 = vst [vmem:[#allocation2 + $0x20] sm:$0xf] %v2669
  %2690 = vst [vmem:[#allocation2 + $0x28] sm:$0xf] %v2670
  %2691 = vst [vmem:[#allocation2 + $0x30] sm:$0xf] %v2671
  %2692 = vst [vmem:[#allocation2 + $0x38] sm:$0xf] %v2672
  %v2693 = vld [vmem:[#allocation2] sm:$0xff]
  %v2694 = vld [vmem:[#allocation2 + $0x8] sm:$0xff]
  %v2695 = vld [vmem:[#allocation2 + $0x10] sm:$0xff]
  %v2696 = vld [vmem:[#allocation2 + $0x18] sm:$0xff]
  %v2697 = vld [vmem:[#allocation2 + $0x20] sm:$0xf]
  %v2698 = vld [vmem:[#allocation2 + $0x28] sm:$0xf]
  %v2699 = vld [vmem:[#allocation2 + $0x30] sm:$0xf]
  %v2700 = vld [vmem:[#allocation2 + $0x38] sm:$0xf]
  %s2701 = scalar_lea.vmem %s2, 32
  %v2702 = vld [vmem:[%s2701] sm:$0xff]
  %v2703 = vld [vmem:[%s2701 + $0x8] sm:$0xf]
  %2705 = vset.pattern.permute.xlu0 0
  %2706 = vperm.xlu0 %2705, %v2702
  %v2707 = vpop.permute.xlu0 %2706
  %2710 = vset.pattern.permute.xlu0 0
  %2711 = vperm.xlu0 %2710, %v2703
  %v2712 = vpop.permute.xlu0 %2711
  %v2714 = vmul.f32 %v2693, %v2707
  %v2715 = vmul.f32 %v2694, %v2707
  %v2716 = vmul.f32 %v2695, %v2707
  %v2717 = vmul.f32 %v2696, %v2707
  %v2718 = vmul.f32 %v2697, %v2712
  %v2719 = vmul.f32 %v2698, %v2712
  %v2720 = vmul.f32 %v2699, %v2712
  %v2721 = vmul.f32 %v2700, %v2712
  %s2722 = scalar_lea.vmem %s3, 32
  %v2723 = vld [vmem:[%s2722] sm:$0xff]
  %v2724 = vld [vmem:[%s2722 + $0x8] sm:$0xf]
  %2726 = vset.pattern.permute.xlu0 0
  %2727 = vperm.xlu0 %2726, %v2723
  %v2728 = vpop.permute.xlu0 %2727
  %2731 = vset.pattern.permute.xlu0 0
  %2732 = vperm.xlu0 %2731, %v2724
  %v2733 = vpop.permute.xlu0 %2732
  %v2735 = vadd.f32 %v2714, %v2728
  %v2736 = vadd.f32 %v2715, %v2728
  %v2737 = vadd.f32 %v2716, %v2728
  %v2738 = vadd.f32 %v2717, %v2728
  %v2739 = vadd.f32 %v2718, %v2733
  %v2740 = vadd.f32 %v2719, %v2733
  %v2741 = vadd.f32 %v2720, %v2733
  %v2742 = vadd.f32 %v2721, %v2733
  %v2743 = vmax.f32 %v2735, 0.0
  %v2744 = vmax.f32 %v2736, 0.0
  %v2745 = vmax.f32 %v2737, 0.0
  %v2746 = vmax.f32 %v2738, 0.0
  %v2747 = vmax.f32 %v2739, 0.0
  %v2748 = vmax.f32 %v2740, 0.0
  %v2749 = vmax.f32 %v2741, 0.0
  %v2750 = vmax.f32 %v2742, 0.0
  %2751 = vrot.lane.b32.xlu0 %v2743, 17
  %v2752 = vpop.permute.xlu0 %2751
  %2753 = vrot.lane.b32.xlu0 %v2747, 17
  %v2754 = vpop.permute.xlu0 %2753
  %2755 = vrot.lane.b32.xlu0 %v2744, 17
  %v2756 = vpop.permute.xlu0 %2755
  %2757 = vrot.lane.b32.xlu0 %v2748, 17
  %v2758 = vpop.permute.xlu0 %2757
  %2759 = vrot.lane.b32.xlu0 %v2745, 17
  %v2760 = vpop.permute.xlu0 %2759
  %2761 = vrot.lane.b32.xlu0 %v2749, 17
  %v2762 = vpop.permute.xlu0 %2761
  %2763 = vrot.lane.b32.xlu0 %v2746, 17
  %v2764 = vpop.permute.xlu0 %2763
  %2765 = vrot.lane.b32.xlu0 %v2750, 17
  %v2766 = vpop.permute.xlu0 %2765
  %v2767 = vsel %vm74, %v2760, %v2764
  %v2768 = vsel %vm74, %v2762, %v2766
  %v2769 = vsel %vm74, %v2756, %v2760
  %v2770 = vsel %vm74, %v2758, %v2762
  %v2771 = vsel %vm74, %v2752, %v2756
  %v2772 = vsel %vm74, %v2754, %v2758
  %v2773 = vsel %vm74, %v2764, %v2752
  %v2774 = vsel %vm74, %v2766, %v2754
  %v2775 = vld [vmem:[%s0] ss:$8 sm:$0xf]
  %v2777 = vlaneseq
  %v2778 = vshrl.u32 %v2777, 7
  %v2779 = vsub.s32 0, %v2778
  %v2780 = vrot.slane %v2775, %v2779
  %v2781 = vlaneseq
  %v2782 = vshrl.u32 %v2781, 7
  %v2783 = vsub.s32 1, %v2782
  %v2784 = vrot.slane %v2775, %v2783
  %v2785 = vlaneseq
  %v2786 = vshrl.u32 %v2785, 7
  %v2787 = vsub.s32 2, %v2786
  %v2788 = vrot.slane %v2775, %v2787
  %v2789 = vlaneseq
  %v2790 = vshrl.u32 %v2789, 7
  %v2791 = vsub.s32 3, %v2790
  %v2792 = vrot.slane %v2775, %v2791
  %v2797 = vmul.f32 %v2773, %v2780
  %v2798 = vmul.f32 %v2771, %v2784
  %v2799 = vmul.f32 %v2769, %v2788
  %v2800 = vmul.f32 %v2767, %v2792
  %v2801 = vmul.f32 %v2774, %v2780
  %v2802 = vmul.f32 %v2772, %v2784
  %v2803 = vmul.f32 %v2770, %v2788
  %v2804 = vmul.f32 %v2768, %v2792
  %s2805 = scalar_lea.vmem %s4, 36
  %v2806 = vld [vmem:[%s2805] sm:$0x3]
  %v2807 = vpack.c.bf16 %v2801, %v2797
  %v2808 = vpack.c.bf16 %v2802, %v2798
  %v2809 = vpack.c.bf16 %v2803, %v2799
  %v2810 = vpack.c.bf16 %v2804, %v2800
  %2811 = vrot.lane.b32.xlu0 %v2743, 16
  %v2812 = vpop.permute.xlu0 %2811
  %2813 = vrot.lane.b32.xlu0 %v2747, 16
  %v2814 = vpop.permute.xlu0 %2813
  %2815 = vrot.lane.b32.xlu0 %v2744, 16
  %v2816 = vpop.permute.xlu0 %2815
  %2817 = vrot.lane.b32.xlu0 %v2748, 16
  %v2818 = vpop.permute.xlu0 %2817
  %2819 = vrot.lane.b32.xlu0 %v2745, 16
  %v2820 = vpop.permute.xlu0 %2819
  %2821 = vrot.lane.b32.xlu0 %v2749, 16
  %v2822 = vpop.permute.xlu0 %2821
  %2823 = vrot.lane.b32.xlu0 %v2746, 16
  %v2824 = vpop.permute.xlu0 %2823
  %2825 = vrot.lane.b32.xlu0 %v2750, 16
  %v2826 = vpop.permute.xlu0 %2825
  %v2827 = vsel %vm118, %v2820, %v2824
  %v2828 = vsel %vm118, %v2822, %v2826
  %v2829 = vsel %vm118, %v2816, %v2820
  %v2830 = vsel %vm118, %v2818, %v2822
  %v2831 = vsel %vm118, %v2812, %v2816
  %v2832 = vsel %vm118, %v2814, %v2818
  %v2833 = vsel %vm118, %v2824, %v2812
  %v2834 = vsel %vm118, %v2826, %v2814
  %v2835 = vld [vmem:[%s123] ss:$8 sm:$0xf]
  %v2837 = vlaneseq
  %v2838 = vshrl.u32 %v2837, 7
  %v2839 = vsub.s32 0, %v2838
  %v2840 = vrot.slane %v2835, %v2839
  %v2841 = vlaneseq
  %v2842 = vshrl.u32 %v2841, 7
  %v2843 = vsub.s32 1, %v2842
  %v2844 = vrot.slane %v2835, %v2843
  %v2845 = vlaneseq
  %v2846 = vshrl.u32 %v2845, 7
  %v2847 = vsub.s32 2, %v2846
  %v2848 = vrot.slane %v2835, %v2847
  %v2849 = vlaneseq
  %v2850 = vshrl.u32 %v2849, 7
  %v2851 = vsub.s32 3, %v2850
  %v2852 = vrot.slane %v2835, %v2851
  %v2857 = vmul.f32 %v2833, %v2840
  %v2858 = vmul.f32 %v2831, %v2844
  %v2859 = vmul.f32 %v2829, %v2848
  %v2860 = vmul.f32 %v2827, %v2852
  %v2861 = vmul.f32 %v2834, %v2840
  %v2862 = vmul.f32 %v2832, %v2844
  %v2863 = vmul.f32 %v2830, %v2848
  %v2864 = vmul.f32 %v2828, %v2852
  %s2865 = scalar_lea.vmem %s4, 38
  %v2866 = vld [vmem:[%s2865] sm:$0x3]
  %v2867 = vpack.c.bf16 %v2861, %v2857
  %v2868 = vpack.c.bf16 %v2862, %v2858
  %v2869 = vpack.c.bf16 %v2863, %v2859
  %v2870 = vpack.c.bf16 %v2864, %v2860
  %vm2871 = vcmask 97280
  %v2873 = vsel %vm2871, %v2866, 0
  %vm2875 = vcmask 1045504
  %v2877 = vsel %vm2875, %v2867, 0
  %v2880 = vsel %vm2875, %v2868, 0
  %v2883 = vsel %vm2875, %v2869, 0
  %v2886 = vsel %vm2875, %v2870, 0
  %2888 = vmatprep.subr.bf16.mxu0 0
  %2889 = vmatpush1.bf16.msra.mxu0 0
  %2890 = vmatprep.subr.bf16.mxu0 0
  %2891 = vmatpush1.bf16.msra.mxu0 0
  %2892 = vmatprep.subr.bf16.mxu0 0
  %2893 = vmatpush1.bf16.msra.mxu0 0
  %2894 = vmatprep.subr.bf16.mxu0 0
  %2895 = vmatpush1.bf16.msra.mxu0 0
  %2896 = vmatprep.subr.bf16.mxu0 0
  %2897 = vmatpush1.bf16.msra.mxu0 0
  %2898 = vmatprep.subr.bf16.mxu0 0
  %2899 = vmatpush1.bf16.msra.mxu0 0
  %2900 = vmatprep.subr.bf16.mxu0 0
  %2901 = vmatpush1.bf16.msra.mxu0 0
  %2902 = vmatprep.subr.bf16.mxu0 %v2880
  %2903 = vmatpush1.bf16.msra.mxu0 %v2877
  %2904 = vmatprep.subr.bf16.mxu0 0
  %2905 = vmatpush2.bf16.msra.mxu0 0
  %2906 = vmatprep.subr.bf16.mxu0 0
  %2907 = vmatpush2.bf16.msra.mxu0 0
  %2908 = vmatprep.subr.bf16.mxu0 0
  %2909 = vmatpush2.bf16.msra.mxu0 0
  %2910 = vmatprep.subr.bf16.mxu0 0
  %2911 = vmatpush2.bf16.msra.mxu0 0
  %2912 = vmatprep.subr.bf16.mxu0 0
  %2913 = vmatpush2.bf16.msra.mxu0 0
  %2914 = vmatprep.subr.bf16.mxu0 0
  %2915 = vmatpush2.bf16.msra.mxu0 0
  %2916 = vmatprep.subr.bf16.mxu0 0
  %2917 = vmatpush2.bf16.msra.mxu0 0
  %2918 = vmatprep.subr.bf16.mxu0 0
  %2919 = vmatpush2.bf16.msra.mxu0 0
  %2920 = vmatprep.mubr.bf16.mxu0 0
  %2921 = vmatmul.mubr.bf16.gmra.mxu0 %v2873
  %v2922 = vpop.f32.mrf.mxu0
  %v2923 = vadd.f32 0.0, %v2922
  %v2924 = vpop.f32.mrf.mxu0
  %v2925 = vadd.f32 0.0, %v2924
  %v2926 = vpop.f32.mrf.mxu0
  %v2927 = vpop.f32.mrf.mxu0
  %2928 = vdwg.mxu0
  %2929 = vmatprep.subr.bf16.mxu0 0
  %2930 = vmatpush1.bf16.msra.mxu0 0
  %2931 = vmatprep.subr.bf16.mxu0 0
  %2932 = vmatpush1.bf16.msra.mxu0 0
  %2933 = vmatprep.subr.bf16.mxu0 0
  %2934 = vmatpush1.bf16.msra.mxu0 0
  %2935 = vmatprep.subr.bf16.mxu0 0
  %2936 = vmatpush1.bf16.msra.mxu0 0
  %2937 = vmatprep.subr.bf16.mxu0 0
  %2938 = vmatpush1.bf16.msra.mxu0 0
  %2939 = vmatprep.subr.bf16.mxu0 0
  %2940 = vmatpush1.bf16.msra.mxu0 0
  %2941 = vmatprep.subr.bf16.mxu0 0
  %2942 = vmatpush1.bf16.msra.mxu0 0
  %2943 = vmatprep.subr.bf16.mxu0 %v2886
  %2944 = vmatpush1.bf16.msra.mxu0 %v2883
  %2945 = vmatprep.subr.bf16.mxu0 0
  %2946 = vmatpush2.bf16.msra.mxu0 0
  %2947 = vmatprep.subr.bf16.mxu0 0
  %2948 = vmatpush2.bf16.msra.mxu0 0
  %2949 = vmatprep.subr.bf16.mxu0 0
  %2950 = vmatpush2.bf16.msra.mxu0 0
  %2951 = vmatprep.subr.bf16.mxu0 0
  %2952 = vmatpush2.bf16.msra.mxu0 0
  %2953 = vmatprep.subr.bf16.mxu0 0
  %2954 = vmatpush2.bf16.msra.mxu0 0
  %2955 = vmatprep.subr.bf16.mxu0 0
  %2956 = vmatpush2.bf16.msra.mxu0 0
  %2957 = vmatprep.subr.bf16.mxu0 0
  %2958 = vmatpush2.bf16.msra.mxu0 0
  %2959 = vmatprep.subr.bf16.mxu0 0
  %2960 = vmatpush2.bf16.msra.mxu0 0
  %2961 = vmatprep.mubr.bf16.mxu0 0
  %2962 = vmatmul.mubr.bf16.gmra.mxu0 %v2873
  %v2963 = vpop.f32.mrf.mxu0
  %v2964 = vadd.f32 0.0, %v2963
  %v2965 = vpop.f32.mrf.mxu0
  %v2966 = vadd.f32 0.0, %v2965
  %v2967 = vpop.f32.mrf.mxu0
  %v2968 = vpop.f32.mrf.mxu0
  %2969 = vdwg.mxu0
  %v2971 = vsel %vm2871, %v2806, 0
  %v2974 = vsel %vm2875, %v2807, 0
  %v2977 = vsel %vm2875, %v2808, 0
  %v2980 = vsel %vm2875, %v2809, 0
  %v2983 = vsel %vm2875, %v2810, 0
  %2985 = vmatprep.subr.bf16.mxu0 0
  %2986 = vmatpush1.bf16.msra.mxu0 0
  %2987 = vmatprep.subr.bf16.mxu0 0
  %2988 = vmatpush1.bf16.msra.mxu0 0
  %2989 = vmatprep.subr.bf16.mxu0 0
  %2990 = vmatpush1.bf16.msra.mxu0 0
  %2991 = vmatprep.subr.bf16.mxu0 0
  %2992 = vmatpush1.bf16.msra.mxu0 0
  %2993 = vmatprep.subr.bf16.mxu0 0
  %2994 = vmatpush1.bf16.msra.mxu0 0
  %2995 = vmatprep.subr.bf16.mxu0 0
  %2996 = vmatpush1.bf16.msra.mxu0 0
  %2997 = vmatprep.subr.bf16.mxu0 0
  %2998 = vmatpush1.bf16.msra.mxu0 0
  %2999 = vmatprep.subr.bf16.mxu0 %v2977
  %3000 = vmatpush1.bf16.msra.mxu0 %v2974
  %3001 = vmatprep.subr.bf16.mxu0 0
  %3002 = vmatpush2.bf16.msra.mxu0 0
  %3003 = vmatprep.subr.bf16.mxu0 0
  %3004 = vmatpush2.bf16.msra.mxu0 0
  %3005 = vmatprep.subr.bf16.mxu0 0
  %3006 = vmatpush2.bf16.msra.mxu0 0
  %3007 = vmatprep.subr.bf16.mxu0 0
  %3008 = vmatpush2.bf16.msra.mxu0 0
  %3009 = vmatprep.subr.bf16.mxu0 0
  %3010 = vmatpush2.bf16.msra.mxu0 0
  %3011 = vmatprep.subr.bf16.mxu0 0
  %3012 = vmatpush2.bf16.msra.mxu0 0
  %3013 = vmatprep.subr.bf16.mxu0 0
  %3014 = vmatpush2.bf16.msra.mxu0 0
  %3015 = vmatprep.subr.bf16.mxu0 0
  %3016 = vmatpush2.bf16.msra.mxu0 0
  %3017 = vmatprep.mubr.bf16.mxu0 0
  %3018 = vmatmul.mubr.bf16.gmra.mxu0 %v2971
  %v3019 = vpop.f32.mrf.mxu0
  %v3020 = vadd.f32 %v2923, %v3019
  %v3021 = vpop.f32.mrf.mxu0
  %v3022 = vadd.f32 %v2925, %v3021
  %v3023 = vpop.f32.mrf.mxu0
  %v3024 = vpop.f32.mrf.mxu0
  %3025 = vdwg.mxu0
  %3026 = vmatprep.subr.bf16.mxu0 0
  %3027 = vmatpush1.bf16.msra.mxu0 0
  %3028 = vmatprep.subr.bf16.mxu0 0
  %3029 = vmatpush1.bf16.msra.mxu0 0
  %3030 = vmatprep.subr.bf16.mxu0 0
  %3031 = vmatpush1.bf16.msra.mxu0 0
  %3032 = vmatprep.subr.bf16.mxu0 0
  %3033 = vmatpush1.bf16.msra.mxu0 0
  %3034 = vmatprep.subr.bf16.mxu0 0
  %3035 = vmatpush1.bf16.msra.mxu0 0
  %3036 = vmatprep.subr.bf16.mxu0 0
  %3037 = vmatpush1.bf16.msra.mxu0 0
  %3038 = vmatprep.subr.bf16.mxu0 0
  %3039 = vmatpush1.bf16.msra.mxu0 0
  %3040 = vmatprep.subr.bf16.mxu0 %v2983
  %3041 = vmatpush1.bf16.msra.mxu0 %v2980
  %3042 = vmatprep.subr.bf16.mxu0 0
  %3043 = vmatpush2.bf16.msra.mxu0 0
  %3044 = vmatprep.subr.bf16.mxu0 0
  %3045 = vmatpush2.bf16.msra.mxu0 0
  %3046 = vmatprep.subr.bf16.mxu0 0
  %3047 = vmatpush2.bf16.msra.mxu0 0
  %3048 = vmatprep.subr.bf16.mxu0 0
  %3049 = vmatpush2.bf16.msra.mxu0 0
  %3050 = vmatprep.subr.bf16.mxu0 0
  %3051 = vmatpush2.bf16.msra.mxu0 0
  %3052 = vmatprep.subr.bf16.mxu0 0
  %3053 = vmatpush2.bf16.msra.mxu0 0
  %3054 = vmatprep.subr.bf16.mxu0 0
  %3055 = vmatpush2.bf16.msra.mxu0 0
  %3056 = vmatprep.subr.bf16.mxu0 0
  %3057 = vmatpush2.bf16.msra.mxu0 0
  %3058 = vmatprep.mubr.bf16.mxu0 0
  %3059 = vmatmul.mubr.bf16.gmra.mxu0 %v2971
  %v3060 = vpop.f32.mrf.mxu0
  %v3061 = vadd.f32 %v2964, %v3060
  %v3062 = vpop.f32.mrf.mxu0
  %v3063 = vadd.f32 %v2966, %v3062
  %v3064 = vpop.f32.mrf.mxu0
  %v3065 = vpop.f32.mrf.mxu0
  %3066 = vdwg.mxu0
  %3067 = vrot.lane.b32.xlu0 %v2743, 15
  %v3068 = vpop.permute.xlu0 %3067
  %3069 = vrot.lane.b32.xlu0 %v2747, 15
  %v3070 = vpop.permute.xlu0 %3069
  %3071 = vrot.lane.b32.xlu0 %v2744, 15
  %v3072 = vpop.permute.xlu0 %3071
  %3073 = vrot.lane.b32.xlu0 %v2748, 15
  %v3074 = vpop.permute.xlu0 %3073
  %3075 = vrot.lane.b32.xlu0 %v2745, 15
  %v3076 = vpop.permute.xlu0 %3075
  %3077 = vrot.lane.b32.xlu0 %v2749, 15
  %v3078 = vpop.permute.xlu0 %3077
  %3079 = vrot.lane.b32.xlu0 %v2746, 15
  %v3080 = vpop.permute.xlu0 %3079
  %3081 = vrot.lane.b32.xlu0 %v2750, 15
  %v3082 = vpop.permute.xlu0 %3081
  %v3083 = vsel %vm360, %v3076, %v3080
  %v3084 = vsel %vm360, %v3078, %v3082
  %v3085 = vsel %vm360, %v3072, %v3076
  %v3086 = vsel %vm360, %v3074, %v3078
  %v3087 = vsel %vm360, %v3068, %v3072
  %v3088 = vsel %vm360, %v3070, %v3074
  %v3089 = vsel %vm360, %v3080, %v3068
  %v3090 = vsel %vm360, %v3082, %v3070
  %v3091 = vld [vmem:[%s365] ss:$8 sm:$0xf]
  %v3093 = vlaneseq
  %v3094 = vshrl.u32 %v3093, 7
  %v3095 = vsub.s32 0, %v3094
  %v3096 = vrot.slane %v3091, %v3095
  %v3097 = vlaneseq
  %v3098 = vshrl.u32 %v3097, 7
  %v3099 = vsub.s32 1, %v3098
  %v3100 = vrot.slane %v3091, %v3099
  %v3101 = vlaneseq
  %v3102 = vshrl.u32 %v3101, 7
  %v3103 = vsub.s32 2, %v3102
  %v3104 = vrot.slane %v3091, %v3103
  %v3105 = vlaneseq
  %v3106 = vshrl.u32 %v3105, 7
  %v3107 = vsub.s32 3, %v3106
  %v3108 = vrot.slane %v3091, %v3107
  %v3113 = vmul.f32 %v3089, %v3096
  %v3114 = vmul.f32 %v3087, %v3100
  %v3115 = vmul.f32 %v3085, %v3104
  %v3116 = vmul.f32 %v3083, %v3108
  %v3117 = vmul.f32 %v3090, %v3096
  %v3118 = vmul.f32 %v3088, %v3100
  %v3119 = vmul.f32 %v3086, %v3104
  %v3120 = vmul.f32 %v3084, %v3108
  %s3121 = scalar_lea.vmem %s4, 40
  %v3122 = vld [vmem:[%s3121] sm:$0x3]
  %v3123 = vpack.c.bf16 %v3117, %v3113
  %v3124 = vpack.c.bf16 %v3118, %v3114
  %v3125 = vpack.c.bf16 %v3119, %v3115
  %v3126 = vpack.c.bf16 %v3120, %v3116
  %v3128 = vsel %vm2871, %v3122, 0
  %v3131 = vsel %vm2875, %v3123, 0
  %v3134 = vsel %vm2875, %v3124, 0
  %v3137 = vsel %vm2875, %v3125, 0
  %v3140 = vsel %vm2875, %v3126, 0
  %3142 = vmatprep.subr.bf16.mxu0 0
  %3143 = vmatpush1.bf16.msra.mxu0 0
  %3144 = vmatprep.subr.bf16.mxu0 0
  %3145 = vmatpush1.bf16.msra.mxu0 0
  %3146 = vmatprep.subr.bf16.mxu0 0
  %3147 = vmatpush1.bf16.msra.mxu0 0
  %3148 = vmatprep.subr.bf16.mxu0 0
  %3149 = vmatpush1.bf16.msra.mxu0 0
  %3150 = vmatprep.subr.bf16.mxu0 0
  %3151 = vmatpush1.bf16.msra.mxu0 0
  %3152 = vmatprep.subr.bf16.mxu0 0
  %3153 = vmatpush1.bf16.msra.mxu0 0
  %3154 = vmatprep.subr.bf16.mxu0 0
  %3155 = vmatpush1.bf16.msra.mxu0 0
  %3156 = vmatprep.subr.bf16.mxu0 %v3134
  %3157 = vmatpush1.bf16.msra.mxu0 %v3131
  %3158 = vmatprep.subr.bf16.mxu0 0
  %3159 = vmatpush2.bf16.msra.mxu0 0
  %3160 = vmatprep.subr.bf16.mxu0 0
  %3161 = vmatpush2.bf16.msra.mxu0 0
  %3162 = vmatprep.subr.bf16.mxu0 0
  %3163 = vmatpush2.bf16.msra.mxu0 0
  %3164 = vmatprep.subr.bf16.mxu0 0
  %3165 = vmatpush2.bf16.msra.mxu0 0
  %3166 = vmatprep.subr.bf16.mxu0 0
  %3167 = vmatpush2.bf16.msra.mxu0 0
  %3168 = vmatprep.subr.bf16.mxu0 0
  %3169 = vmatpush2.bf16.msra.mxu0 0
  %3170 = vmatprep.subr.bf16.mxu0 0
  %3171 = vmatpush2.bf16.msra.mxu0 0
  %3172 = vmatprep.subr.bf16.mxu0 0
  %3173 = vmatpush2.bf16.msra.mxu0 0
  %3174 = vmatprep.mubr.bf16.mxu0 0
  %3175 = vmatmul.mubr.bf16.gmra.mxu0 %v3128
  %v3176 = vpop.f32.mrf.mxu0
  %v3177 = vadd.f32 0.0, %v3176
  %v3178 = vpop.f32.mrf.mxu0
  %v3179 = vadd.f32 0.0, %v3178
  %v3180 = vpop.f32.mrf.mxu0
  %v3181 = vpop.f32.mrf.mxu0
  %3182 = vdwg.mxu0
  %3183 = vmatprep.subr.bf16.mxu0 0
  %3184 = vmatpush1.bf16.msra.mxu0 0
  %3185 = vmatprep.subr.bf16.mxu0 0
  %3186 = vmatpush1.bf16.msra.mxu0 0
  %3187 = vmatprep.subr.bf16.mxu0 0
  %3188 = vmatpush1.bf16.msra.mxu0 0
  %3189 = vmatprep.subr.bf16.mxu0 0
  %3190 = vmatpush1.bf16.msra.mxu0 0
  %3191 = vmatprep.subr.bf16.mxu0 0
  %3192 = vmatpush1.bf16.msra.mxu0 0
  %3193 = vmatprep.subr.bf16.mxu0 0
  %3194 = vmatpush1.bf16.msra.mxu0 0
  %3195 = vmatprep.subr.bf16.mxu0 0
  %3196 = vmatpush1.bf16.msra.mxu0 0
  %3197 = vmatprep.subr.bf16.mxu0 %v3140
  %3198 = vmatpush1.bf16.msra.mxu0 %v3137
  %3199 = vmatprep.subr.bf16.mxu0 0
  %3200 = vmatpush2.bf16.msra.mxu0 0
  %3201 = vmatprep.subr.bf16.mxu0 0
  %3202 = vmatpush2.bf16.msra.mxu0 0
  %3203 = vmatprep.subr.bf16.mxu0 0
  %3204 = vmatpush2.bf16.msra.mxu0 0
  %3205 = vmatprep.subr.bf16.mxu0 0
  %3206 = vmatpush2.bf16.msra.mxu0 0
  %3207 = vmatprep.subr.bf16.mxu0 0
  %3208 = vmatpush2.bf16.msra.mxu0 0
  %3209 = vmatprep.subr.bf16.mxu0 0
  %3210 = vmatpush2.bf16.msra.mxu0 0
  %3211 = vmatprep.subr.bf16.mxu0 0
  %3212 = vmatpush2.bf16.msra.mxu0 0
  %3213 = vmatprep.subr.bf16.mxu0 0
  %3214 = vmatpush2.bf16.msra.mxu0 0
  %3215 = vmatprep.mubr.bf16.mxu0 0
  %3216 = vmatmul.mubr.bf16.gmra.mxu0 %v3128
  %v3217 = vpop.f32.mrf.mxu0
  %v3218 = vadd.f32 0.0, %v3217
  %v3219 = vpop.f32.mrf.mxu0
  %v3220 = vadd.f32 0.0, %v3219
  %v3221 = vpop.f32.mrf.mxu0
  %v3222 = vpop.f32.mrf.mxu0
  %3223 = vdwg.mxu0
  %v3224 = vadd.f32 %v3020, %v3177
  %v3225 = vadd.f32 %v3022, %v3179
  %v3226 = vadd.f32 %v3061, %v3218
  %v3227 = vadd.f32 %v3063, %v3220
  %3228 = vrot.lane.b32.xlu0 %v2743, 1
  %v3229 = vpop.permute.xlu0 %3228
  %3230 = vrot.lane.b32.xlu0 %v2747, 1
  %v3231 = vpop.permute.xlu0 %3230
  %3232 = vrot.lane.b32.xlu0 %v2744, 1
  %v3233 = vpop.permute.xlu0 %3232
  %3234 = vrot.lane.b32.xlu0 %v2748, 1
  %v3235 = vpop.permute.xlu0 %3234
  %3236 = vrot.lane.b32.xlu0 %v2745, 1
  %v3237 = vpop.permute.xlu0 %3236
  %3238 = vrot.lane.b32.xlu0 %v2749, 1
  %v3239 = vpop.permute.xlu0 %3238
  %3240 = vrot.lane.b32.xlu0 %v2746, 1
  %v3241 = vpop.permute.xlu0 %3240
  %3242 = vrot.lane.b32.xlu0 %v2750, 1
  %v3243 = vpop.permute.xlu0 %3242
  %v3244 = vsel %vm507, %v3237, %v3241
  %v3245 = vsel %vm507, %v3239, %v3243
  %v3246 = vsel %vm507, %v3233, %v3237
  %v3247 = vsel %vm507, %v3235, %v3239
  %v3248 = vsel %vm507, %v3229, %v3233
  %v3249 = vsel %vm507, %v3231, %v3235
  %v3250 = vsel %vm507, %v3241, %v3229
  %v3251 = vsel %vm507, %v3243, %v3231
  %v3252 = vld [vmem:[%s512] ss:$8 sm:$0xf]
  %v3254 = vlaneseq
  %v3255 = vshrl.u32 %v3254, 7
  %v3256 = vsub.s32 0, %v3255
  %v3257 = vrot.slane %v3252, %v3256
  %v3258 = vlaneseq
  %v3259 = vshrl.u32 %v3258, 7
  %v3260 = vsub.s32 1, %v3259
  %v3261 = vrot.slane %v3252, %v3260
  %v3262 = vlaneseq
  %v3263 = vshrl.u32 %v3262, 7
  %v3264 = vsub.s32 2, %v3263
  %v3265 = vrot.slane %v3252, %v3264
  %v3266 = vlaneseq
  %v3267 = vshrl.u32 %v3266, 7
  %v3268 = vsub.s32 3, %v3267
  %v3269 = vrot.slane %v3252, %v3268
  %v3274 = vmul.f32 %v3250, %v3257
  %v3275 = vmul.f32 %v3248, %v3261
  %v3276 = vmul.f32 %v3246, %v3265
  %v3277 = vmul.f32 %v3244, %v3269
  %v3278 = vmul.f32 %v3251, %v3257
  %v3279 = vmul.f32 %v3249, %v3261
  %v3280 = vmul.f32 %v3247, %v3265
  %v3281 = vmul.f32 %v3245, %v3269
  %s3282 = scalar_lea.vmem %s4, 42
  %v3283 = vld [vmem:[%s3282] sm:$0x3]
  %v3284 = vpack.c.bf16 %v3278, %v3274
  %v3285 = vpack.c.bf16 %v3279, %v3275
  %v3286 = vpack.c.bf16 %v3280, %v3276
  %v3287 = vpack.c.bf16 %v3281, %v3277
  %v3289 = vsel %vm2871, %v3283, 0
  %v3292 = vsel %vm2875, %v3284, 0
  %v3295 = vsel %vm2875, %v3285, 0
  %v3298 = vsel %vm2875, %v3286, 0
  %v3301 = vsel %vm2875, %v3287, 0
  %3303 = vmatprep.subr.bf16.mxu0 0
  %3304 = vmatpush1.bf16.msra.mxu0 0
  %3305 = vmatprep.subr.bf16.mxu0 0
  %3306 = vmatpush1.bf16.msra.mxu0 0
  %3307 = vmatprep.subr.bf16.mxu0 0
  %3308 = vmatpush1.bf16.msra.mxu0 0
  %3309 = vmatprep.subr.bf16.mxu0 0
  %3310 = vmatpush1.bf16.msra.mxu0 0
  %3311 = vmatprep.subr.bf16.mxu0 0
  %3312 = vmatpush1.bf16.msra.mxu0 0
  %3313 = vmatprep.subr.bf16.mxu0 0
  %3314 = vmatpush1.bf16.msra.mxu0 0
  %3315 = vmatprep.subr.bf16.mxu0 0
  %3316 = vmatpush1.bf16.msra.mxu0 0
  %3317 = vmatprep.subr.bf16.mxu0 %v3295
  %3318 = vmatpush1.bf16.msra.mxu0 %v3292
  %3319 = vmatprep.subr.bf16.mxu0 0
  %3320 = vmatpush2.bf16.msra.mxu0 0
  %3321 = vmatprep.subr.bf16.mxu0 0
  %3322 = vmatpush2.bf16.msra.mxu0 0
  %3323 = vmatprep.subr.bf16.mxu0 0
  %3324 = vmatpush2.bf16.msra.mxu0 0
  %3325 = vmatprep.subr.bf16.mxu0 0
  %3326 = vmatpush2.bf16.msra.mxu0 0
  %3327 = vmatprep.subr.bf16.mxu0 0
  %3328 = vmatpush2.bf16.msra.mxu0 0
  %3329 = vmatprep.subr.bf16.mxu0 0
  %3330 = vmatpush2.bf16.msra.mxu0 0
  %3331 = vmatprep.subr.bf16.mxu0 0
  %3332 = vmatpush2.bf16.msra.mxu0 0
  %3333 = vmatprep.subr.bf16.mxu0 0
  %3334 = vmatpush2.bf16.msra.mxu0 0
  %3335 = vmatprep.mubr.bf16.mxu0 0
  %3336 = vmatmul.mubr.bf16.gmra.mxu0 %v3289
  %v3337 = vpop.f32.mrf.mxu0
  %v3338 = vadd.f32 0.0, %v3337
  %v3339 = vpop.f32.mrf.mxu0
  %v3340 = vadd.f32 0.0, %v3339
  %v3341 = vpop.f32.mrf.mxu0
  %v3342 = vpop.f32.mrf.mxu0
  %3343 = vdwg.mxu0
  %3344 = vmatprep.subr.bf16.mxu0 0
  %3345 = vmatpush1.bf16.msra.mxu0 0
  %3346 = vmatprep.subr.bf16.mxu0 0
  %3347 = vmatpush1.bf16.msra.mxu0 0
  %3348 = vmatprep.subr.bf16.mxu0 0
  %3349 = vmatpush1.bf16.msra.mxu0 0
  %3350 = vmatprep.subr.bf16.mxu0 0
  %3351 = vmatpush1.bf16.msra.mxu0 0
  %3352 = vmatprep.subr.bf16.mxu0 0
  %3353 = vmatpush1.bf16.msra.mxu0 0
  %3354 = vmatprep.subr.bf16.mxu0 0
  %3355 = vmatpush1.bf16.msra.mxu0 0
  %3356 = vmatprep.subr.bf16.mxu0 0
  %3357 = vmatpush1.bf16.msra.mxu0 0
  %3358 = vmatprep.subr.bf16.mxu0 %v3301
  %3359 = vmatpush1.bf16.msra.mxu0 %v3298
  %3360 = vmatprep.subr.bf16.mxu0 0
  %3361 = vmatpush2.bf16.msra.mxu0 0
  %3362 = vmatprep.subr.bf16.mxu0 0
  %3363 = vmatpush2.bf16.msra.mxu0 0
  %3364 = vmatprep.subr.bf16.mxu0 0
  %3365 = vmatpush2.bf16.msra.mxu0 0
  %3366 = vmatprep.subr.bf16.mxu0 0
  %3367 = vmatpush2.bf16.msra.mxu0 0
  %3368 = vmatprep.subr.bf16.mxu0 0
  %3369 = vmatpush2.bf16.msra.mxu0 0
  %3370 = vmatprep.subr.bf16.mxu0 0
  %3371 = vmatpush2.bf16.msra.mxu0 0
  %3372 = vmatprep.subr.bf16.mxu0 0
  %3373 = vmatpush2.bf16.msra.mxu0 0
  %3374 = vmatprep.subr.bf16.mxu0 0
  %3375 = vmatpush2.bf16.msra.mxu0 0
  %3376 = vmatprep.mubr.bf16.mxu0 0
  %3377 = vmatmul.mubr.bf16.gmra.mxu0 %v3289
  %v3378 = vpop.f32.mrf.mxu0
  %v3379 = vadd.f32 0.0, %v3378
  %v3380 = vpop.f32.mrf.mxu0
  %v3381 = vadd.f32 0.0, %v3380
  %v3382 = vpop.f32.mrf.mxu0
  %v3383 = vpop.f32.mrf.mxu0
  %3384 = vdwg.mxu0
  %v3385 = vadd.f32 %v3224, %v3338
  %v3386 = vadd.f32 %v3225, %v3340
  %v3387 = vadd.f32 %v3226, %v3379
  %v3388 = vadd.f32 %v3227, %v3381
  %s3389 = scalar_lea.vmem %s4, 44
  %v3390 = vld [vmem:[%s3389] sm:$0x3]
  %v3391 = vpack.c.bf16 %v2747, %v2743
  %v3392 = vpack.c.bf16 %v2748, %v2744
  %v3393 = vpack.c.bf16 %v2749, %v2745
  %v3394 = vpack.c.bf16 %v2750, %v2746
  %v3396 = vsel %vm2871, %v3390, 0
  %v3399 = vsel %vm2875, %v3391, 0
  %v3402 = vsel %vm2875, %v3392, 0
  %v3405 = vsel %vm2875, %v3393, 0
  %v3408 = vsel %vm2875, %v3394, 0
  %3410 = vmatprep.subr.bf16.mxu0 0
  %3411 = vmatpush1.bf16.msra.mxu0 0
  %3412 = vmatprep.subr.bf16.mxu0 0
  %3413 = vmatpush1.bf16.msra.mxu0 0
  %3414 = vmatprep.subr.bf16.mxu0 0
  %3415 = vmatpush1.bf16.msra.mxu0 0
  %3416 = vmatprep.subr.bf16.mxu0 0
  %3417 = vmatpush1.bf16.msra.mxu0 0
  %3418 = vmatprep.subr.bf16.mxu0 0
  %3419 = vmatpush1.bf16.msra.mxu0 0
  %3420 = vmatprep.subr.bf16.mxu0 0
  %3421 = vmatpush1.bf16.msra.mxu0 0
  %3422 = vmatprep.subr.bf16.mxu0 0
  %3423 = vmatpush1.bf16.msra.mxu0 0
  %3424 = vmatprep.subr.bf16.mxu0 %v3402
  %3425 = vmatpush1.bf16.msra.mxu0 %v3399
  %3426 = vmatprep.subr.bf16.mxu0 0
  %3427 = vmatpush2.bf16.msra.mxu0 0
  %3428 = vmatprep.subr.bf16.mxu0 0
  %3429 = vmatpush2.bf16.msra.mxu0 0
  %3430 = vmatprep.subr.bf16.mxu0 0
  %3431 = vmatpush2.bf16.msra.mxu0 0
  %3432 = vmatprep.subr.bf16.mxu0 0
  %3433 = vmatpush2.bf16.msra.mxu0 0
  %3434 = vmatprep.subr.bf16.mxu0 0
  %3435 = vmatpush2.bf16.msra.mxu0 0
  %3436 = vmatprep.subr.bf16.mxu0 0
  %3437 = vmatpush2.bf16.msra.mxu0 0
  %3438 = vmatprep.subr.bf16.mxu0 0
  %3439 = vmatpush2.bf16.msra.mxu0 0
  %3440 = vmatprep.subr.bf16.mxu0 0
  %3441 = vmatpush2.bf16.msra.mxu0 0
  %3442 = vmatprep.mubr.bf16.mxu0 0
  %3443 = vmatmul.mubr.bf16.gmra.mxu0 %v3396
  %v3444 = vpop.f32.mrf.mxu0
  %v3445 = vadd.f32 0.0, %v3444
  %v3446 = vpop.f32.mrf.mxu0
  %v3447 = vadd.f32 0.0, %v3446
  %v3448 = vpop.f32.mrf.mxu0
  %v3449 = vpop.f32.mrf.mxu0
  %3450 = vdwg.mxu0
  %3451 = vmatprep.subr.bf16.mxu0 0
  %3452 = vmatpush1.bf16.msra.mxu0 0
  %3453 = vmatprep.subr.bf16.mxu0 0
  %3454 = vmatpush1.bf16.msra.mxu0 0
  %3455 = vmatprep.subr.bf16.mxu0 0
  %3456 = vmatpush1.bf16.msra.mxu0 0
  %3457 = vmatprep.subr.bf16.mxu0 0
  %3458 = vmatpush1.bf16.msra.mxu0 0
  %3459 = vmatprep.subr.bf16.mxu0 0
  %3460 = vmatpush1.bf16.msra.mxu0 0
  %3461 = vmatprep.subr.bf16.mxu0 0
  %3462 = vmatpush1.bf16.msra.mxu0 0
  %3463 = vmatprep.subr.bf16.mxu0 0
  %3464 = vmatpush1.bf16.msra.mxu0 0
  %3465 = vmatprep.subr.bf16.mxu0 %v3408
  %3466 = vmatpush1.bf16.msra.mxu0 %v3405
  %3467 = vmatprep.subr.bf16.mxu0 0
  %3468 = vmatpush2.bf16.msra.mxu0 0
  %3469 = vmatprep.subr.bf16.mxu0 0
  %3470 = vmatpush2.bf16.msra.mxu0 0
  %3471 = vmatprep.subr.bf16.mxu0 0
  %3472 = vmatpush2.bf16.msra.mxu0 0
  %3473 = vmatprep.subr.bf16.mxu0 0
  %3474 = vmatpush2.bf16.msra.mxu0 0
  %3475 = vmatprep.subr.bf16.mxu0 0
  %3476 = vmatpush2.bf16.msra.mxu0 0
  %3477 = vmatprep.subr.bf16.mxu0 0
  %3478 = vmatpush2.bf16.msra.mxu0 0
  %3479 = vmatprep.subr.bf16.mxu0 0
  %3480 = vmatpush2.bf16.msra.mxu0 0
  %3481 = vmatprep.subr.bf16.mxu0 0
  %3482 = vmatpush2.bf16.msra.mxu0 0
  %3483 = vmatprep.mubr.bf16.mxu0 0
  %3484 = vmatmul.mubr.bf16.gmra.mxu0 %v3396
  %v3485 = vpop.f32.mrf.mxu0
  %v3486 = vadd.f32 0.0, %v3485
  %v3487 = vpop.f32.mrf.mxu0
  %v3488 = vadd.f32 0.0, %v3487
  %v3489 = vpop.f32.mrf.mxu0
  %v3490 = vpop.f32.mrf.mxu0
  %3491 = vdwg.mxu0
  %v3492 = vadd.f32 %v3385, %v3445
  %v3493 = vadd.f32 %v3386, %v3447
  %v3494 = vadd.f32 %v3387, %v3486
  %v3495 = vadd.f32 %v3388, %v3488
  %3496 = vrot.lane.b32.xlu0 %v2743, 127
  %v3497 = vpop.permute.xlu0 %3496
  %3498 = vrot.lane.b32.xlu0 %v2747, 127
  %v3499 = vpop.permute.xlu0 %3498
  %3500 = vrot.lane.b32.xlu0 %v2744, 127
  %v3501 = vpop.permute.xlu0 %3500
  %3502 = vrot.lane.b32.xlu0 %v2748, 127
  %v3503 = vpop.permute.xlu0 %3502
  %3504 = vrot.lane.b32.xlu0 %v2745, 127
  %v3505 = vpop.permute.xlu0 %3504
  %3506 = vrot.lane.b32.xlu0 %v2749, 127
  %v3507 = vpop.permute.xlu0 %3506
  %3508 = vrot.lane.b32.xlu0 %v2746, 127
  %v3509 = vpop.permute.xlu0 %3508
  %3510 = vrot.lane.b32.xlu0 %v2750, 127
  %v3511 = vpop.permute.xlu0 %3510
  %v3512 = vsel %vm761, %v3505, %v3509
  %v3513 = vsel %vm761, %v3507, %v3511
  %v3514 = vsel %vm761, %v3501, %v3505
  %v3515 = vsel %vm761, %v3503, %v3507
  %v3516 = vsel %vm761, %v3497, %v3501
  %v3517 = vsel %vm761, %v3499, %v3503
  %v3518 = vsel %vm761, %v3509, %v3497
  %v3519 = vsel %vm761, %v3511, %v3499
  %v3520 = vld [vmem:[%s766] ss:$8 sm:$0xf]
  %v3522 = vlaneseq
  %v3523 = vshrl.u32 %v3522, 7
  %v3524 = vsub.s32 0, %v3523
  %v3525 = vrot.slane %v3520, %v3524
  %v3526 = vlaneseq
  %v3527 = vshrl.u32 %v3526, 7
  %v3528 = vsub.s32 1, %v3527
  %v3529 = vrot.slane %v3520, %v3528
  %v3530 = vlaneseq
  %v3531 = vshrl.u32 %v3530, 7
  %v3532 = vsub.s32 2, %v3531
  %v3533 = vrot.slane %v3520, %v3532
  %v3534 = vlaneseq
  %v3535 = vshrl.u32 %v3534, 7
  %v3536 = vsub.s32 3, %v3535
  %v3537 = vrot.slane %v3520, %v3536
  %v3542 = vmul.f32 %v3516, %v3525
  %v3543 = vmul.f32 %v3514, %v3529
  %v3544 = vmul.f32 %v3512, %v3533
  %v3545 = vmul.f32 %v3518, %v3537
  %v3546 = vmul.f32 %v3517, %v3525
  %v3547 = vmul.f32 %v3515, %v3529
  %v3548 = vmul.f32 %v3513, %v3533
  %v3549 = vmul.f32 %v3519, %v3537
  %s3550 = scalar_lea.vmem %s4, 46
  %v3551 = vld [vmem:[%s3550] sm:$0x3]
  %v3552 = vpack.c.bf16 %v3546, %v3542
  %v3553 = vpack.c.bf16 %v3547, %v3543
  %v3554 = vpack.c.bf16 %v3548, %v3544
  %v3555 = vpack.c.bf16 %v3549, %v3545
  %v3557 = vsel %vm2871, %v3551, 0
  %v3560 = vsel %vm2875, %v3552, 0
  %v3563 = vsel %vm2875, %v3553, 0
  %v3566 = vsel %vm2875, %v3554, 0
  %v3569 = vsel %vm2875, %v3555, 0
  %3571 = vmatprep.subr.bf16.mxu0 0
  %3572 = vmatpush1.bf16.msra.mxu0 0
  %3573 = vmatprep.subr.bf16.mxu0 0
  %3574 = vmatpush1.bf16.msra.mxu0 0
  %3575 = vmatprep.subr.bf16.mxu0 0
  %3576 = vmatpush1.bf16.msra.mxu0 0
  %3577 = vmatprep.subr.bf16.mxu0 0
  %3578 = vmatpush1.bf16.msra.mxu0 0
  %3579 = vmatprep.subr.bf16.mxu0 0
  %3580 = vmatpush1.bf16.msra.mxu0 0
  %3581 = vmatprep.subr.bf16.mxu0 0
  %3582 = vmatpush1.bf16.msra.mxu0 0
  %3583 = vmatprep.subr.bf16.mxu0 0
  %3584 = vmatpush1.bf16.msra.mxu0 0
  %3585 = vmatprep.subr.bf16.mxu0 %v3563
  %3586 = vmatpush1.bf16.msra.mxu0 %v3560
  %3587 = vmatprep.subr.bf16.mxu0 0
  %3588 = vmatpush2.bf16.msra.mxu0 0
  %3589 = vmatprep.subr.bf16.mxu0 0
  %3590 = vmatpush2.bf16.msra.mxu0 0
  %3591 = vmatprep.subr.bf16.mxu0 0
  %3592 = vmatpush2.bf16.msra.mxu0 0
  %3593 = vmatprep.subr.bf16.mxu0 0
  %3594 = vmatpush2.bf16.msra.mxu0 0
  %3595 = vmatprep.subr.bf16.mxu0 0
  %3596 = vmatpush2.bf16.msra.mxu0 0
  %3597 = vmatprep.subr.bf16.mxu0 0
  %3598 = vmatpush2.bf16.msra.mxu0 0
  %3599 = vmatprep.subr.bf16.mxu0 0
  %3600 = vmatpush2.bf16.msra.mxu0 0
  %3601 = vmatprep.subr.bf16.mxu0 0
  %3602 = vmatpush2.bf16.msra.mxu0 0
  %3603 = vmatprep.mubr.bf16.mxu0 0
  %3604 = vmatmul.mubr.bf16.gmra.mxu0 %v3557
  %v3605 = vpop.f32.mrf.mxu0
  %v3606 = vadd.f32 0.0, %v3605
  %v3607 = vpop.f32.mrf.mxu0
  %v3608 = vadd.f32 0.0, %v3607
  %v3609 = vpop.f32.mrf.mxu0
  %v3610 = vpop.f32.mrf.mxu0
  %3611 = vdwg.mxu0
  %3612 = vmatprep.subr.bf16.mxu0 0
  %3613 = vmatpush1.bf16.msra.mxu0 0
  %3614 = vmatprep.subr.bf16.mxu0 0
  %3615 = vmatpush1.bf16.msra.mxu0 0
  %3616 = vmatprep.subr.bf16.mxu0 0
  %3617 = vmatpush1.bf16.msra.mxu0 0
  %3618 = vmatprep.subr.bf16.mxu0 0
  %3619 = vmatpush1.bf16.msra.mxu0 0
  %3620 = vmatprep.subr.bf16.mxu0 0
  %3621 = vmatpush1.bf16.msra.mxu0 0
  %3622 = vmatprep.subr.bf16.mxu0 0
  %3623 = vmatpush1.bf16.msra.mxu0 0
  %3624 = vmatprep.subr.bf16.mxu0 0
  %3625 = vmatpush1.bf16.msra.mxu0 0
  %3626 = vmatprep.subr.bf16.mxu0 %v3569
  %3627 = vmatpush1.bf16.msra.mxu0 %v3566
  %3628 = vmatprep.subr.bf16.mxu0 0
  %3629 = vmatpush2.bf16.msra.mxu0 0
  %3630 = vmatprep.subr.bf16.mxu0 0
  %3631 = vmatpush2.bf16.msra.mxu0 0
  %3632 = vmatprep.subr.bf16.mxu0 0
  %3633 = vmatpush2.bf16.msra.mxu0 0
  %3634 = vmatprep.subr.bf16.mxu0 0
  %3635 = vmatpush2.bf16.msra.mxu0 0
  %3636 = vmatprep.subr.bf16.mxu0 0
  %3637 = vmatpush2.bf16.msra.mxu0 0
  %3638 = vmatprep.subr.bf16.mxu0 0
  %3639 = vmatpush2.bf16.msra.mxu0 0
  %3640 = vmatprep.subr.bf16.mxu0 0
  %3641 = vmatpush2.bf16.msra.mxu0 0
  %3642 = vmatprep.subr.bf16.mxu0 0
  %3643 = vmatpush2.bf16.msra.mxu0 0
  %3644 = vmatprep.mubr.bf16.mxu0 0
  %3645 = vmatmul.mubr.bf16.gmra.mxu0 %v3557
  %v3646 = vpop.f32.mrf.mxu0
  %v3647 = vadd.f32 0.0, %v3646
  %v3648 = vpop.f32.mrf.mxu0
  %v3649 = vadd.f32 0.0, %v3648
  %v3650 = vpop.f32.mrf.mxu0
  %v3651 = vpop.f32.mrf.mxu0
  %3652 = vdwg.mxu0
  %v3653 = vadd.f32 %v3492, %v3606
  %v3654 = vadd.f32 %v3493, %v3608
  %v3655 = vadd.f32 %v3494, %v3647
  %v3656 = vadd.f32 %v3495, %v3649
  %3657 = vrot.lane.b32.xlu0 %v2743, 113
  %v3658 = vpop.permute.xlu0 %3657
  %3659 = vrot.lane.b32.xlu0 %v2747, 113
  %v3660 = vpop.permute.xlu0 %3659
  %3661 = vrot.lane.b32.xlu0 %v2744, 113
  %v3662 = vpop.permute.xlu0 %3661
  %3663 = vrot.lane.b32.xlu0 %v2748, 113
  %v3664 = vpop.permute.xlu0 %3663
  %3665 = vrot.lane.b32.xlu0 %v2745, 113
  %v3666 = vpop.permute.xlu0 %3665
  %3667 = vrot.lane.b32.xlu0 %v2749, 113
  %v3668 = vpop.permute.xlu0 %3667
  %3669 = vrot.lane.b32.xlu0 %v2746, 113
  %v3670 = vpop.permute.xlu0 %3669
  %3671 = vrot.lane.b32.xlu0 %v2750, 113
  %v3672 = vpop.permute.xlu0 %3671
  %v3673 = vsel %vm908, %v3666, %v3670
  %v3674 = vsel %vm908, %v3668, %v3672
  %v3675 = vsel %vm908, %v3662, %v3666
  %v3676 = vsel %vm908, %v3664, %v3668
  %v3677 = vsel %vm908, %v3658, %v3662
  %v3678 = vsel %vm908, %v3660, %v3664
  %v3679 = vsel %vm908, %v3670, %v3658
  %v3680 = vsel %vm908, %v3672, %v3660
  %v3681 = vld [vmem:[%s913] ss:$8 sm:$0xf]
  %v3683 = vlaneseq
  %v3684 = vshrl.u32 %v3683, 7
  %v3685 = vsub.s32 0, %v3684
  %v3686 = vrot.slane %v3681, %v3685
  %v3687 = vlaneseq
  %v3688 = vshrl.u32 %v3687, 7
  %v3689 = vsub.s32 1, %v3688
  %v3690 = vrot.slane %v3681, %v3689
  %v3691 = vlaneseq
  %v3692 = vshrl.u32 %v3691, 7
  %v3693 = vsub.s32 2, %v3692
  %v3694 = vrot.slane %v3681, %v3693
  %v3695 = vlaneseq
  %v3696 = vshrl.u32 %v3695, 7
  %v3697 = vsub.s32 3, %v3696
  %v3698 = vrot.slane %v3681, %v3697
  %v3703 = vmul.f32 %v3677, %v3686
  %v3704 = vmul.f32 %v3675, %v3690
  %v3705 = vmul.f32 %v3673, %v3694
  %v3706 = vmul.f32 %v3679, %v3698
  %v3707 = vmul.f32 %v3678, %v3686
  %v3708 = vmul.f32 %v3676, %v3690
  %v3709 = vmul.f32 %v3674, %v3694
  %v3710 = vmul.f32 %v3680, %v3698
  %s3711 = scalar_lea.vmem %s4, 48
  %v3712 = vld [vmem:[%s3711] sm:$0x3]
  %v3713 = vpack.c.bf16 %v3707, %v3703
  %v3714 = vpack.c.bf16 %v3708, %v3704
  %v3715 = vpack.c.bf16 %v3709, %v3705
  %v3716 = vpack.c.bf16 %v3710, %v3706
  %v3718 = vsel %vm2871, %v3712, 0
  %v3721 = vsel %vm2875, %v3713, 0
  %v3724 = vsel %vm2875, %v3714, 0
  %v3727 = vsel %vm2875, %v3715, 0
  %v3730 = vsel %vm2875, %v3716, 0
  %3732 = vmatprep.subr.bf16.mxu0 0
  %3733 = vmatpush1.bf16.msra.mxu0 0
  %3734 = vmatprep.subr.bf16.mxu0 0
  %3735 = vmatpush1.bf16.msra.mxu0 0
  %3736 = vmatprep.subr.bf16.mxu0 0
  %3737 = vmatpush1.bf16.msra.mxu0 0
  %3738 = vmatprep.subr.bf16.mxu0 0
  %3739 = vmatpush1.bf16.msra.mxu0 0
  %3740 = vmatprep.subr.bf16.mxu0 0
  %3741 = vmatpush1.bf16.msra.mxu0 0
  %3742 = vmatprep.subr.bf16.mxu0 0
  %3743 = vmatpush1.bf16.msra.mxu0 0
  %3744 = vmatprep.subr.bf16.mxu0 0
  %3745 = vmatpush1.bf16.msra.mxu0 0
  %3746 = vmatprep.subr.bf16.mxu0 %v3724
  %3747 = vmatpush1.bf16.msra.mxu0 %v3721
  %3748 = vmatprep.subr.bf16.mxu0 0
  %3749 = vmatpush2.bf16.msra.mxu0 0
  %3750 = vmatprep.subr.bf16.mxu0 0
  %3751 = vmatpush2.bf16.msra.mxu0 0
  %3752 = vmatprep.subr.bf16.mxu0 0
  %3753 = vmatpush2.bf16.msra.mxu0 0
  %3754 = vmatprep.subr.bf16.mxu0 0
  %3755 = vmatpush2.bf16.msra.mxu0 0
  %3756 = vmatprep.subr.bf16.mxu0 0
  %3757 = vmatpush2.bf16.msra.mxu0 0
  %3758 = vmatprep.subr.bf16.mxu0 0
  %3759 = vmatpush2.bf16.msra.mxu0 0
  %3760 = vmatprep.subr.bf16.mxu0 0
  %3761 = vmatpush2.bf16.msra.mxu0 0
  %3762 = vmatprep.subr.bf16.mxu0 0
  %3763 = vmatpush2.bf16.msra.mxu0 0
  %3764 = vmatprep.mubr.bf16.mxu0 0
  %3765 = vmatmul.mubr.bf16.gmra.mxu0 %v3718
  %v3766 = vpop.f32.mrf.mxu0
  %v3767 = vadd.f32 0.0, %v3766
  %v3768 = vpop.f32.mrf.mxu0
  %v3769 = vadd.f32 0.0, %v3768
  %v3770 = vpop.f32.mrf.mxu0
  %v3771 = vpop.f32.mrf.mxu0
  %3772 = vdwg.mxu0
  %3773 = vmatprep.subr.bf16.mxu0 0
  %3774 = vmatpush1.bf16.msra.mxu0 0
  %3775 = vmatprep.subr.bf16.mxu0 0
  %3776 = vmatpush1.bf16.msra.mxu0 0
  %3777 = vmatprep.subr.bf16.mxu0 0
  %3778 = vmatpush1.bf16.msra.mxu0 0
  %3779 = vmatprep.subr.bf16.mxu0 0
  %3780 = vmatpush1.bf16.msra.mxu0 0
  %3781 = vmatprep.subr.bf16.mxu0 0
  %3782 = vmatpush1.bf16.msra.mxu0 0
  %3783 = vmatprep.subr.bf16.mxu0 0
  %3784 = vmatpush1.bf16.msra.mxu0 0
  %3785 = vmatprep.subr.bf16.mxu0 0
  %3786 = vmatpush1.bf16.msra.mxu0 0
  %3787 = vmatprep.subr.bf16.mxu0 %v3730
  %3788 = vmatpush1.bf16.msra.mxu0 %v3727
  %3789 = vmatprep.subr.bf16.mxu0 0
  %3790 = vmatpush2.bf16.msra.mxu0 0
  %3791 = vmatprep.subr.bf16.mxu0 0
  %3792 = vmatpush2.bf16.msra.mxu0 0
  %3793 = vmatprep.subr.bf16.mxu0 0
  %3794 = vmatpush2.bf16.msra.mxu0 0
  %3795 = vmatprep.subr.bf16.mxu0 0
  %3796 = vmatpush2.bf16.msra.mxu0 0
  %3797 = vmatprep.subr.bf16.mxu0 0
  %3798 = vmatpush2.bf16.msra.mxu0 0
  %3799 = vmatprep.subr.bf16.mxu0 0
  %3800 = vmatpush2.bf16.msra.mxu0 0
  %3801 = vmatprep.subr.bf16.mxu0 0
  %3802 = vmatpush2.bf16.msra.mxu0 0
  %3803 = vmatprep.subr.bf16.mxu0 0
  %3804 = vmatpush2.bf16.msra.mxu0 0
  %3805 = vmatprep.mubr.bf16.mxu0 0
  %3806 = vmatmul.mubr.bf16.gmra.mxu0 %v3718
  %v3807 = vpop.f32.mrf.mxu0
  %v3808 = vadd.f32 0.0, %v3807
  %v3809 = vpop.f32.mrf.mxu0
  %v3810 = vadd.f32 0.0, %v3809
  %v3811 = vpop.f32.mrf.mxu0
  %v3812 = vpop.f32.mrf.mxu0
  %3813 = vdwg.mxu0
  %v3814 = vadd.f32 %v3653, %v3767
  %v3815 = vadd.f32 %v3654, %v3769
  %v3816 = vadd.f32 %v3655, %v3808
  %v3817 = vadd.f32 %v3656, %v3810
  %3818 = vrot.lane.b32.xlu0 %v2743, 112
  %v3819 = vpop.permute.xlu0 %3818
  %3820 = vrot.lane.b32.xlu0 %v2747, 112
  %v3821 = vpop.permute.xlu0 %3820
  %3822 = vrot.lane.b32.xlu0 %v2744, 112
  %v3823 = vpop.permute.xlu0 %3822
  %3824 = vrot.lane.b32.xlu0 %v2748, 112
  %v3825 = vpop.permute.xlu0 %3824
  %3826 = vrot.lane.b32.xlu0 %v2745, 112
  %v3827 = vpop.permute.xlu0 %3826
  %3828 = vrot.lane.b32.xlu0 %v2749, 112
  %v3829 = vpop.permute.xlu0 %3828
  %3830 = vrot.lane.b32.xlu0 %v2746, 112
  %v3831 = vpop.permute.xlu0 %3830
  %3832 = vrot.lane.b32.xlu0 %v2750, 112
  %v3833 = vpop.permute.xlu0 %3832
  %v3834 = vsel %vm1055, %v3827, %v3831
  %v3835 = vsel %vm1055, %v3829, %v3833
  %v3836 = vsel %vm1055, %v3823, %v3827
  %v3837 = vsel %vm1055, %v3825, %v3829
  %v3838 = vsel %vm1055, %v3819, %v3823
  %v3839 = vsel %vm1055, %v3821, %v3825
  %v3840 = vsel %vm1055, %v3831, %v3819
  %v3841 = vsel %vm1055, %v3833, %v3821
  %v3842 = vld [vmem:[%s1060] ss:$8 sm:$0xf]
  %v3844 = vlaneseq
  %v3845 = vshrl.u32 %v3844, 7
  %v3846 = vsub.s32 0, %v3845
  %v3847 = vrot.slane %v3842, %v3846
  %v3848 = vlaneseq
  %v3849 = vshrl.u32 %v3848, 7
  %v3850 = vsub.s32 1, %v3849
  %v3851 = vrot.slane %v3842, %v3850
  %v3852 = vlaneseq
  %v3853 = vshrl.u32 %v3852, 7
  %v3854 = vsub.s32 2, %v3853
  %v3855 = vrot.slane %v3842, %v3854
  %v3856 = vlaneseq
  %v3857 = vshrl.u32 %v3856, 7
  %v3858 = vsub.s32 3, %v3857
  %v3859 = vrot.slane %v3842, %v3858
  %v3864 = vmul.f32 %v3838, %v3847
  %v3865 = vmul.f32 %v3836, %v3851
  %v3866 = vmul.f32 %v3834, %v3855
  %v3867 = vmul.f32 %v3840, %v3859
  %v3868 = vmul.f32 %v3839, %v3847
  %v3869 = vmul.f32 %v3837, %v3851
  %v3870 = vmul.f32 %v3835, %v3855
  %v3871 = vmul.f32 %v3841, %v3859
  %s3872 = scalar_lea.vmem %s4, 50
  %v3873 = vld [vmem:[%s3872] sm:$0x3]
  %v3874 = vpack.c.bf16 %v3868, %v3864
  %v3875 = vpack.c.bf16 %v3869, %v3865
  %v3876 = vpack.c.bf16 %v3870, %v3866
  %v3877 = vpack.c.bf16 %v3871, %v3867
  %v3879 = vsel %vm2871, %v3873, 0
  %v3882 = vsel %vm2875, %v3874, 0
  %v3885 = vsel %vm2875, %v3875, 0
  %v3888 = vsel %vm2875, %v3876, 0
  %v3891 = vsel %vm2875, %v3877, 0
  %3893 = vmatprep.subr.bf16.mxu0 0
  %3894 = vmatpush1.bf16.msra.mxu0 0
  %3895 = vmatprep.subr.bf16.mxu0 0
  %3896 = vmatpush1.bf16.msra.mxu0 0
  %3897 = vmatprep.subr.bf16.mxu0 0
  %3898 = vmatpush1.bf16.msra.mxu0 0
  %3899 = vmatprep.subr.bf16.mxu0 0
  %3900 = vmatpush1.bf16.msra.mxu0 0
  %3901 = vmatprep.subr.bf16.mxu0 0
  %3902 = vmatpush1.bf16.msra.mxu0 0
  %3903 = vmatprep.subr.bf16.mxu0 0
  %3904 = vmatpush1.bf16.msra.mxu0 0
  %3905 = vmatprep.subr.bf16.mxu0 0
  %3906 = vmatpush1.bf16.msra.mxu0 0
  %3907 = vmatprep.subr.bf16.mxu0 %v3885
  %3908 = vmatpush1.bf16.msra.mxu0 %v3882
  %3909 = vmatprep.subr.bf16.mxu0 0
  %3910 = vmatpush2.bf16.msra.mxu0 0
  %3911 = vmatprep.subr.bf16.mxu0 0
  %3912 = vmatpush2.bf16.msra.mxu0 0
  %3913 = vmatprep.subr.bf16.mxu0 0
  %3914 = vmatpush2.bf16.msra.mxu0 0
  %3915 = vmatprep.subr.bf16.mxu0 0
  %3916 = vmatpush2.bf16.msra.mxu0 0
  %3917 = vmatprep.subr.bf16.mxu0 0
  %3918 = vmatpush2.bf16.msra.mxu0 0
  %3919 = vmatprep.subr.bf16.mxu0 0
  %3920 = vmatpush2.bf16.msra.mxu0 0
  %3921 = vmatprep.subr.bf16.mxu0 0
  %3922 = vmatpush2.bf16.msra.mxu0 0
  %3923 = vmatprep.subr.bf16.mxu0 0
  %3924 = vmatpush2.bf16.msra.mxu0 0
  %3925 = vmatprep.mubr.bf16.mxu0 0
  %3926 = vmatmul.mubr.bf16.gmra.mxu0 %v3879
  %v3927 = vpop.f32.mrf.mxu0
  %v3928 = vadd.f32 0.0, %v3927
  %v3929 = vpop.f32.mrf.mxu0
  %v3930 = vadd.f32 0.0, %v3929
  %v3931 = vpop.f32.mrf.mxu0
  %v3932 = vpop.f32.mrf.mxu0
  %3933 = vdwg.mxu0
  %3934 = vmatprep.subr.bf16.mxu0 0
  %3935 = vmatpush1.bf16.msra.mxu0 0
  %3936 = vmatprep.subr.bf16.mxu0 0
  %3937 = vmatpush1.bf16.msra.mxu0 0
  %3938 = vmatprep.subr.bf16.mxu0 0
  %3939 = vmatpush1.bf16.msra.mxu0 0
  %3940 = vmatprep.subr.bf16.mxu0 0
  %3941 = vmatpush1.bf16.msra.mxu0 0
  %3942 = vmatprep.subr.bf16.mxu0 0
  %3943 = vmatpush1.bf16.msra.mxu0 0
  %3944 = vmatprep.subr.bf16.mxu0 0
  %3945 = vmatpush1.bf16.msra.mxu0 0
  %3946 = vmatprep.subr.bf16.mxu0 0
  %3947 = vmatpush1.bf16.msra.mxu0 0
  %3948 = vmatprep.subr.bf16.mxu0 %v3891
  %3949 = vmatpush1.bf16.msra.mxu0 %v3888
  %3950 = vmatprep.subr.bf16.mxu0 0
  %3951 = vmatpush2.bf16.msra.mxu0 0
  %3952 = vmatprep.subr.bf16.mxu0 0
  %3953 = vmatpush2.bf16.msra.mxu0 0
  %3954 = vmatprep.subr.bf16.mxu0 0
  %3955 = vmatpush2.bf16.msra.mxu0 0
  %3956 = vmatprep.subr.bf16.mxu0 0
  %3957 = vmatpush2.bf16.msra.mxu0 0
  %3958 = vmatprep.subr.bf16.mxu0 0
  %3959 = vmatpush2.bf16.msra.mxu0 0
  %3960 = vmatprep.subr.bf16.mxu0 0
  %3961 = vmatpush2.bf16.msra.mxu0 0
  %3962 = vmatprep.subr.bf16.mxu0 0
  %3963 = vmatpush2.bf16.msra.mxu0 0
  %3964 = vmatprep.subr.bf16.mxu0 0
  %3965 = vmatpush2.bf16.msra.mxu0 0
  %3966 = vmatprep.mubr.bf16.mxu0 0
  %3967 = vmatmul.mubr.bf16.gmra.mxu0 %v3879
  %v3968 = vpop.f32.mrf.mxu0
  %v3969 = vadd.f32 0.0, %v3968
  %v3970 = vpop.f32.mrf.mxu0
  %v3971 = vadd.f32 0.0, %v3970
  %v3972 = vpop.f32.mrf.mxu0
  %v3973 = vpop.f32.mrf.mxu0
  %3974 = vdwg.mxu0
  %v3975 = vadd.f32 %v3814, %v3928
  %v3976 = vadd.f32 %v3815, %v3930
  %v3977 = vadd.f32 %v3816, %v3969
  %v3978 = vadd.f32 %v3817, %v3971
  %3979 = vrot.lane.b32.xlu0 %v2743, 111
  %v3980 = vpop.permute.xlu0 %3979
  %3981 = vrot.lane.b32.xlu0 %v2747, 111
  %v3982 = vpop.permute.xlu0 %3981
  %3983 = vrot.lane.b32.xlu0 %v2744, 111
  %v3984 = vpop.permute.xlu0 %3983
  %3985 = vrot.lane.b32.xlu0 %v2748, 111
  %v3986 = vpop.permute.xlu0 %3985
  %3987 = vrot.lane.b32.xlu0 %v2745, 111
  %v3988 = vpop.permute.xlu0 %3987
  %3989 = vrot.lane.b32.xlu0 %v2749, 111
  %v3990 = vpop.permute.xlu0 %3989
  %3991 = vrot.lane.b32.xlu0 %v2746, 111
  %v3992 = vpop.permute.xlu0 %3991
  %3993 = vrot.lane.b32.xlu0 %v2750, 111
  %v3994 = vpop.permute.xlu0 %3993
  %v3995 = vsel %vm1202, %v3988, %v3992
  %v3996 = vsel %vm1202, %v3990, %v3994
  %v3997 = vsel %vm1202, %v3984, %v3988
  %v3998 = vsel %vm1202, %v3986, %v3990
  %v3999 = vsel %vm1202, %v3980, %v3984
  %v4000 = vsel %vm1202, %v3982, %v3986
  %v4001 = vsel %vm1202, %v3992, %v3980
  %v4002 = vsel %vm1202, %v3994, %v3982
  %v4003 = vld [vmem:[%s1207] ss:$8 sm:$0xf]
  %v4005 = vlaneseq
  %v4006 = vshrl.u32 %v4005, 7
  %v4007 = vsub.s32 0, %v4006
  %v4008 = vrot.slane %v4003, %v4007
  %v4009 = vlaneseq
  %v4010 = vshrl.u32 %v4009, 7
  %v4011 = vsub.s32 1, %v4010
  %v4012 = vrot.slane %v4003, %v4011
  %v4013 = vlaneseq
  %v4014 = vshrl.u32 %v4013, 7
  %v4015 = vsub.s32 2, %v4014
  %v4016 = vrot.slane %v4003, %v4015
  %v4017 = vlaneseq
  %v4018 = vshrl.u32 %v4017, 7
  %v4019 = vsub.s32 3, %v4018
  %v4020 = vrot.slane %v4003, %v4019
  %v4025 = vmul.f32 %v3999, %v4008
  %v4026 = vmul.f32 %v3997, %v4012
  %v4027 = vmul.f32 %v3995, %v4016
  %v4028 = vmul.f32 %v4001, %v4020
  %v4029 = vmul.f32 %v4000, %v4008
  %v4030 = vmul.f32 %v3998, %v4012
  %v4031 = vmul.f32 %v3996, %v4016
  %v4032 = vmul.f32 %v4002, %v4020
  %s4033 = scalar_lea.vmem %s4, 52
  %v4034 = vld [vmem:[%s4033] sm:$0x3]
  %v4035 = vpack.c.bf16 %v4029, %v4025
  %v4036 = vpack.c.bf16 %v4030, %v4026
  %v4037 = vpack.c.bf16 %v4031, %v4027
  %v4038 = vpack.c.bf16 %v4032, %v4028
  %v4040 = vsel %vm2871, %v4034, 0
  %v4043 = vsel %vm2875, %v4035, 0
  %v4046 = vsel %vm2875, %v4036, 0
  %v4049 = vsel %vm2875, %v4037, 0
  %v4052 = vsel %vm2875, %v4038, 0
  %4054 = vmatprep.subr.bf16.mxu0 0
  %4055 = vmatpush1.bf16.msra.mxu0 0
  %4056 = vmatprep.subr.bf16.mxu0 0
  %4057 = vmatpush1.bf16.msra.mxu0 0
  %4058 = vmatprep.subr.bf16.mxu0 0
  %4059 = vmatpush1.bf16.msra.mxu0 0
  %4060 = vmatprep.subr.bf16.mxu0 0
  %4061 = vmatpush1.bf16.msra.mxu0 0
  %4062 = vmatprep.subr.bf16.mxu0 0
  %4063 = vmatpush1.bf16.msra.mxu0 0
  %4064 = vmatprep.subr.bf16.mxu0 0
  %4065 = vmatpush1.bf16.msra.mxu0 0
  %4066 = vmatprep.subr.bf16.mxu0 0
  %4067 = vmatpush1.bf16.msra.mxu0 0
  %4068 = vmatprep.subr.bf16.mxu0 %v4046
  %4069 = vmatpush1.bf16.msra.mxu0 %v4043
  %4070 = vmatprep.subr.bf16.mxu0 0
  %4071 = vmatpush2.bf16.msra.mxu0 0
  %4072 = vmatprep.subr.bf16.mxu0 0
  %4073 = vmatpush2.bf16.msra.mxu0 0
  %4074 = vmatprep.subr.bf16.mxu0 0
  %4075 = vmatpush2.bf16.msra.mxu0 0
  %4076 = vmatprep.subr.bf16.mxu0 0
  %4077 = vmatpush2.bf16.msra.mxu0 0
  %4078 = vmatprep.subr.bf16.mxu0 0
  %4079 = vmatpush2.bf16.msra.mxu0 0
  %4080 = vmatprep.subr.bf16.mxu0 0
  %4081 = vmatpush2.bf16.msra.mxu0 0
  %4082 = vmatprep.subr.bf16.mxu0 0
  %4083 = vmatpush2.bf16.msra.mxu0 0
  %4084 = vmatprep.subr.bf16.mxu0 0
  %4085 = vmatpush2.bf16.msra.mxu0 0
  %4086 = vmatprep.mubr.bf16.mxu0 0
  %4087 = vmatmul.mubr.bf16.gmra.mxu0 %v4040
  %v4088 = vpop.f32.mrf.mxu0
  %v4089 = vadd.f32 0.0, %v4088
  %v4090 = vpop.f32.mrf.mxu0
  %v4091 = vadd.f32 0.0, %v4090
  %v4092 = vpop.f32.mrf.mxu0
  %v4093 = vpop.f32.mrf.mxu0
  %4094 = vdwg.mxu0
  %4095 = vmatprep.subr.bf16.mxu0 0
  %4096 = vmatpush1.bf16.msra.mxu0 0
  %4097 = vmatprep.subr.bf16.mxu0 0
  %4098 = vmatpush1.bf16.msra.mxu0 0
  %4099 = vmatprep.subr.bf16.mxu0 0
  %4100 = vmatpush1.bf16.msra.mxu0 0
  %4101 = vmatprep.subr.bf16.mxu0 0
  %4102 = vmatpush1.bf16.msra.mxu0 0
  %4103 = vmatprep.subr.bf16.mxu0 0
  %4104 = vmatpush1.bf16.msra.mxu0 0
  %4105 = vmatprep.subr.bf16.mxu0 0
  %4106 = vmatpush1.bf16.msra.mxu0 0
  %4107 = vmatprep.subr.bf16.mxu0 0
  %4108 = vmatpush1.bf16.msra.mxu0 0
  %4109 = vmatprep.subr.bf16.mxu0 %v4052
  %4110 = vmatpush1.bf16.msra.mxu0 %v4049
  %4111 = vmatprep.subr.bf16.mxu0 0
  %4112 = vmatpush2.bf16.msra.mxu0 0
  %4113 = vmatprep.subr.bf16.mxu0 0
  %4114 = vmatpush2.bf16.msra.mxu0 0
  %4115 = vmatprep.subr.bf16.mxu0 0
  %4116 = vmatpush2.bf16.msra.mxu0 0
  %4117 = vmatprep.subr.bf16.mxu0 0
  %4118 = vmatpush2.bf16.msra.mxu0 0
  %4119 = vmatprep.subr.bf16.mxu0 0
  %4120 = vmatpush2.bf16.msra.mxu0 0
  %4121 = vmatprep.subr.bf16.mxu0 0
  %4122 = vmatpush2.bf16.msra.mxu0 0
  %4123 = vmatprep.subr.bf16.mxu0 0
  %4124 = vmatpush2.bf16.msra.mxu0 0
  %4125 = vmatprep.subr.bf16.mxu0 0
  %4126 = vmatpush2.bf16.msra.mxu0 0
  %4127 = vmatprep.mubr.bf16.mxu0 0
  %4128 = vmatmul.mubr.bf16.gmra.mxu0 %v4040
  %v4129 = vpop.f32.mrf.mxu0
  %v4130 = vadd.f32 0.0, %v4129
  %v4131 = vpop.f32.mrf.mxu0
  %v4132 = vadd.f32 0.0, %v4131
  %v4133 = vpop.f32.mrf.mxu0
  %v4134 = vpop.f32.mrf.mxu0
  %4135 = vdwg.mxu0
  %v4136 = vadd.f32 %v3975, %v4089
  %v4137 = vadd.f32 %v3976, %v4091
  %v4138 = vadd.f32 %v3977, %v4130
  %v4139 = vadd.f32 %v3978, %v4132
  %s4140 = scalar_lea.vmem %s5, 8
  %v4141 = vld [vmem:[%s4140] sm:$0xf]
  %4143 = vset.pattern.permute.xlu0 0
  %4144 = vperm.xlu0 %4143, %v4141
  %v4145 = vpop.permute.xlu0 %4144
  %v4147 = vadd.f32 %v4136, %v4145
  %v4148 = vadd.f32 %v4137, %v4145
  %v4149 = vadd.f32 %v4138, %v4145
  %v4150 = vadd.f32 %v4139, %v4145
  %4151 = vst [vmem:[%s6 + $0x20] sm:$0xf] %v4147
  %4152 = vst [vmem:[%s6 + $0x28] sm:$0xf] %v4148
  %4153 = vst [vmem:[%s6 + $0x30] sm:$0xf] %v4149
  %4154 = vst [vmem:[%s6 + $0x38] sm:$0xf] %v4150
  // Predicated region
  $region26: #{tpu_custom_call.1} parent=0 // pred_check
    _
  $region27: #{tpu_custom_call.1} parent=0 // pred_check_branch
    %4156 = sbr.rel (0) target = $region29
  $region28: #{tpu_custom_call.1} parent=0 // pred_region
    _
  $region29: #{tpu_custom_call.1} parent=0 // pred_fallthru
    _
  // Predicated region
  $region30: #{tpu_custom_call.1} parent=0 // pred_check
    _
  $region31: #{tpu_custom_call.1} parent=0 // pred_check_branch
    %4158 = sbr.rel (0) target = $region33
  $region32: #{tpu_custom_call.1} parent=0 // pred_region
    _
  $region33: #{tpu_custom_call.1} parent=0 // pred_fallthru
    _

</llo_original>
